<compile_context>
chip_gen: v7x
topology: tpu7x:2x2x1
jax: 0.10.0
libtpu: 0.0.40
codegen_flags: <defaults>
</compile_context>

<pallas_src>
import functools
import math

import jax
import jax.numpy as jnp
from jax.experimental import pallas as pl
from jax.experimental.pallas import tpu as pltpu

_SQRT2 = math.sqrt(2.0)


def _round_up(a, m):
    return (a + m - 1) // m * m


def _fourier_kernel(x_ref, w_ref, p_ref, o_ref, *, pack):
    # x_ref: (TM, pack)            input scalars (any float dtype)
    # w_ref: (pack, pack*C) fp32   block-diag freqs (row j: freqs in lanes j*C:(j+1)*C)
    # p_ref: (1, pack*C)    fp32   phases tiled `pack` times
    # o_ref: (TM, pack*C)          output, dtype == input dtype
    x = x_ref[...].astype(jnp.float32)                     # (TM, pack)
    if pack > 1:
        # Replicate-and-scale on the MXU (frees the saturated VALU/XLU slots in
        # a cos-bound kernel).  HIGHEST = fp32 multi-pass so accuracy matches
        # the fp32 reference; zeros in the block-diag contribute exactly 0.
        s = jnp.dot(x, w_ref[...],
                    precision=jax.lax.Precision.HIGHEST,
                    preferred_element_type=jnp.float32)    # (TM, pack*C)
    else:
        s = x * w_ref[...]                                 # (TM,1)*(1,C) on the VPU
    y = jnp.cos(s + p_ref[...]) * jnp.float32(_SQRT2)
    o_ref[...] = y.astype(o_ref.dtype)


def fourier_embedding(x, freqs, phases):
    """Pallas-backed FourierEmbedding forward.

    x:      arbitrary-shape float array (e.g. timesteps), any float dtype.
    freqs:  (C,) buffer  (2*pi*randn(C)*bandwidth)
    phases: (C,) buffer  (2*pi*rand(C))
    returns: (*x.shape, C) array with dtype == x.dtype
    """
    orig_shape = x.shape
    orig_dtype = x.dtype
    c = int(freqs.shape[0])

    n = 1
    for d in orig_shape:
        n *= int(d)
    if n == 0:
        return jnp.zeros((*orig_shape, c), dtype=orig_dtype)

    # Lane-dense packing: pack `pack` scalars per output row so the output last
    # dim is as close to 128 lanes as possible.  Pad n up to a pack multiple
    # (cheap) instead of degrading to narrow masked stores.
    pack = max(1, 128 // c) if c < 128 else 1
    lane_w = pack * c
    n_pad = _round_up(n, pack)
    n_rows = n_pad // pack

    x_flat = jnp.reshape(x, (n,))
    if n_pad != n:
        x_flat = jnp.pad(x_flat, (0, n_pad - n))
    x_rows = x_flat.reshape(n_rows, pack)

    f32 = jnp.asarray(freqs, jnp.float32).reshape(1, c)
    p32 = jnp.asarray(phases, jnp.float32).reshape(1, c)
    if pack > 1:
        # Block-diagonal weights: row j carries freqs in lanes [j*c, (j+1)*c).
        w = jnp.kron(jnp.eye(pack, dtype=jnp.float32), f32)   # (pack, pack*c)
    else:
        w = f32                                               # (1, c)
    p_row = jnp.tile(p32, (1, pack))                          # (1, pack*c)

    # --- Row-tile sizing -----------------------------------------------------
    dt_size = jnp.dtype(orig_dtype).itemsize
    row_align = max(8, 32 // max(dt_size, 1))   # 8 (f32) / 16 (bf16) / 32 (8-bit)
    # Per-block VMEM: output tile_m*lane_w*dt_size plus the lane-padded input
    # block tile_m*128*4 B, each double-buffered.  ~8 MiB/block keeps the total
    # well inside the 32 MiB scoped limit (v7x has only 64 MiB physical VMEM).
    per_row_bytes = lane_w * dt_size + 128 * 4
    tile_m = min(4096, (8 * 1024 * 1024) // max(per_row_bytes, 1))
    # Keep >= 2 grid steps when possible so v7x's two TensorCores both get work
    # from the "parallel" grid axis.
    if n_rows >= 2 * row_align:
        tile_m = min(tile_m, _round_up(pl.cdiv(n_rows, 2), row_align))
    tile_m = max(row_align, (tile_m // row_align) * row_align)
    tile_m = min(tile_m, _round_up(n_rows, row_align))

    grid = (pl.cdiv(n_rows, tile_m),)
    kernel = functools.partial(_fourier_kernel, pack=pack)

    cost = pl.CostEstimate(
        flops=3 * n_pad * c,                 # mul + add + *sqrt(2)
        transcendentals=n_pad * c,           # cos
        bytes_accessed=n_pad * dt_size + n_pad * c * dt_size + (pack + 2) * c * 4,
    )

    out = pl.pallas_call(
        kernel,
        out_shape=jax.ShapeDtypeStruct((n_rows, lane_w), orig_dtype),
        grid=grid,
        in_specs=[
            pl.BlockSpec((tile_m, pack), lambda i: (i, 0)),    # x rows
            pl.BlockSpec((pack, lane_w), lambda i: (0, 0)),    # block-diag freqs (resident)
            pl.BlockSpec((1, lane_w), lambda i: (0, 0)),       # phases (resident)
        ],
        # NOTE: on v5e (the only HBM-writeback-bound generation) sweeping
        # pipeline_mode=pl.Buffered(3) on out_specs gives a few extra %.
        out_specs=pl.BlockSpec((tile_m, lane_w), lambda i: (i, 0)),
        compiler_params=pltpu.CompilerParams(
            dimension_semantics=("parallel",),
            vmem_limit_bytes=32 * 1024 * 1024,
        ),
        cost_estimate=cost,
    )(x_rows, w, p_row)

    # (n_rows, pack*c) row-major == (n_pad, c) row-major; drop padded rows.
    out = out.reshape(n_pad, c)
    if n_pad != n:
        out = out[:n]
    return out.reshape(*orig_shape, c)


def _reference(x, freqs, phases):
    y = x.astype(jnp.float32)[..., None] * freqs.astype(jnp.float32)
    y = y + phases.astype(jnp.float32)
    y = jnp.cos(y) * jnp.float32(_SQRT2)
    return y.astype(x.dtype)


if __name__ == "__main__":
    key = jax.random.PRNGKey(0)
    k_f, k_p, k_x1, k_x2, k_x3 = jax.random.split(key, 5)

    num_channels = 32
    bandwidth = 1.0
    freqs = 2.0 * jnp.pi * jax.random.normal(k_f, (num_channels,), jnp.float32) * bandwidth
    phases = 2.0 * jnp.pi * jax.random.uniform(k_p, (num_channels,), jnp.float32)

    # --- Case 1: multi-dim input, C=32 -> packed MXU path, multi-step grid.
    x1 = jax.random.normal(k_x1, (2, 4, 16, 16), dtype=jnp.float32)
    out1 = jax.block_until_ready(fourier_embedding(x1, freqs, phases))
    ref1 = _reference(x1, freqs, phases)
    assert out1.shape == (2, 4, 16, 16, num_channels), out1.shape
    assert out1.dtype == x1.dtype
    # MXU HIGHEST (fp32 multi-pass) rounds the pre-cos argument slightly
    # differently from pure fp32 -> allow a couple of ulp of headroom.
    assert jnp.allclose(out1, ref1, atol=2e-5, rtol=1e-5), float(jnp.max(jnp.abs(out1 - ref1)))

    # --- Case 2: odd length (wrapper pads to a pack multiple) in bf16.
    x2 = jax.random.normal(k_x2, (37,), dtype=jnp.bfloat16)
    out2 = jax.block_until_ready(fourier_embedding(x2, freqs, phases))
    ref2 = _reference(x2, freqs, phases)
    assert out2.shape == (37, num_channels)
    assert out2.dtype == jnp.bfloat16
    assert jnp.allclose(out2.astype(jnp.float32), ref2.astype(jnp.float32), atol=2e-2)

    # --- Case 3: canonical use, batch of scalar timesteps, C=16 (pack=8).
    freqs16 = freqs[:16]
    phases16 = phases[:16]
    x3 = jax.random.normal(k_x3, (8,), dtype=jnp.float32)
    out3 = jax.block_until_ready(fourier_embedding(x3, freqs16, phases16))
    ref3 = _reference(x3, freqs16, phases16)
    assert out3.shape == (8, 16), out3.shape
    assert jnp.allclose(out3, ref3, atol=2e-5, rtol=1e-5), float(jnp.max(jnp.abs(out3 - ref3)))

    print("KERNEL_OK")
</pallas_src>

<mosaic_0001>
module attributes {stable_mosaic.version = 11 : i64} {
  func.func @_fourier_kernel(%arg0: i32, %arg1: memref<256x4xf32, #tpu.memory_space<vmem>>, %arg2: memref<4x128xf32, #tpu.memory_space<vmem>>, %arg3: memref<1x128xf32, #tpu.memory_space<vmem>>, %arg4: memref<256x128xf32, #tpu.memory_space<vmem>>) attributes {dimension_semantics = [#tpu.dimension_semantics<parallel>], iteration_bounds = array<i64: 2>, scalar_prefetch = 0 : i64, scratch_operands = 0 : i64, tpu.core_type = #tpu.core_type<tc>, window_params = [{transform_indices = @transform_0, window_bounds = array<i64: 256, 4>}, {pipeline_mode = #tpu.pipeline_mode<synchronous>, transform_indices = @transform_1, window_bounds = array<i64: 4, 128>}, {pipeline_mode = #tpu.pipeline_mode<synchronous>, transform_indices = @transform_2, window_bounds = array<i64: 1, 128>}, {transform_indices = @transform_3, window_bounds = array<i64: 256, 128>}]} {
    %c0 = arith.constant 0 : index
    %c0_0 = arith.constant 0 : index
    %0 = vector.load %arg1[%c0, %c0_0] : memref<256x4xf32, #tpu.memory_space<vmem>>, vector<256x4xf32>
    %c0_1 = arith.constant 0 : index
    %c0_2 = arith.constant 0 : index
    %1 = vector.load %arg2[%c0_1, %c0_2] : memref<4x128xf32, #tpu.memory_space<vmem>>, vector<4x128xf32>
    %cst = arith.constant dense<0.000000e+00> : vector<256x128xf32>
    %2 = tpu.matmul %0, %1, %cst {dimension_numbers = #tpu.dot_dimension_numbers<[1], [0], [0], [1], [0, 0, 1, 1], [], []>, precision = #tpu.contract_precision<fp32>} : vector<256x4xf32>, vector<4x128xf32>, vector<256x128xf32> -> vector<256x128xf32>
    %c0_3 = arith.constant 0 : index
    %c0_4 = arith.constant 0 : index
    %3 = vector.load %arg3[%c0_3, %c0_4] : memref<1x128xf32, #tpu.memory_space<vmem>>, vector<1x128xf32>
    %4 = vector.broadcast %3 : vector<1x128xf32> to vector<256x128xf32>
    %5 = arith.addf %2, %4 : vector<256x128xf32>
    %6 = math.cos %5 : vector<256x128xf32>
    %cst_5 = arith.constant 1.41421354 : f32
    %7 = vector.broadcast %cst_5 : f32 to vector<256x128xf32>
    %8 = arith.mulf %6, %7 : vector<256x128xf32>
    %c0_6 = arith.constant 0 : index
    %c0_7 = arith.constant 0 : index
    %9 = vector.load %arg4[%c0_6, %c0_7] : memref<256x128xf32, #tpu.memory_space<vmem>>, vector<256x128xf32>
    tpu.vector_store %arg4[%c0_6, %c0_7], %8 {strides = array<i32>} : memref<256x128xf32, #tpu.memory_space<vmem>>, vector<256x128xf32>,
    return
  }
  func.func @transform_0(%arg0: i32) -> (i32, i32) {
    %c0_i32 = arith.constant 0 : i32
    %c0_i32_0 = arith.constant 0 : i32
    return %arg0, %c0_i32 : i32, i32
  }
  func.func @transform_1(%arg0: i32) -> (i32, i32) {
    %c0_i32 = arith.constant 0 : i32
    %c0_i32_0 = arith.constant 0 : i32
    %c0_i32_1 = arith.constant 0 : i32
    return %c0_i32, %c0_i32_0 : i32, i32
  }
  func.func @transform_2(%arg0: i32) -> (i32, i32) {
    %c0_i32 = arith.constant 0 : i32
    %c0_i32_0 = arith.constant 0 : i32
    %c0_i32_1 = arith.constant 0 : i32
    return %c0_i32, %c0_i32_0 : i32, i32
  }
  func.func @transform_3(%arg0: i32) -> (i32, i32) {
    %c0_i32 = arith.constant 0 : i32
    %c0_i32_0 = arith.constant 0 : i32
    return %arg0, %c0_i32 : i32, i32
  }
}

</mosaic_0001>

<llo_original>
// kernel: tpu_custom_call.1
$region0: #{tpu_custom_call.1}
  #allocation0 [shape = 'u32[]', space=smem, size = 0x4, offset = 0x4, fixed_abs, tag = 'smem constant byte address 0x4 - core index']
  #allocation1 [shape = 'u32[144,128]{1,0:T(1,128)}', space=vmem, size = 0x12000, scoped, tag = 'internal scratch']
  %s0 = inlined_call_operand.vmem [shape: f32[512,4], index: 0, kind: input, shape index: {}]
  %s1 = inlined_call_operand.vmem [shape: f32[4,128], index: 1, kind: input, shape index: {}]
  %s2 = inlined_call_operand.vmem [shape: f32[1,128], index: 2, kind: input, shape index: {}]
  %s3 = inlined_call_operand.hbm [shape: f32[512,128], index: 3, kind: output, shape index: {}]
  %s4 = sld [smem:[#allocation0]]
  $region45: #{tpu_custom_call.1} parent=0
    _
  %s6 = ssub.s32 1, %s4
  %s7 = scalar_select 0, %s6, %s4
  $region1: #{tpu_custom_call.1} parent=0
    #allocation2 [shape = 'u8[262144]{0}', space=vmem, size = 0x40000, scoped, tag = 'output window, operand 0']
    #allocation3 [shape = 's32[2]{0}', space=sflag, size = 0x8, scoped, tag = 'scoped memory for tpu_custom_call.1']
    %8 = vsyncpa [#allocation3], 0
    %s9 = scalar_lea.sflag [#allocation3], 1
    %10 = vsyncpa %s9, 0
    loop: start=0, step=1, limit=4
    $region2: #{tpu_custom_call.1} parent=1 // loop_pre_header
      _
    $region3: #{tpu_custom_call.1} parent=1 // loop_header
      %s12 = sphi 0, %s16
      %p13 = scmp.ge.s32.totalorder %s12, 4
      %s22 = sphi 0, %s24
      %s25 = sphi 0, %s22
      %s26 = sphi 0, %s25
      %s42 = sphi 0, %s26
      %s46 = sphi 0, %s46
      %s48 = sphi 0, %s46
      %s49 = sphi 0, %s48
      %s63 = sphi 0, %s49
      %s67 = sphi 0, %s67
      %s69 = sphi 0, %s67
      %s70 = sphi 0, %s69
      %s84 = sphi 0, %s70
      %s90 = sphi 0, %s92
      %s93 = sphi 0, %s90
      %s94 = sphi 0, %s93
      %s110 = sphi 0, %s94
    $region4: #{tpu_custom_call.1} parent=1 // loop_header_branch
      %15 = sbr.rel (%p13) target = $region8
    $region5: #{tpu_custom_call.1} parent=1 // loop_body
      %s17 = ssub.s32 %s12, 1
      %s18 = ssub.s32 %s12, 2
      %s19 = sadd.s32 %s12, 1
      %s20 = ssub.s32 %s12, %s19
      %p21 = scmp.eq.s32.totalorder %s20, 0
      %s23 = sadd.s32 %s22, 1
      %s24 = scalar_select %p21, %s22, %s23
      %p27 = pneg %p21
      %p28 = scmp.eq.s32.totalorder %s12, 1
      %p29 = por %p27, %p28
      %p30 = scmp.ne.s32.totalorder %s22, %s25
      %p31 = scmp.eq.s32.totalorder %s12, 0
      %p32 = por %p30, %p31
      %p33 = scmp.ne.s32.totalorder %s22, %s25
      %p34 = scmp.eq.s32.totalorder %s17, 1
      %p35 = por %p33, %p34
      %p36 = scmp.ne.s32.totalorder %s25, %s26
      %p37 = scmp.eq.s32.totalorder %s17, 0
      %p38 = por %p36, %p37
      %p39 = scmp.ne.s32.totalorder %s25, %s26
      %p40 = scmp.eq.s32.totalorder %s18, 1
      %p41 = por %p39, %p40
      %p43 = scmp.ne.s32.totalorder %s26, %s42
      %p44 = scmp.eq.s32.totalorder %s18, 0
      %p45 = por %p43, %p44
      %s47 = sadd.s32 %s46, 1
      %p50 = scmp.eq.s32.totalorder %s12, 1
      %p51 = scmp.ne.s32.totalorder %s46, %s48
      %p52 = scmp.eq.s32.totalorder %s12, 0
      %p53 = por %p51, %p52
      %p54 = scmp.ne.s32.totalorder %s46, %s48
      %p55 = scmp.eq.s32.totalorder %s17, 1
      %p56 = por %p54, %p55
      %p57 = scmp.ne.s32.totalorder %s48, %s49
      %p58 = scmp.eq.s32.totalorder %s17, 0
      %p59 = por %p57, %p58
      %p60 = scmp.ne.s32.totalorder %s48, %s49
      %p61 = scmp.eq.s32.totalorder %s18, 1
      %p62 = por %p60, %p61
      %p64 = scmp.ne.s32.totalorder %s49, %s63
      %p65 = scmp.eq.s32.totalorder %s18, 0
      %p66 = por %p64, %p65
      %s68 = sadd.s32 %s67, 1
      %p71 = scmp.eq.s32.totalorder %s12, 1
      %p72 = scmp.ne.s32.totalorder %s67, %s69
      %p73 = scmp.eq.s32.totalorder %s12, 0
      %p74 = por %p72, %p73
      %p75 = scmp.ne.s32.totalorder %s67, %s69
      %p76 = scmp.eq.s32.totalorder %s17, 1
      %p77 = por %p75, %p76
      %p78 = scmp.ne.s32.totalorder %s69, %s70
      %p79 = scmp.eq.s32.totalorder %s17, 0
      %p80 = por %p78, %p79
      %p81 = scmp.ne.s32.totalorder %s69, %s70
      %p82 = scmp.eq.s32.totalorder %s18, 1
      %p83 = por %p81, %p82
      %p85 = scmp.ne.s32.totalorder %s70, %s84
      %p86 = scmp.eq.s32.totalorder %s18, 0
      %p87 = por %p85, %p86
      %s88 = ssub.s32 %s12, %s19
      %p89 = scmp.eq.s32.totalorder %s88, 0
      %s91 = sadd.s32 %s90, 1
      %s92 = scalar_select %p89, %s90, %s91
      %p95 = pneg %p89
      %p96 = scmp.eq.s32.totalorder %s12, 1
      %p97 = por %p95, %p96
      %p98 = scmp.ne.s32.totalorder %s90, %s93
      %p99 = scmp.eq.s32.totalorder %s12, 0
      %p100 = por %p98, %p99
      %p101 = scmp.ne.s32.totalorder %s90, %s93
      %p102 = scmp.eq.s32.totalorder %s17, 1
      %p103 = por %p101, %p102
      %p104 = scmp.ne.s32.totalorder %s93, %s94
      %p105 = scmp.eq.s32.totalorder %s17, 0
      %p106 = por %p104, %p105
      %p107 = scmp.ne.s32.totalorder %s93, %s94
      %p108 = scmp.eq.s32.totalorder %s18, 1
      %p109 = por %p107, %p108
      %p111 = scmp.ne.s32.totalorder %s94, %s110
      %p112 = scmp.eq.s32.totalorder %s18, 0
      %p113 = por %p111, %p112
      %p114 = scmp.le.s32.totalorder 1, %s12
      %p115 = scmp.lt.s32.totalorder %s12, 3
      %p116 = pnand %p114, %p115
      %p117 = pneg %p116
      // Predicated region
      $region9: #{tpu_custom_call.1} parent=5 // pred_check
        _
      $region10: #{tpu_custom_call.1} parent=5 // pred_check_branch
        %119 = sbr.rel (%p116) target = $region12
      $region11: #{tpu_custom_call.1} parent=5 // pred_region
        %s120 = ssub.s32 %s12, 1
        // Predicated region
        $region13: #{tpu_custom_call.1} parent=11 // pred_check
          %p121 = pneg %p59
        $region14: #{tpu_custom_call.1} parent=11 // pred_check_branch
          %123 = sbr.rel (%p121) target = $region16
        $region15: #{tpu_custom_call.1} parent=11 // pred_region
          _
        $region16: #{tpu_custom_call.1} parent=11 // pred_fallthru
          _
        // Predicated region
        $region17: #{tpu_custom_call.1} parent=11 // pred_check
          %p124 = pneg %p80
        $region18: #{tpu_custom_call.1} parent=11 // pred_check_branch
          %126 = sbr.rel (%p124) target = $region20
        $region19: #{tpu_custom_call.1} parent=11 // pred_region
          _
        $region20: #{tpu_custom_call.1} parent=11 // pred_fallthru
          _
      $region12: #{tpu_custom_call.1} parent=5 // pred_fallthru
        _
      %p127 = scmp.lt.s32.totalorder %s12, 2
      // Predicated region
      $region21: #{tpu_custom_call.1} parent=5 // pred_check
        %p128 = pneg %p127
      $region22: #{tpu_custom_call.1} parent=5 // pred_check_branch
        %130 = sbr.rel (%p128) target = $region24
      $region23: #{tpu_custom_call.1} parent=5 // pred_region
        // Predicated region
        $region25: #{tpu_custom_call.1} parent=23 // pred_check
          %p131 = pneg %p32
        $region26: #{tpu_custom_call.1} parent=23 // pred_check_branch
          %133 = sbr.rel (%p131) target = $region28
        $region27: #{tpu_custom_call.1} parent=23 // pred_region
          %s134 = smul.u32 32, %s12
          %p135 = scmp.lt.s32.totalorder %s134, 63
          %s136 = scalar_select %p135, %s134, 63
          %s137 = smul.addr %s136, 8
          %s138 = scalar_lea.vmem %s0, %s137
          %s139 = smul.u32 32, %s12
        $region28: #{tpu_custom_call.1} parent=23 // pred_fallthru
          _
      $region24: #{tpu_custom_call.1} parent=5 // pred_fallthru
        _
      %p140 = scmp.le.s32.totalorder 1, %s12
      %p141 = scmp.lt.s32.totalorder %s12, 3
      %p142 = pnand %p140, %p141
      %p143 = pneg %p142
      // Predicated region
      $region29: #{tpu_custom_call.1} parent=5 // pred_check
        _
      $region30: #{tpu_custom_call.1} parent=5 // pred_check_branch
        %145 = sbr.rel (%p142) target = $region32
      $region31: #{tpu_custom_call.1} parent=5 // pred_region
        %s146 = ssub.s32 %s12, 1
        %s147 = smul.u32 32, %s17
        %p148 = scmp.lt.s32.totalorder %s147, 63
        %s149 = scalar_select %p148, %s147, 63
        %s150 = smul.addr %s149, 8
        %s151 = scalar_lea.vmem %s0, %s150
        %p152 = pneg %p38
        %p153 = pneg %p35
        %p154 = pneg %p59
        %p155 = pneg %p56
        %p156 = pneg %p80
        %p157 = pneg %p77
        %p158 = pneg %p106
        %p159 = pneg %p103
        %s160 = sand.u32 %s93, 1
        %s161 = scalar_lea.sflag [#allocation3], %s160
        %s162 = sand.u32 %s93, 1
        %s163 = smul.addr %s162, 256
        %s164 = scalar_lea.vmem [#allocation2], %s163
        %s165 = smul.u32 32, %s17
        %p166 = scmp.lt.s32.totalorder %s165, 63
        %s167 = scalar_select %p166, %s165, 63
        %s168 = smul.addr %s167, 8
        %s169 = scalar_lea.vmem %s0, %s168
        %s170 = smul.u32 32, %s17
        %s171 = smul.u32 32, %s17
        %v172 = vld [vmem:[%s169] sm:$0xff]
        %v173 = vld [vmem:[%s169 + $0x8] sm:$0xff]
        %v174 = vld [vmem:[%s169 + $0x10] sm:$0xff]
        %v175 = vld [vmem:[%s169 + $0x18] sm:$0xff]
        %v176 = vld [vmem:[%s169 + $0x20] sm:$0xff]
        %v177 = vld [vmem:[%s169 + $0x28] sm:$0xff]
        %v178 = vld [vmem:[%s169 + $0x30] sm:$0xff]
        %v179 = vld [vmem:[%s169 + $0x38] sm:$0xff]
        %v180 = vld [vmem:[%s169 + $0x40] sm:$0xff]
        %v181 = vld [vmem:[%s169 + $0x48] sm:$0xff]
        %v182 = vld [vmem:[%s169 + $0x50] sm:$0xff]
        %v183 = vld [vmem:[%s169 + $0x58] sm:$0xff]
        %v184 = vld [vmem:[%s169 + $0x60] sm:$0xff]
        %v185 = vld [vmem:[%s169 + $0x68] sm:$0xff]
        %v186 = vld [vmem:[%s169 + $0x70] sm:$0xff]
        %v187 = vld [vmem:[%s169 + $0x78] sm:$0xff]
        %v188 = vld [vmem:[%s169 + $0x80] sm:$0xff]
        %v189 = vld [vmem:[%s169 + $0x88] sm:$0xff]
        %v190 = vld [vmem:[%s169 + $0x90] sm:$0xff]
        %v191 = vld [vmem:[%s169 + $0x98] sm:$0xff]
        %v192 = vld [vmem:[%s169 + $0xa0] sm:$0xff]
        %v193 = vld [vmem:[%s169 + $0xa8] sm:$0xff]
        %v194 = vld [vmem:[%s169 + $0xb0] sm:$0xff]
        %v195 = vld [vmem:[%s169 + $0xb8] sm:$0xff]
        %v196 = vld [vmem:[%s169 + $0xc0] sm:$0xff]
        %v197 = vld [vmem:[%s169 + $0xc8] sm:$0xff]
        %v198 = vld [vmem:[%s169 + $0xd0] sm:$0xff]
        %v199 = vld [vmem:[%s169 + $0xd8] sm:$0xff]
        %v200 = vld [vmem:[%s169 + $0xe0] sm:$0xff]
        %v201 = vld [vmem:[%s169 + $0xe8] sm:$0xff]
        %v202 = vld [vmem:[%s169 + $0xf0] sm:$0xff]
        %v203 = vld [vmem:[%s169 + $0xf8] sm:$0xff]
        %v204 = vld [vmem:[%s1] sm:$0xf]
        %v205 = vld [vmem:[%s2] sm:$0x1]
        %v207 = vlaneseq
        %v208 = vshrl.u32 %v207, 7
        %v209 = vsub.s32 0, %v208
        %v210 = vrot.slane %v205, %v209
        %vm212 = vcmask 31744
        %v214 = vsel %vm212, %v172, 0
        %v217 = vsel %vm212, %v173, 0
        %v220 = vsel %vm212, %v174, 0
        %v223 = vsel %vm212, %v175, 0
        %v226 = vsel %vm212, %v176, 0
        %v229 = vsel %vm212, %v177, 0
        %v232 = vsel %vm212, %v178, 0
        %v235 = vsel %vm212, %v179, 0
        %v238 = vsel %vm212, %v180, 0
        %v241 = vsel %vm212, %v181, 0
        %v244 = vsel %vm212, %v182, 0
        %v247 = vsel %vm212, %v183, 0
        %v250 = vsel %vm212, %v184, 0
        %v253 = vsel %vm212, %v185, 0
        %v256 = vsel %vm212, %v186, 0
        %v259 = vsel %vm212, %v187, 0
        %v262 = vsel %vm212, %v188, 0
        %v265 = vsel %vm212, %v189, 0
        %v268 = vsel %vm212, %v190, 0
        %v271 = vsel %vm212, %v191, 0
        %v274 = vsel %vm212, %v192, 0
        %v277 = vsel %vm212, %v193, 0
        %v280 = vsel %vm212, %v194, 0
        %v283 = vsel %vm212, %v195, 0
        %v286 = vsel %vm212, %v196, 0
        %v289 = vsel %vm212, %v197, 0
        %v292 = vsel %vm212, %v198, 0
        %v295 = vsel %vm212, %v199, 0
        %v298 = vsel %vm212, %v200, 0
        %v301 = vsel %vm212, %v201, 0
        %v304 = vsel %vm212, %v202, 0
        %v307 = vsel %vm212, %v203, 0
        %vm309 = vcmask 1043456
        %v311 = vsel %vm309, %v204, 0
        %313 = vmatprep.subr.mxu0 0.0
        %v314 = vand.u32 %v311, 4294901760
        %315 = vmatpush1.msra.mxu0 %v314
        %316 = vmatprep.subr.mxu0 0.0
        %317 = vmatpush1.msra.mxu0 0.0
        %318 = vmatprep.subr.mxu0 0.0
        %319 = vmatpush1.msra.mxu0 0.0
        %320 = vmatprep.subr.mxu0 0.0
        %321 = vmatpush1.msra.mxu0 0.0
        %322 = vmatprep.subr.mxu0 0.0
        %323 = vmatpush1.msra.mxu0 0.0
        %324 = vmatprep.subr.mxu0 0.0
        %325 = vmatpush1.msra.mxu0 0.0
        %326 = vmatprep.subr.mxu0 0.0
        %327 = vmatpush1.msra.mxu0 0.0
        %328 = vmatprep.subr.mxu0 0.0
        %329 = vmatpush1.msra.mxu0 0.0
        %330 = vmatprep.subr.mxu0 0.0
        %331 = vmatpush1.msra.mxu0 0.0
        %332 = vmatprep.subr.mxu0 0.0
        %333 = vmatpush1.msra.mxu0 0.0
        %334 = vmatprep.subr.mxu0 0.0
        %335 = vmatpush1.msra.mxu0 0.0
        %336 = vmatprep.subr.mxu0 0.0
        %337 = vmatpush1.msra.mxu0 0.0
        %338 = vmatprep.subr.mxu0 0.0
        %339 = vmatpush1.msra.mxu0 0.0
        %340 = vmatprep.subr.mxu0 0.0
        %341 = vmatpush1.msra.mxu0 0.0
        %342 = vmatprep.subr.mxu0 0.0
        %343 = vmatpush1.msra.mxu0 0.0
        %344 = vmatprep.subr.mxu0 0.0
        %345 = vmatpush1.msra.mxu0 0.0
        %346 = vmatprep.subr.mxu0 0.0
        %347 = vmatpush1.msra.mxu0 0.0
        %348 = vmatprep.subr.mxu0 0.0
        %349 = vmatpush1.msra.mxu0 0.0
        %350 = vmatprep.subr.mxu0 0.0
        %351 = vmatpush1.msra.mxu0 0.0
        %352 = vmatprep.subr.mxu0 0.0
        %353 = vmatpush1.msra.mxu0 0.0
        %354 = vmatprep.subr.mxu0 0.0
        %355 = vmatpush1.msra.mxu0 0.0
        %356 = vmatprep.subr.mxu0 0.0
        %357 = vmatpush1.msra.mxu0 0.0
        %358 = vmatprep.subr.mxu0 0.0
        %359 = vmatpush1.msra.mxu0 0.0
        %360 = vmatprep.subr.mxu0 0.0
        %361 = vmatpush1.msra.mxu0 0.0
        %362 = vmatprep.subr.mxu0 0.0
        %363 = vmatpush1.msra.mxu0 0.0
        %364 = vmatprep.subr.mxu0 0.0
        %365 = vmatpush1.msra.mxu0 0.0
        %366 = vmatprep.subr.mxu0 0.0
        %367 = vmatpush1.msra.mxu0 0.0
        %368 = vmatprep.subr.mxu0 0.0
        %369 = vmatpush1.msra.mxu0 0.0
        %370 = vmatprep.subr.mxu0 0.0
        %371 = vmatpush1.msra.mxu0 0.0
        %372 = vmatprep.subr.mxu0 0.0
        %373 = vmatpush1.msra.mxu0 0.0
        %374 = vmatprep.subr.mxu0 0.0
        %375 = vmatpush1.msra.mxu0 0.0
        %376 = vmatprep.subr.mxu0 0.0
        %377 = vmatpush1.msra.mxu0 0.0
        %378 = vmatprep.mubr.f32.mxu0 0.0
        %v379 = vand.u32 %v214, 4294901760
        %v380 = vsub.f32 %v214, %v379
        %v381 = vand.u32 %v380, 4294901760
        %v382 = vsub.f32 %v380, %v381
        %v383 = vand.u32 %v382, 4294901760
        %384 = vmatmul.mubr.f32.gmra.mrb[0].mxu0 %v383
        %v385 = vpop.f32.mrb[0].mxu0
        %v386 = vadd.f32 %v210, %v385
        %v387 = vpop.f32.mrb[0].mxu0
        %388 = vmatprep.mubr.f32.mxu0 0.0
        %v389 = vand.u32 %v217, 4294901760
        %v390 = vsub.f32 %v217, %v389
        %v391 = vand.u32 %v390, 4294901760
        %v392 = vsub.f32 %v390, %v391
        %v393 = vand.u32 %v392, 4294901760
        %394 = vmatmul.mubr.f32.gmra.mrb[0].mxu0 %v393
        %v395 = vpop.f32.mrb[0].mxu0
        %v396 = vadd.f32 %v210, %v395
        %v397 = vpop.f32.mrb[0].mxu0
        %398 = vmatprep.mubr.f32.mxu0 0.0
        %v399 = vand.u32 %v220, 4294901760
        %v400 = vsub.f32 %v220, %v399
        %v401 = vand.u32 %v400, 4294901760
        %v402 = vsub.f32 %v400, %v401
        %v403 = vand.u32 %v402, 4294901760
        %404 = vmatmul.mubr.f32.gmra.mrb[0].mxu0 %v403
        %v405 = vpop.f32.mrb[0].mxu0
        %v406 = vadd.f32 %v210, %v405
        %v407 = vpop.f32.mrb[0].mxu0
        %408 = vmatprep.mubr.f32.mxu0 0.0
        %v409 = vand.u32 %v223, 4294901760
        %v410 = vsub.f32 %v223, %v409
        %v411 = vand.u32 %v410, 4294901760
        %v412 = vsub.f32 %v410, %v411
        %v413 = vand.u32 %v412, 4294901760
        %414 = vmatmul.mubr.f32.gmra.mrb[0].mxu0 %v413
        %v415 = vpop.f32.mrb[0].mxu0
        %v416 = vadd.f32 %v210, %v415
        %v417 = vpop.f32.mrb[0].mxu0
        %418 = vmatprep.mubr.f32.mxu0 0.0
        %v419 = vand.u32 %v226, 4294901760
        %v420 = vsub.f32 %v226, %v419
        %v421 = vand.u32 %v420, 4294901760
        %v422 = vsub.f32 %v420, %v421
        %v423 = vand.u32 %v422, 4294901760
        %424 = vmatmul.mubr.f32.gmra.mrb[0].mxu0 %v423
        %v425 = vpop.f32.mrb[0].mxu0
        %v426 = vadd.f32 %v210, %v425
        %v427 = vpop.f32.mrb[0].mxu0
        %428 = vmatprep.mubr.f32.mxu0 0.0
        %v429 = vand.u32 %v229, 4294901760
        %v430 = vsub.f32 %v229, %v429
        %v431 = vand.u32 %v430, 4294901760
        %v432 = vsub.f32 %v430, %v431
        %v433 = vand.u32 %v432, 4294901760
        %434 = vmatmul.mubr.f32.gmra.mrb[0].mxu0 %v433
        %v435 = vpop.f32.mrb[0].mxu0
        %v436 = vadd.f32 %v210, %v435
        %v437 = vpop.f32.mrb[0].mxu0
        %438 = vmatprep.mubr.f32.mxu0 0.0
        %v439 = vand.u32 %v232, 4294901760
        %v440 = vsub.f32 %v232, %v439
        %v441 = vand.u32 %v440, 4294901760
        %v442 = vsub.f32 %v440, %v441
        %v443 = vand.u32 %v442, 4294901760
        %444 = vmatmul.mubr.f32.gmra.mrb[0].mxu0 %v443
        %v445 = vpop.f32.mrb[0].mxu0
        %v446 = vadd.f32 %v210, %v445
        %v447 = vpop.f32.mrb[0].mxu0
        %448 = vmatprep.mubr.f32.mxu0 0.0
        %v449 = vand.u32 %v235, 4294901760
        %v450 = vsub.f32 %v235, %v449
        %v451 = vand.u32 %v450, 4294901760
        %v452 = vsub.f32 %v450, %v451
        %v453 = vand.u32 %v452, 4294901760
        %454 = vmatmul.mubr.f32.gmra.mrb[0].mxu0 %v453
        %v455 = vpop.f32.mrb[0].mxu0
        %v456 = vadd.f32 %v210, %v455
        %v457 = vpop.f32.mrb[0].mxu0
        %458 = vmatprep.mubr.f32.mxu0 0.0
        %v459 = vand.u32 %v238, 4294901760
        %v460 = vsub.f32 %v238, %v459
        %v461 = vand.u32 %v460, 4294901760
        %v462 = vsub.f32 %v460, %v461
        %v463 = vand.u32 %v462, 4294901760
        %464 = vmatmul.mubr.f32.gmra.mrb[0].mxu0 %v463
        %v465 = vpop.f32.mrb[0].mxu0
        %v466 = vadd.f32 %v210, %v465
        %v467 = vpop.f32.mrb[0].mxu0
        %468 = vmatprep.mubr.f32.mxu0 0.0
        %v469 = vand.u32 %v241, 4294901760
        %v470 = vsub.f32 %v241, %v469
        %v471 = vand.u32 %v470, 4294901760
        %v472 = vsub.f32 %v470, %v471
        %v473 = vand.u32 %v472, 4294901760
        %474 = vmatmul.mubr.f32.gmra.mrb[0].mxu0 %v473
        %v475 = vpop.f32.mrb[0].mxu0
        %v476 = vadd.f32 %v210, %v475
        %v477 = vpop.f32.mrb[0].mxu0
        %478 = vmatprep.mubr.f32.mxu0 0.0
        %v479 = vand.u32 %v244, 4294901760
        %v480 = vsub.f32 %v244, %v479
        %v481 = vand.u32 %v480, 4294901760
        %v482 = vsub.f32 %v480, %v481
        %v483 = vand.u32 %v482, 4294901760
        %484 = vmatmul.mubr.f32.gmra.mrb[0].mxu0 %v483
        %v485 = vpop.f32.mrb[0].mxu0
        %v486 = vadd.f32 %v210, %v485
        %v487 = vpop.f32.mrb[0].mxu0
        %488 = vmatprep.mubr.f32.mxu0 0.0
        %v489 = vand.u32 %v247, 4294901760
        %v490 = vsub.f32 %v247, %v489
        %v491 = vand.u32 %v490, 4294901760
        %v492 = vsub.f32 %v490, %v491
        %v493 = vand.u32 %v492, 4294901760
        %494 = vmatmul.mubr.f32.gmra.mrb[0].mxu0 %v493
        %v495 = vpop.f32.mrb[0].mxu0
        %v496 = vadd.f32 %v210, %v495
        %v497 = vpop.f32.mrb[0].mxu0
        %498 = vmatprep.mubr.f32.mxu0 0.0
        %v499 = vand.u32 %v250, 4294901760
        %v500 = vsub.f32 %v250, %v499
        %v501 = vand.u32 %v500, 4294901760
        %v502 = vsub.f32 %v500, %v501
        %v503 = vand.u32 %v502, 4294901760
        %504 = vmatmul.mubr.f32.gmra.mrb[0].mxu0 %v503
        %v505 = vpop.f32.mrb[0].mxu0
        %v506 = vadd.f32 %v210, %v505
        %v507 = vpop.f32.mrb[0].mxu0
        %508 = vmatprep.mubr.f32.mxu0 0.0
        %v509 = vand.u32 %v253, 4294901760
        %v510 = vsub.f32 %v253, %v509
        %v511 = vand.u32 %v510, 4294901760
        %v512 = vsub.f32 %v510, %v511
        %v513 = vand.u32 %v512, 4294901760
        %514 = vmatmul.mubr.f32.gmra.mrb[0].mxu0 %v513
        %v515 = vpop.f32.mrb[0].mxu0
        %v516 = vadd.f32 %v210, %v515
        %v517 = vpop.f32.mrb[0].mxu0
        %518 = vmatprep.mubr.f32.mxu0 0.0
        %v519 = vand.u32 %v256, 4294901760
        %v520 = vsub.f32 %v256, %v519
        %v521 = vand.u32 %v520, 4294901760
        %v522 = vsub.f32 %v520, %v521
        %v523 = vand.u32 %v522, 4294901760
        %524 = vmatmul.mubr.f32.gmra.mrb[0].mxu0 %v523
        %v525 = vpop.f32.mrb[0].mxu0
        %v526 = vadd.f32 %v210, %v525
        %v527 = vpop.f32.mrb[0].mxu0
        %528 = vmatprep.mubr.f32.mxu0 0.0
        %v529 = vand.u32 %v259, 4294901760
        %v530 = vsub.f32 %v259, %v529
        %v531 = vand.u32 %v530, 4294901760
        %v532 = vsub.f32 %v530, %v531
        %v533 = vand.u32 %v532, 4294901760
        %534 = vmatmul.mubr.f32.gmra.mrb[0].mxu0 %v533
        %v535 = vpop.f32.mrb[0].mxu0
        %v536 = vadd.f32 %v210, %v535
        %v537 = vpop.f32.mrb[0].mxu0
        %538 = vmatprep.mubr.f32.mxu0 0.0
        %v539 = vand.u32 %v262, 4294901760
        %v540 = vsub.f32 %v262, %v539
        %v541 = vand.u32 %v540, 4294901760
        %v542 = vsub.f32 %v540, %v541
        %v543 = vand.u32 %v542, 4294901760
        %544 = vmatmul.mubr.f32.gmra.mrb[0].mxu0 %v543
        %v545 = vpop.f32.mrb[0].mxu0
        %v546 = vadd.f32 %v210, %v545
        %v547 = vpop.f32.mrb[0].mxu0
        %548 = vmatprep.mubr.f32.mxu0 0.0
        %v549 = vand.u32 %v265, 4294901760
        %v550 = vsub.f32 %v265, %v549
        %v551 = vand.u32 %v550, 4294901760
        %v552 = vsub.f32 %v550, %v551
        %v553 = vand.u32 %v552, 4294901760
        %554 = vmatmul.mubr.f32.gmra.mrb[0].mxu0 %v553
        %v555 = vpop.f32.mrb[0].mxu0
        %v556 = vadd.f32 %v210, %v555
        %v557 = vpop.f32.mrb[0].mxu0
        %558 = vmatprep.mubr.f32.mxu0 0.0
        %v559 = vand.u32 %v268, 4294901760
        %v560 = vsub.f32 %v268, %v559
        %v561 = vand.u32 %v560, 4294901760
        %v562 = vsub.f32 %v560, %v561
        %v563 = vand.u32 %v562, 4294901760
        %564 = vmatmul.mubr.f32.gmra.mrb[0].mxu0 %v563
        %v565 = vpop.f32.mrb[0].mxu0
        %v566 = vadd.f32 %v210, %v565
        %v567 = vpop.f32.mrb[0].mxu0
        %568 = vmatprep.mubr.f32.mxu0 0.0
        %v569 = vand.u32 %v271, 4294901760
        %v570 = vsub.f32 %v271, %v569
        %v571 = vand.u32 %v570, 4294901760
        %v572 = vsub.f32 %v570, %v571
        %v573 = vand.u32 %v572, 4294901760
        %574 = vmatmul.mubr.f32.gmra.mrb[0].mxu0 %v573
        %v575 = vpop.f32.mrb[0].mxu0
        %v576 = vadd.f32 %v210, %v575
        %v577 = vpop.f32.mrb[0].mxu0
        %578 = vmatprep.mubr.f32.mxu0 0.0
        %v579 = vand.u32 %v274, 4294901760
        %v580 = vsub.f32 %v274, %v579
        %v581 = vand.u32 %v580, 4294901760
        %v582 = vsub.f32 %v580, %v581
        %v583 = vand.u32 %v582, 4294901760
        %584 = vmatmul.mubr.f32.gmra.mrb[0].mxu0 %v583
        %v585 = vpop.f32.mrb[0].mxu0
        %v586 = vadd.f32 %v210, %v585
        %v587 = vpop.f32.mrb[0].mxu0
        %588 = vmatprep.mubr.f32.mxu0 0.0
        %v589 = vand.u32 %v277, 4294901760
        %v590 = vsub.f32 %v277, %v589
        %v591 = vand.u32 %v590, 4294901760
        %v592 = vsub.f32 %v590, %v591
        %v593 = vand.u32 %v592, 4294901760
        %594 = vmatmul.mubr.f32.gmra.mrb[0].mxu0 %v593
        %v595 = vpop.f32.mrb[0].mxu0
        %v596 = vadd.f32 %v210, %v595
        %v597 = vpop.f32.mrb[0].mxu0
        %598 = vmatprep.mubr.f32.mxu0 0.0
        %v599 = vand.u32 %v280, 4294901760
        %v600 = vsub.f32 %v280, %v599
        %v601 = vand.u32 %v600, 4294901760
        %v602 = vsub.f32 %v600, %v601
        %v603 = vand.u32 %v602, 4294901760
        %604 = vmatmul.mubr.f32.gmra.mrb[0].mxu0 %v603
        %v605 = vpop.f32.mrb[0].mxu0
        %v606 = vadd.f32 %v210, %v605
        %v607 = vpop.f32.mrb[0].mxu0
        %608 = vmatprep.mubr.f32.mxu0 0.0
        %v609 = vand.u32 %v283, 4294901760
        %v610 = vsub.f32 %v283, %v609
        %v611 = vand.u32 %v610, 4294901760
        %v612 = vsub.f32 %v610, %v611
        %v613 = vand.u32 %v612, 4294901760
        %614 = vmatmul.mubr.f32.gmra.mrb[0].mxu0 %v613
        %v615 = vpop.f32.mrb[0].mxu0
        %v616 = vadd.f32 %v210, %v615
        %v617 = vpop.f32.mrb[0].mxu0
        %618 = vmatprep.mubr.f32.mxu0 0.0
        %v619 = vand.u32 %v286, 4294901760
        %v620 = vsub.f32 %v286, %v619
        %v621 = vand.u32 %v620, 4294901760
        %v622 = vsub.f32 %v620, %v621
        %v623 = vand.u32 %v622, 4294901760
        %624 = vmatmul.mubr.f32.gmra.mrb[0].mxu0 %v623
        %v625 = vpop.f32.mrb[0].mxu0
        %v626 = vadd.f32 %v210, %v625
        %v627 = vpop.f32.mrb[0].mxu0
        %628 = vmatprep.mubr.f32.mxu0 0.0
        %v629 = vand.u32 %v289, 4294901760
        %v630 = vsub.f32 %v289, %v629
        %v631 = vand.u32 %v630, 4294901760
        %v632 = vsub.f32 %v630, %v631
        %v633 = vand.u32 %v632, 4294901760
        %634 = vmatmul.mubr.f32.gmra.mrb[0].mxu0 %v633
        %v635 = vpop.f32.mrb[0].mxu0
        %v636 = vadd.f32 %v210, %v635
        %v637 = vpop.f32.mrb[0].mxu0
        %638 = vmatprep.mubr.f32.mxu0 0.0
        %v639 = vand.u32 %v292, 4294901760
        %v640 = vsub.f32 %v292, %v639
        %v641 = vand.u32 %v640, 4294901760
        %v642 = vsub.f32 %v640, %v641
        %v643 = vand.u32 %v642, 4294901760
        %644 = vmatmul.mubr.f32.gmra.mrb[0].mxu0 %v643
        %v645 = vpop.f32.mrb[0].mxu0
        %v646 = vadd.f32 %v210, %v645
        %v647 = vpop.f32.mrb[0].mxu0
        %648 = vmatprep.mubr.f32.mxu0 0.0
        %v649 = vand.u32 %v295, 4294901760
        %v650 = vsub.f32 %v295, %v649
        %v651 = vand.u32 %v650, 4294901760
        %v652 = vsub.f32 %v650, %v651
        %v653 = vand.u32 %v652, 4294901760
        %654 = vmatmul.mubr.f32.gmra.mrb[0].mxu0 %v653
        %v655 = vpop.f32.mrb[0].mxu0
        %v656 = vadd.f32 %v210, %v655
        %v657 = vpop.f32.mrb[0].mxu0
        %658 = vmatprep.mubr.f32.mxu0 0.0
        %v659 = vand.u32 %v298, 4294901760
        %v660 = vsub.f32 %v298, %v659
        %v661 = vand.u32 %v660, 4294901760
        %v662 = vsub.f32 %v660, %v661
        %v663 = vand.u32 %v662, 4294901760
        %664 = vmatmul.mubr.f32.gmra.mrb[0].mxu0 %v663
        %v665 = vpop.f32.mrb[0].mxu0
        %v666 = vadd.f32 %v210, %v665
        %v667 = vpop.f32.mrb[0].mxu0
        %668 = vmatprep.mubr.f32.mxu0 0.0
        %v669 = vand.u32 %v301, 4294901760
        %v670 = vsub.f32 %v301, %v669
        %v671 = vand.u32 %v670, 4294901760
        %v672 = vsub.f32 %v670, %v671
        %v673 = vand.u32 %v672, 4294901760
        %674 = vmatmul.mubr.f32.gmra.mrb[0].mxu0 %v673
        %v675 = vpop.f32.mrb[0].mxu0
        %v676 = vadd.f32 %v210, %v675
        %v677 = vpop.f32.mrb[0].mxu0
        %678 = vmatprep.mubr.f32.mxu0 0.0
        %v679 = vand.u32 %v304, 4294901760
        %v680 = vsub.f32 %v304, %v679
        %v681 = vand.u32 %v680, 4294901760
        %v682 = vsub.f32 %v680, %v681
        %v683 = vand.u32 %v682, 4294901760
        %684 = vmatmul.mubr.f32.gmra.mrb[0].mxu0 %v683
        %v685 = vpop.f32.mrb[0].mxu0
        %v686 = vadd.f32 %v210, %v685
        %v687 = vpop.f32.mrb[0].mxu0
        %688 = vmatprep.mubr.f32.mxu0 0.0
        %v689 = vand.u32 %v307, 4294901760
        %v690 = vsub.f32 %v307, %v689
        %v691 = vand.u32 %v690, 4294901760
        %v692 = vsub.f32 %v690, %v691
        %v693 = vand.u32 %v692, 4294901760
        %694 = vmatmul.mubr.f32.gmra.mrb[0].mxu0 %v693
        %v695 = vpop.f32.mrb[0].mxu0
        %v696 = vadd.f32 %v210, %v695
        %v697 = vpop.f32.mrb[0].mxu0
        %698 = vdwg.mxu0
        %699 = vmatprep.subr.mxu0 0.0
        %v700 = vand.u32 %v311, 4294901760
        %v701 = vsub.f32 %v311, %v700
        %v702 = vand.u32 %v701, 4294901760
        %v703 = vsub.f32 %v701, %v702
        %v704 = vand.u32 %v703, 4294901760
        %705 = vmatpush1.msra.mxu0 %v704
        %706 = vmatprep.subr.mxu0 0.0
        %707 = vmatpush1.msra.mxu0 0.0
        %708 = vmatprep.subr.mxu0 0.0
        %709 = vmatpush1.msra.mxu0 0.0
        %710 = vmatprep.subr.mxu0 0.0
        %711 = vmatpush1.msra.mxu0 0.0
        %712 = vmatprep.subr.mxu0 0.0
        %713 = vmatpush1.msra.mxu0 0.0
        %714 = vmatprep.subr.mxu0 0.0
        %715 = vmatpush1.msra.mxu0 0.0
        %716 = vmatprep.subr.mxu0 0.0
        %717 = vmatpush1.msra.mxu0 0.0
        %718 = vmatprep.subr.mxu0 0.0
        %719 = vmatpush1.msra.mxu0 0.0
        %720 = vmatprep.subr.mxu0 0.0
        %721 = vmatpush1.msra.mxu0 0.0
        %722 = vmatprep.subr.mxu0 0.0
        %723 = vmatpush1.msra.mxu0 0.0
        %724 = vmatprep.subr.mxu0 0.0
        %725 = vmatpush1.msra.mxu0 0.0
        %726 = vmatprep.subr.mxu0 0.0
        %727 = vmatpush1.msra.mxu0 0.0
        %728 = vmatprep.subr.mxu0 0.0
        %729 = vmatpush1.msra.mxu0 0.0
        %730 = vmatprep.subr.mxu0 0.0
        %731 = vmatpush1.msra.mxu0 0.0
        %732 = vmatprep.subr.mxu0 0.0
        %733 = vmatpush1.msra.mxu0 0.0
        %734 = vmatprep.subr.mxu0 0.0
        %735 = vmatpush1.msra.mxu0 0.0
        %736 = vmatprep.subr.mxu0 0.0
        %737 = vmatpush1.msra.mxu0 0.0
        %738 = vmatprep.subr.mxu0 0.0
        %739 = vmatpush1.msra.mxu0 0.0
        %740 = vmatprep.subr.mxu0 0.0
        %741 = vmatpush1.msra.mxu0 0.0
        %742 = vmatprep.subr.mxu0 0.0
        %743 = vmatpush1.msra.mxu0 0.0
        %744 = vmatprep.subr.mxu0 0.0
        %745 = vmatpush1.msra.mxu0 0.0
        %746 = vmatprep.subr.mxu0 0.0
        %747 = vmatpush1.msra.mxu0 0.0
        %748 = vmatprep.subr.mxu0 0.0
        %749 = vmatpush1.msra.mxu0 0.0
        %750 = vmatprep.subr.mxu0 0.0
        %751 = vmatpush1.msra.mxu0 0.0
        %752 = vmatprep.subr.mxu0 0.0
        %753 = vmatpush1.msra.mxu0 0.0
        %754 = vmatprep.subr.mxu0 0.0
        %755 = vmatpush1.msra.mxu0 0.0
        %756 = vmatprep.subr.mxu0 0.0
        %757 = vmatpush1.msra.mxu0 0.0
        %758 = vmatprep.subr.mxu0 0.0
        %759 = vmatpush1.msra.mxu0 0.0
        %760 = vmatprep.subr.mxu0 0.0
        %761 = vmatpush1.msra.mxu0 0.0
        %762 = vmatprep.subr.mxu0 0.0
        %763 = vmatpush1.msra.mxu0 0.0
        %764 = vmatprep.subr.mxu0 0.0
        %765 = vmatpush1.msra.mxu0 0.0
        %766 = vmatprep.subr.mxu0 0.0
        %767 = vmatpush1.msra.mxu0 0.0
        %768 = vmatprep.mubr.f32.mxu0 0.0
        %v769 = vand.u32 %v214, 4294901760
        %770 = vmatmul.mubr.f32.gmra.mrb[0].mxu0 %v769
        %v771 = vpop.f32.mrb[0].mxu0
        %v772 = vadd.f32 %v386, %v771
        %v773 = vpop.f32.mrb[0].mxu0
        %774 = vmatprep.mubr.f32.mxu0 0.0
        %v775 = vand.u32 %v217, 4294901760
        %776 = vmatmul.mubr.f32.gmra.mrb[0].mxu0 %v775
        %v777 = vpop.f32.mrb[0].mxu0
        %v778 = vadd.f32 %v396, %v777
        %v779 = vpop.f32.mrb[0].mxu0
        %780 = vmatprep.mubr.f32.mxu0 0.0
        %v781 = vand.u32 %v220, 4294901760
        %782 = vmatmul.mubr.f32.gmra.mrb[0].mxu0 %v781
        %v783 = vpop.f32.mrb[0].mxu0
        %v784 = vadd.f32 %v406, %v783
        %v785 = vpop.f32.mrb[0].mxu0
        %786 = vmatprep.mubr.f32.mxu0 0.0
        %v787 = vand.u32 %v223, 4294901760
        %788 = vmatmul.mubr.f32.gmra.mrb[0].mxu0 %v787
        %v789 = vpop.f32.mrb[0].mxu0
        %v790 = vadd.f32 %v416, %v789
        %v791 = vpop.f32.mrb[0].mxu0
        %792 = vmatprep.mubr.f32.mxu0 0.0
        %v793 = vand.u32 %v226, 4294901760
        %794 = vmatmul.mubr.f32.gmra.mrb[0].mxu0 %v793
        %v795 = vpop.f32.mrb[0].mxu0
        %v796 = vadd.f32 %v426, %v795
        %v797 = vpop.f32.mrb[0].mxu0
        %798 = vmatprep.mubr.f32.mxu0 0.0
        %v799 = vand.u32 %v229, 4294901760
        %800 = vmatmul.mubr.f32.gmra.mrb[0].mxu0 %v799
        %v801 = vpop.f32.mrb[0].mxu0
        %v802 = vadd.f32 %v436, %v801
        %v803 = vpop.f32.mrb[0].mxu0
        %804 = vmatprep.mubr.f32.mxu0 0.0
        %v805 = vand.u32 %v232, 4294901760
        %806 = vmatmul.mubr.f32.gmra.mrb[0].mxu0 %v805
        %v807 = vpop.f32.mrb[0].mxu0
        %v808 = vadd.f32 %v446, %v807
        %v809 = vpop.f32.mrb[0].mxu0
        %810 = vmatprep.mubr.f32.mxu0 0.0
        %v811 = vand.u32 %v235, 4294901760
        %812 = vmatmul.mubr.f32.gmra.mrb[0].mxu0 %v811
        %v813 = vpop.f32.mrb[0].mxu0
        %v814 = vadd.f32 %v456, %v813
        %v815 = vpop.f32.mrb[0].mxu0
        %816 = vmatprep.mubr.f32.mxu0 0.0
        %v817 = vand.u32 %v238, 4294901760
        %818 = vmatmul.mubr.f32.gmra.mrb[0].mxu0 %v817
        %v819 = vpop.f32.mrb[0].mxu0
        %v820 = vadd.f32 %v466, %v819
        %v821 = vpop.f32.mrb[0].mxu0
        %822 = vmatprep.mubr.f32.mxu0 0.0
        %v823 = vand.u32 %v241, 4294901760
        %824 = vmatmul.mubr.f32.gmra.mrb[0].mxu0 %v823
        %v825 = vpop.f32.mrb[0].mxu0
        %v826 = vadd.f32 %v476, %v825
        %v827 = vpop.f32.mrb[0].mxu0
        %828 = vmatprep.mubr.f32.mxu0 0.0
        %v829 = vand.u32 %v244, 4294901760
        %830 = vmatmul.mubr.f32.gmra.mrb[0].mxu0 %v829
        %v831 = vpop.f32.mrb[0].mxu0
        %v832 = vadd.f32 %v486, %v831
        %v833 = vpop.f32.mrb[0].mxu0
        %834 = vmatprep.mubr.f32.mxu0 0.0
        %v835 = vand.u32 %v247, 4294901760
        %836 = vmatmul.mubr.f32.gmra.mrb[0].mxu0 %v835
        %v837 = vpop.f32.mrb[0].mxu0
        %v838 = vadd.f32 %v496, %v837
        %v839 = vpop.f32.mrb[0].mxu0
        %840 = vmatprep.mubr.f32.mxu0 0.0
        %v841 = vand.u32 %v250, 4294901760
        %842 = vmatmul.mubr.f32.gmra.mrb[0].mxu0 %v841
        %v843 = vpop.f32.mrb[0].mxu0
        %v844 = vadd.f32 %v506, %v843
        %v845 = vpop.f32.mrb[0].mxu0
        %846 = vmatprep.mubr.f32.mxu0 0.0
        %v847 = vand.u32 %v253, 4294901760
        %848 = vmatmul.mubr.f32.gmra.mrb[0].mxu0 %v847
        %v849 = vpop.f32.mrb[0].mxu0
        %v850 = vadd.f32 %v516, %v849
        %v851 = vpop.f32.mrb[0].mxu0
        %852 = vmatprep.mubr.f32.mxu0 0.0
        %v853 = vand.u32 %v256, 4294901760
        %854 = vmatmul.mubr.f32.gmra.mrb[0].mxu0 %v853
        %v855 = vpop.f32.mrb[0].mxu0
        %v856 = vadd.f32 %v526, %v855
        %v857 = vpop.f32.mrb[0].mxu0
        %858 = vmatprep.mubr.f32.mxu0 0.0
        %v859 = vand.u32 %v259, 4294901760
        %860 = vmatmul.mubr.f32.gmra.mrb[0].mxu0 %v859
        %v861 = vpop.f32.mrb[0].mxu0
        %v862 = vadd.f32 %v536, %v861
        %v863 = vpop.f32.mrb[0].mxu0
        %864 = vmatprep.mubr.f32.mxu0 0.0
        %v865 = vand.u32 %v262, 4294901760
        %866 = vmatmul.mubr.f32.gmra.mrb[0].mxu0 %v865
        %v867 = vpop.f32.mrb[0].mxu0
        %v868 = vadd.f32 %v546, %v867
        %v869 = vpop.f32.mrb[0].mxu0
        %870 = vmatprep.mubr.f32.mxu0 0.0
        %v871 = vand.u32 %v265, 4294901760
        %872 = vmatmul.mubr.f32.gmra.mrb[0].mxu0 %v871
        %v873 = vpop.f32.mrb[0].mxu0
        %v874 = vadd.f32 %v556, %v873
        %v875 = vpop.f32.mrb[0].mxu0
        %876 = vmatprep.mubr.f32.mxu0 0.0
        %v877 = vand.u32 %v268, 4294901760
        %878 = vmatmul.mubr.f32.gmra.mrb[0].mxu0 %v877
        %v879 = vpop.f32.mrb[0].mxu0
        %v880 = vadd.f32 %v566, %v879
        %v881 = vpop.f32.mrb[0].mxu0
        %882 = vmatprep.mubr.f32.mxu0 0.0
        %v883 = vand.u32 %v271, 4294901760
        %884 = vmatmul.mubr.f32.gmra.mrb[0].mxu0 %v883
        %v885 = vpop.f32.mrb[0].mxu0
        %v886 = vadd.f32 %v576, %v885
        %v887 = vpop.f32.mrb[0].mxu0
        %888 = vmatprep.mubr.f32.mxu0 0.0
        %v889 = vand.u32 %v274, 4294901760
        %890 = vmatmul.mubr.f32.gmra.mrb[0].mxu0 %v889
        %v891 = vpop.f32.mrb[0].mxu0
        %v892 = vadd.f32 %v586, %v891
        %v893 = vpop.f32.mrb[0].mxu0
        %894 = vmatprep.mubr.f32.mxu0 0.0
        %v895 = vand.u32 %v277, 4294901760
        %896 = vmatmul.mubr.f32.gmra.mrb[0].mxu0 %v895
        %v897 = vpop.f32.mrb[0].mxu0
        %v898 = vadd.f32 %v596, %v897
        %v899 = vpop.f32.mrb[0].mxu0
        %900 = vmatprep.mubr.f32.mxu0 0.0
        %v901 = vand.u32 %v280, 4294901760
        %902 = vmatmul.mubr.f32.gmra.mrb[0].mxu0 %v901
        %v903 = vpop.f32.mrb[0].mxu0
        %v904 = vadd.f32 %v606, %v903
        %v905 = vpop.f32.mrb[0].mxu0
        %906 = vmatprep.mubr.f32.mxu0 0.0
        %v907 = vand.u32 %v283, 4294901760
        %908 = vmatmul.mubr.f32.gmra.mrb[0].mxu0 %v907
        %v909 = vpop.f32.mrb[0].mxu0
        %v910 = vadd.f32 %v616, %v909
        %v911 = vpop.f32.mrb[0].mxu0
        %912 = vmatprep.mubr.f32.mxu0 0.0
        %v913 = vand.u32 %v286, 4294901760
        %914 = vmatmul.mubr.f32.gmra.mrb[0].mxu0 %v913
        %v915 = vpop.f32.mrb[0].mxu0
        %v916 = vadd.f32 %v626, %v915
        %v917 = vpop.f32.mrb[0].mxu0
        %918 = vmatprep.mubr.f32.mxu0 0.0
        %v919 = vand.u32 %v289, 4294901760
        %920 = vmatmul.mubr.f32.gmra.mrb[0].mxu0 %v919
        %v921 = vpop.f32.mrb[0].mxu0
        %v922 = vadd.f32 %v636, %v921
        %v923 = vpop.f32.mrb[0].mxu0
        %924 = vmatprep.mubr.f32.mxu0 0.0
        %v925 = vand.u32 %v292, 4294901760
        %926 = vmatmul.mubr.f32.gmra.mrb[0].mxu0 %v925
        %v927 = vpop.f32.mrb[0].mxu0
        %v928 = vadd.f32 %v646, %v927
        %v929 = vpop.f32.mrb[0].mxu0
        %930 = vmatprep.mubr.f32.mxu0 0.0
        %v931 = vand.u32 %v295, 4294901760
        %932 = vmatmul.mubr.f32.gmra.mrb[0].mxu0 %v931
        %v933 = vpop.f32.mrb[0].mxu0
        %v934 = vadd.f32 %v656, %v933
        %v935 = vpop.f32.mrb[0].mxu0
        %936 = vmatprep.mubr.f32.mxu0 0.0
        %v937 = vand.u32 %v298, 4294901760
        %938 = vmatmul.mubr.f32.gmra.mrb[0].mxu0 %v937
        %v939 = vpop.f32.mrb[0].mxu0
        %v940 = vadd.f32 %v666, %v939
        %v941 = vpop.f32.mrb[0].mxu0
        %942 = vmatprep.mubr.f32.mxu0 0.0
        %v943 = vand.u32 %v301, 4294901760
        %944 = vmatmul.mubr.f32.gmra.mrb[0].mxu0 %v943
        %v945 = vpop.f32.mrb[0].mxu0
        %v946 = vadd.f32 %v676, %v945
        %v947 = vpop.f32.mrb[0].mxu0
        %948 = vmatprep.mubr.f32.mxu0 0.0
        %v949 = vand.u32 %v304, 4294901760
        %950 = vmatmul.mubr.f32.gmra.mrb[0].mxu0 %v949
        %v951 = vpop.f32.mrb[0].mxu0
        %v952 = vadd.f32 %v686, %v951
        %v953 = vpop.f32.mrb[0].mxu0
        %954 = vmatprep.mubr.f32.mxu0 0.0
        %v955 = vand.u32 %v307, 4294901760
        %956 = vmatmul.mubr.f32.gmra.mrb[0].mxu0 %v955
        %v957 = vpop.f32.mrb[0].mxu0
        %v958 = vadd.f32 %v696, %v957
        %v959 = vpop.f32.mrb[0].mxu0
        %960 = vdwg.mxu0
        %961 = vmatprep.subr.mxu0 0.0
        %v962 = vand.u32 %v311, 4294901760
        %v963 = vsub.f32 %v311, %v962
        %964 = vmatpush1.msra.mxu0 %v963
        %965 = vmatprep.subr.mxu0 0.0
        %966 = vmatpush1.msra.mxu0 0.0
        %967 = vmatprep.subr.mxu0 0.0
        %968 = vmatpush1.msra.mxu0 0.0
        %969 = vmatprep.subr.mxu0 0.0
        %970 = vmatpush1.msra.mxu0 0.0
        %971 = vmatprep.subr.mxu0 0.0
        %972 = vmatpush1.msra.mxu0 0.0
        %973 = vmatprep.subr.mxu0 0.0
        %974 = vmatpush1.msra.mxu0 0.0
        %975 = vmatprep.subr.mxu0 0.0
        %976 = vmatpush1.msra.mxu0 0.0
        %977 = vmatprep.subr.mxu0 0.0
        %978 = vmatpush1.msra.mxu0 0.0
        %979 = vmatprep.subr.mxu0 0.0
        %980 = vmatpush1.msra.mxu0 0.0
        %981 = vmatprep.subr.mxu0 0.0
        %982 = vmatpush1.msra.mxu0 0.0
        %983 = vmatprep.subr.mxu0 0.0
        %984 = vmatpush1.msra.mxu0 0.0
        %985 = vmatprep.subr.mxu0 0.0
        %986 = vmatpush1.msra.mxu0 0.0
        %987 = vmatprep.subr.mxu0 0.0
        %988 = vmatpush1.msra.mxu0 0.0
        %989 = vmatprep.subr.mxu0 0.0
        %990 = vmatpush1.msra.mxu0 0.0
        %991 = vmatprep.subr.mxu0 0.0
        %992 = vmatpush1.msra.mxu0 0.0
        %993 = vmatprep.subr.mxu0 0.0
        %994 = vmatpush1.msra.mxu0 0.0
        %995 = vmatprep.subr.mxu0 0.0
        %996 = vmatpush1.msra.mxu0 0.0
        %997 = vmatprep.subr.mxu0 0.0
        %998 = vmatpush1.msra.mxu0 0.0
        %999 = vmatprep.subr.mxu0 0.0
        %1000 = vmatpush1.msra.mxu0 0.0
        %1001 = vmatprep.subr.mxu0 0.0
        %1002 = vmatpush1.msra.mxu0 0.0
        %1003 = vmatprep.subr.mxu0 0.0
        %1004 = vmatpush1.msra.mxu0 0.0
        %1005 = vmatprep.subr.mxu0 0.0
        %1006 = vmatpush1.msra.mxu0 0.0
        %1007 = vmatprep.subr.mxu0 0.0
        %1008 = vmatpush1.msra.mxu0 0.0
        %1009 = vmatprep.subr.mxu0 0.0
        %1010 = vmatpush1.msra.mxu0 0.0
        %1011 = vmatprep.subr.mxu0 0.0
        %1012 = vmatpush1.msra.mxu0 0.0
        %1013 = vmatprep.subr.mxu0 0.0
        %1014 = vmatpush1.msra.mxu0 0.0
        %1015 = vmatprep.subr.mxu0 0.0
        %1016 = vmatpush1.msra.mxu0 0.0
        %1017 = vmatprep.subr.mxu0 0.0
        %1018 = vmatpush1.msra.mxu0 0.0
        %1019 = vmatprep.subr.mxu0 0.0
        %1020 = vmatpush1.msra.mxu0 0.0
        %1021 = vmatprep.subr.mxu0 0.0
        %1022 = vmatpush1.msra.mxu0 0.0
        %1023 = vmatprep.subr.mxu0 0.0
        %1024 = vmatpush1.msra.mxu0 0.0
        %1025 = vmatprep.subr.mxu0 0.0
        %1026 = vmatpush1.msra.mxu0 0.0
        %1027 = vmatprep.mubr.f32.mxu0 0.0
        %v1028 = vand.u32 %v214, 4294901760
        %v1029 = vsub.f32 %v214, %v1028
        %1030 = vmatmul.mubr.f32.gmra.mrb[0].mxu0 %v1029
        %v1031 = vpop.f32.mrb[0].mxu0
        %v1032 = vadd.f32 %v772, %v1031
        %v1033 = vpop.f32.mrb[0].mxu0
        %1034 = vmatprep.mubr.f32.mxu0 0.0
        %v1035 = vand.u32 %v217, 4294901760
        %v1036 = vsub.f32 %v217, %v1035
        %1037 = vmatmul.mubr.f32.gmra.mrb[0].mxu0 %v1036
        %v1038 = vpop.f32.mrb[0].mxu0
        %v1039 = vadd.f32 %v778, %v1038
        %v1040 = vpop.f32.mrb[0].mxu0
        %1041 = vmatprep.mubr.f32.mxu0 0.0
        %v1042 = vand.u32 %v220, 4294901760
        %v1043 = vsub.f32 %v220, %v1042
        %1044 = vmatmul.mubr.f32.gmra.mrb[0].mxu0 %v1043
        %v1045 = vpop.f32.mrb[0].mxu0
        %v1046 = vadd.f32 %v784, %v1045
        %v1047 = vpop.f32.mrb[0].mxu0
        %1048 = vmatprep.mubr.f32.mxu0 0.0
        %v1049 = vand.u32 %v223, 4294901760
        %v1050 = vsub.f32 %v223, %v1049
        %1051 = vmatmul.mubr.f32.gmra.mrb[0].mxu0 %v1050
        %v1052 = vpop.f32.mrb[0].mxu0
        %v1053 = vadd.f32 %v790, %v1052
        %v1054 = vpop.f32.mrb[0].mxu0
        %1055 = vmatprep.mubr.f32.mxu0 0.0
        %v1056 = vand.u32 %v226, 4294901760
        %v1057 = vsub.f32 %v226, %v1056
        %1058 = vmatmul.mubr.f32.gmra.mrb[0].mxu0 %v1057
        %v1059 = vpop.f32.mrb[0].mxu0
        %v1060 = vadd.f32 %v796, %v1059
        %v1061 = vpop.f32.mrb[0].mxu0
        %1062 = vmatprep.mubr.f32.mxu0 0.0
        %v1063 = vand.u32 %v229, 4294901760
        %v1064 = vsub.f32 %v229, %v1063
        %1065 = vmatmul.mubr.f32.gmra.mrb[0].mxu0 %v1064
        %v1066 = vpop.f32.mrb[0].mxu0
        %v1067 = vadd.f32 %v802, %v1066
        %v1068 = vpop.f32.mrb[0].mxu0
        %1069 = vmatprep.mubr.f32.mxu0 0.0
        %v1070 = vand.u32 %v232, 4294901760
        %v1071 = vsub.f32 %v232, %v1070
        %1072 = vmatmul.mubr.f32.gmra.mrb[0].mxu0 %v1071
        %v1073 = vpop.f32.mrb[0].mxu0
        %v1074 = vadd.f32 %v808, %v1073
        %v1075 = vpop.f32.mrb[0].mxu0
        %1076 = vmatprep.mubr.f32.mxu0 0.0
        %v1077 = vand.u32 %v235, 4294901760
        %v1078 = vsub.f32 %v235, %v1077
        %1079 = vmatmul.mubr.f32.gmra.mrb[0].mxu0 %v1078
        %v1080 = vpop.f32.mrb[0].mxu0
        %v1081 = vadd.f32 %v814, %v1080
        %v1082 = vpop.f32.mrb[0].mxu0
        %1083 = vmatprep.mubr.f32.mxu0 0.0
        %v1084 = vand.u32 %v238, 4294901760
        %v1085 = vsub.f32 %v238, %v1084
        %1086 = vmatmul.mubr.f32.gmra.mrb[0].mxu0 %v1085
        %v1087 = vpop.f32.mrb[0].mxu0
        %v1088 = vadd.f32 %v820, %v1087
        %v1089 = vpop.f32.mrb[0].mxu0
        %1090 = vmatprep.mubr.f32.mxu0 0.0
        %v1091 = vand.u32 %v241, 4294901760
        %v1092 = vsub.f32 %v241, %v1091
        %1093 = vmatmul.mubr.f32.gmra.mrb[0].mxu0 %v1092
        %v1094 = vpop.f32.mrb[0].mxu0
        %v1095 = vadd.f32 %v826, %v1094
        %v1096 = vpop.f32.mrb[0].mxu0
        %1097 = vmatprep.mubr.f32.mxu0 0.0
        %v1098 = vand.u32 %v244, 4294901760
        %v1099 = vsub.f32 %v244, %v1098
        %1100 = vmatmul.mubr.f32.gmra.mrb[0].mxu0 %v1099
        %v1101 = vpop.f32.mrb[0].mxu0
        %v1102 = vadd.f32 %v832, %v1101
        %v1103 = vpop.f32.mrb[0].mxu0
        %1104 = vmatprep.mubr.f32.mxu0 0.0
        %v1105 = vand.u32 %v247, 4294901760
        %v1106 = vsub.f32 %v247, %v1105
        %1107 = vmatmul.mubr.f32.gmra.mrb[0].mxu0 %v1106
        %v1108 = vpop.f32.mrb[0].mxu0
        %v1109 = vadd.f32 %v838, %v1108
        %v1110 = vpop.f32.mrb[0].mxu0
        %1111 = vmatprep.mubr.f32.mxu0 0.0
        %v1112 = vand.u32 %v250, 4294901760
        %v1113 = vsub.f32 %v250, %v1112
        %1114 = vmatmul.mubr.f32.gmra.mrb[0].mxu0 %v1113
        %v1115 = vpop.f32.mrb[0].mxu0
        %v1116 = vadd.f32 %v844, %v1115
        %v1117 = vpop.f32.mrb[0].mxu0
        %1118 = vmatprep.mubr.f32.mxu0 0.0
        %v1119 = vand.u32 %v253, 4294901760
        %v1120 = vsub.f32 %v253, %v1119
        %1121 = vmatmul.mubr.f32.gmra.mrb[0].mxu0 %v1120
        %v1122 = vpop.f32.mrb[0].mxu0
        %v1123 = vadd.f32 %v850, %v1122
        %v1124 = vpop.f32.mrb[0].mxu0
        %1125 = vmatprep.mubr.f32.mxu0 0.0
        %v1126 = vand.u32 %v256, 4294901760
        %v1127 = vsub.f32 %v256, %v1126
        %1128 = vmatmul.mubr.f32.gmra.mrb[0].mxu0 %v1127
        %v1129 = vpop.f32.mrb[0].mxu0
        %v1130 = vadd.f32 %v856, %v1129
        %v1131 = vpop.f32.mrb[0].mxu0
        %1132 = vmatprep.mubr.f32.mxu0 0.0
        %v1133 = vand.u32 %v259, 4294901760
        %v1134 = vsub.f32 %v259, %v1133
        %1135 = vmatmul.mubr.f32.gmra.mrb[0].mxu0 %v1134
        %v1136 = vpop.f32.mrb[0].mxu0
        %v1137 = vadd.f32 %v862, %v1136
        %v1138 = vpop.f32.mrb[0].mxu0
        %1139 = vmatprep.mubr.f32.mxu0 0.0
        %v1140 = vand.u32 %v262, 4294901760
        %v1141 = vsub.f32 %v262, %v1140
        %1142 = vmatmul.mubr.f32.gmra.mrb[0].mxu0 %v1141
        %v1143 = vpop.f32.mrb[0].mxu0
        %v1144 = vadd.f32 %v868, %v1143
        %v1145 = vpop.f32.mrb[0].mxu0
        %1146 = vmatprep.mubr.f32.mxu0 0.0
        %v1147 = vand.u32 %v265, 4294901760
        %v1148 = vsub.f32 %v265, %v1147
        %1149 = vmatmul.mubr.f32.gmra.mrb[0].mxu0 %v1148
        %v1150 = vpop.f32.mrb[0].mxu0
        %v1151 = vadd.f32 %v874, %v1150
        %v1152 = vpop.f32.mrb[0].mxu0
        %1153 = vmatprep.mubr.f32.mxu0 0.0
        %v1154 = vand.u32 %v268, 4294901760
        %v1155 = vsub.f32 %v268, %v1154
        %1156 = vmatmul.mubr.f32.gmra.mrb[0].mxu0 %v1155
        %v1157 = vpop.f32.mrb[0].mxu0
        %v1158 = vadd.f32 %v880, %v1157
        %v1159 = vpop.f32.mrb[0].mxu0
        %1160 = vmatprep.mubr.f32.mxu0 0.0
        %v1161 = vand.u32 %v271, 4294901760
        %v1162 = vsub.f32 %v271, %v1161
        %1163 = vmatmul.mubr.f32.gmra.mrb[0].mxu0 %v1162
        %v1164 = vpop.f32.mrb[0].mxu0
        %v1165 = vadd.f32 %v886, %v1164
        %v1166 = vpop.f32.mrb[0].mxu0
        %1167 = vmatprep.mubr.f32.mxu0 0.0
        %v1168 = vand.u32 %v274, 4294901760
        %v1169 = vsub.f32 %v274, %v1168
        %1170 = vmatmul.mubr.f32.gmra.mrb[0].mxu0 %v1169
        %v1171 = vpop.f32.mrb[0].mxu0
        %v1172 = vadd.f32 %v892, %v1171
        %v1173 = vpop.f32.mrb[0].mxu0
        %1174 = vmatprep.mubr.f32.mxu0 0.0
        %v1175 = vand.u32 %v277, 4294901760
        %v1176 = vsub.f32 %v277, %v1175
        %1177 = vmatmul.mubr.f32.gmra.mrb[0].mxu0 %v1176
        %v1178 = vpop.f32.mrb[0].mxu0
        %v1179 = vadd.f32 %v898, %v1178
        %v1180 = vpop.f32.mrb[0].mxu0
        %1181 = vmatprep.mubr.f32.mxu0 0.0
        %v1182 = vand.u32 %v280, 4294901760
        %v1183 = vsub.f32 %v280, %v1182
        %1184 = vmatmul.mubr.f32.gmra.mrb[0].mxu0 %v1183
        %v1185 = vpop.f32.mrb[0].mxu0
        %v1186 = vadd.f32 %v904, %v1185
        %v1187 = vpop.f32.mrb[0].mxu0
        %1188 = vmatprep.mubr.f32.mxu0 0.0
        %v1189 = vand.u32 %v283, 4294901760
        %v1190 = vsub.f32 %v283, %v1189
        %1191 = vmatmul.mubr.f32.gmra.mrb[0].mxu0 %v1190
        %v1192 = vpop.f32.mrb[0].mxu0
        %v1193 = vadd.f32 %v910, %v1192
        %v1194 = vpop.f32.mrb[0].mxu0
        %1195 = vmatprep.mubr.f32.mxu0 0.0
        %v1196 = vand.u32 %v286, 4294901760
        %v1197 = vsub.f32 %v286, %v1196
        %1198 = vmatmul.mubr.f32.gmra.mrb[0].mxu0 %v1197
        %v1199 = vpop.f32.mrb[0].mxu0
        %v1200 = vadd.f32 %v916, %v1199
        %v1201 = vpop.f32.mrb[0].mxu0
        %1202 = vmatprep.mubr.f32.mxu0 0.0
        %v1203 = vand.u32 %v289, 4294901760
        %v1204 = vsub.f32 %v289, %v1203
        %1205 = vmatmul.mubr.f32.gmra.mrb[0].mxu0 %v1204
        %v1206 = vpop.f32.mrb[0].mxu0
        %v1207 = vadd.f32 %v922, %v1206
        %v1208 = vpop.f32.mrb[0].mxu0
        %1209 = vmatprep.mubr.f32.mxu0 0.0
        %v1210 = vand.u32 %v292, 4294901760
        %v1211 = vsub.f32 %v292, %v1210
        %1212 = vmatmul.mubr.f32.gmra.mrb[0].mxu0 %v1211
        %v1213 = vpop.f32.mrb[0].mxu0
        %v1214 = vadd.f32 %v928, %v1213
        %v1215 = vpop.f32.mrb[0].mxu0
        %1216 = vmatprep.mubr.f32.mxu0 0.0
        %v1217 = vand.u32 %v295, 4294901760
        %v1218 = vsub.f32 %v295, %v1217
        %1219 = vmatmul.mubr.f32.gmra.mrb[0].mxu0 %v1218
        %v1220 = vpop.f32.mrb[0].mxu0
        %v1221 = vadd.f32 %v934, %v1220
        %v1222 = vpop.f32.mrb[0].mxu0
        %1223 = vmatprep.mubr.f32.mxu0 0.0
        %v1224 = vand.u32 %v298, 4294901760
        %v1225 = vsub.f32 %v298, %v1224
        %1226 = vmatmul.mubr.f32.gmra.mrb[0].mxu0 %v1225
        %v1227 = vpop.f32.mrb[0].mxu0
        %v1228 = vadd.f32 %v940, %v1227
        %v1229 = vpop.f32.mrb[0].mxu0
        %1230 = vmatprep.mubr.f32.mxu0 0.0
        %v1231 = vand.u32 %v301, 4294901760
        %v1232 = vsub.f32 %v301, %v1231
        %1233 = vmatmul.mubr.f32.gmra.mrb[0].mxu0 %v1232
        %v1234 = vpop.f32.mrb[0].mxu0
        %v1235 = vadd.f32 %v946, %v1234
        %v1236 = vpop.f32.mrb[0].mxu0
        %1237 = vmatprep.mubr.f32.mxu0 0.0
        %v1238 = vand.u32 %v304, 4294901760
        %v1239 = vsub.f32 %v304, %v1238
        %1240 = vmatmul.mubr.f32.gmra.mrb[0].mxu0 %v1239
        %v1241 = vpop.f32.mrb[0].mxu0
        %v1242 = vadd.f32 %v952, %v1241
        %v1243 = vpop.f32.mrb[0].mxu0
        %1244 = vmatprep.mubr.f32.mxu0 0.0
        %v1245 = vand.u32 %v307, 4294901760
        %v1246 = vsub.f32 %v307, %v1245
        %1247 = vmatmul.mubr.f32.gmra.mrb[0].mxu0 %v1246
        %v1248 = vpop.f32.mrb[0].mxu0
        %v1249 = vadd.f32 %v958, %v1248
        %v1250 = vpop.f32.mrb[0].mxu0
        %1251 = vdwg.mxu0
        %1252 = vmatprep.subr.mxu0 0.0
        %v1253 = vand.u32 %v311, 4294901760
        %1254 = vmatpush1.msra.mxu0 %v1253
        %1255 = vmatprep.subr.mxu0 0.0
        %1256 = vmatpush1.msra.mxu0 0.0
        %1257 = vmatprep.subr.mxu0 0.0
        %1258 = vmatpush1.msra.mxu0 0.0
        %1259 = vmatprep.subr.mxu0 0.0
        %1260 = vmatpush1.msra.mxu0 0.0
        %1261 = vmatprep.subr.mxu0 0.0
        %1262 = vmatpush1.msra.mxu0 0.0
        %1263 = vmatprep.subr.mxu0 0.0
        %1264 = vmatpush1.msra.mxu0 0.0
        %1265 = vmatprep.subr.mxu0 0.0
        %1266 = vmatpush1.msra.mxu0 0.0
        %1267 = vmatprep.subr.mxu0 0.0
        %1268 = vmatpush1.msra.mxu0 0.0
        %1269 = vmatprep.subr.mxu0 0.0
        %1270 = vmatpush1.msra.mxu0 0.0
        %1271 = vmatprep.subr.mxu0 0.0
        %1272 = vmatpush1.msra.mxu0 0.0
        %1273 = vmatprep.subr.mxu0 0.0
        %1274 = vmatpush1.msra.mxu0 0.0
        %1275 = vmatprep.subr.mxu0 0.0
        %1276 = vmatpush1.msra.mxu0 0.0
        %1277 = vmatprep.subr.mxu0 0.0
        %1278 = vmatpush1.msra.mxu0 0.0
        %1279 = vmatprep.subr.mxu0 0.0
        %1280 = vmatpush1.msra.mxu0 0.0
        %1281 = vmatprep.subr.mxu0 0.0
        %1282 = vmatpush1.msra.mxu0 0.0
        %1283 = vmatprep.subr.mxu0 0.0
        %1284 = vmatpush1.msra.mxu0 0.0
        %1285 = vmatprep.subr.mxu0 0.0
        %1286 = vmatpush1.msra.mxu0 0.0
        %1287 = vmatprep.subr.mxu0 0.0
        %1288 = vmatpush1.msra.mxu0 0.0
        %1289 = vmatprep.subr.mxu0 0.0
        %1290 = vmatpush1.msra.mxu0 0.0
        %1291 = vmatprep.subr.mxu0 0.0
        %1292 = vmatpush1.msra.mxu0 0.0
        %1293 = vmatprep.subr.mxu0 0.0
        %1294 = vmatpush1.msra.mxu0 0.0
        %1295 = vmatprep.subr.mxu0 0.0
        %1296 = vmatpush1.msra.mxu0 0.0
        %1297 = vmatprep.subr.mxu0 0.0
        %1298 = vmatpush1.msra.mxu0 0.0
        %1299 = vmatprep.subr.mxu0 0.0
        %1300 = vmatpush1.msra.mxu0 0.0
        %1301 = vmatprep.subr.mxu0 0.0
        %1302 = vmatpush1.msra.mxu0 0.0
        %1303 = vmatprep.subr.mxu0 0.0
        %1304 = vmatpush1.msra.mxu0 0.0
        %1305 = vmatprep.subr.mxu0 0.0
        %1306 = vmatpush1.msra.mxu0 0.0
        %1307 = vmatprep.subr.mxu0 0.0
        %1308 = vmatpush1.msra.mxu0 0.0
        %1309 = vmatprep.subr.mxu0 0.0
        %1310 = vmatpush1.msra.mxu0 0.0
        %1311 = vmatprep.subr.mxu0 0.0
        %1312 = vmatpush1.msra.mxu0 0.0
        %1313 = vmatprep.subr.mxu0 0.0
        %1314 = vmatpush1.msra.mxu0 0.0
        %1315 = vmatprep.subr.mxu0 0.0
        %1316 = vmatpush1.msra.mxu0 0.0
        %1317 = vmatprep.mubr.f32.mxu0 0.0
        %v1318 = vand.u32 %v214, 4294901760
        %v1319 = vsub.f32 %v214, %v1318
        %v1320 = vand.u32 %v1319, 4294901760
        %1321 = vmatmul.mubr.f32.gmra.mrb[0].mxu0 %v1320
        %v1322 = vpop.f32.mrb[0].mxu0
        %v1323 = vadd.f32 %v1032, %v1322
        %v1324 = vpop.f32.mrb[0].mxu0
        %1325 = vmatprep.mubr.f32.mxu0 0.0
        %v1326 = vand.u32 %v217, 4294901760
        %v1327 = vsub.f32 %v217, %v1326
        %v1328 = vand.u32 %v1327, 4294901760
        %1329 = vmatmul.mubr.f32.gmra.mrb[0].mxu0 %v1328
        %v1330 = vpop.f32.mrb[0].mxu0
        %v1331 = vadd.f32 %v1039, %v1330
        %v1332 = vpop.f32.mrb[0].mxu0
        %1333 = vmatprep.mubr.f32.mxu0 0.0
        %v1334 = vand.u32 %v220, 4294901760
        %v1335 = vsub.f32 %v220, %v1334
        %v1336 = vand.u32 %v1335, 4294901760
        %1337 = vmatmul.mubr.f32.gmra.mrb[0].mxu0 %v1336
        %v1338 = vpop.f32.mrb[0].mxu0
        %v1339 = vadd.f32 %v1046, %v1338
        %v1340 = vpop.f32.mrb[0].mxu0
        %1341 = vmatprep.mubr.f32.mxu0 0.0
        %v1342 = vand.u32 %v223, 4294901760
        %v1343 = vsub.f32 %v223, %v1342
        %v1344 = vand.u32 %v1343, 4294901760
        %1345 = vmatmul.mubr.f32.gmra.mrb[0].mxu0 %v1344
        %v1346 = vpop.f32.mrb[0].mxu0
        %v1347 = vadd.f32 %v1053, %v1346
        %v1348 = vpop.f32.mrb[0].mxu0
        %1349 = vmatprep.mubr.f32.mxu0 0.0
        %v1350 = vand.u32 %v226, 4294901760
        %v1351 = vsub.f32 %v226, %v1350
        %v1352 = vand.u32 %v1351, 4294901760
        %1353 = vmatmul.mubr.f32.gmra.mrb[0].mxu0 %v1352
        %v1354 = vpop.f32.mrb[0].mxu0
        %v1355 = vadd.f32 %v1060, %v1354
        %v1356 = vpop.f32.mrb[0].mxu0
        %1357 = vmatprep.mubr.f32.mxu0 0.0
        %v1358 = vand.u32 %v229, 4294901760
        %v1359 = vsub.f32 %v229, %v1358
        %v1360 = vand.u32 %v1359, 4294901760
        %1361 = vmatmul.mubr.f32.gmra.mrb[0].mxu0 %v1360
        %v1362 = vpop.f32.mrb[0].mxu0
        %v1363 = vadd.f32 %v1067, %v1362
        %v1364 = vpop.f32.mrb[0].mxu0
        %1365 = vmatprep.mubr.f32.mxu0 0.0
        %v1366 = vand.u32 %v232, 4294901760
        %v1367 = vsub.f32 %v232, %v1366
        %v1368 = vand.u32 %v1367, 4294901760
        %1369 = vmatmul.mubr.f32.gmra.mrb[0].mxu0 %v1368
        %v1370 = vpop.f32.mrb[0].mxu0
        %v1371 = vadd.f32 %v1074, %v1370
        %v1372 = vpop.f32.mrb[0].mxu0
        %1373 = vmatprep.mubr.f32.mxu0 0.0
        %v1374 = vand.u32 %v235, 4294901760
        %v1375 = vsub.f32 %v235, %v1374
        %v1376 = vand.u32 %v1375, 4294901760
        %1377 = vmatmul.mubr.f32.gmra.mrb[0].mxu0 %v1376
        %v1378 = vpop.f32.mrb[0].mxu0
        %v1379 = vadd.f32 %v1081, %v1378
        %v1380 = vpop.f32.mrb[0].mxu0
        %1381 = vmatprep.mubr.f32.mxu0 0.0
        %v1382 = vand.u32 %v238, 4294901760
        %v1383 = vsub.f32 %v238, %v1382
        %v1384 = vand.u32 %v1383, 4294901760
        %1385 = vmatmul.mubr.f32.gmra.mrb[0].mxu0 %v1384
        %v1386 = vpop.f32.mrb[0].mxu0
        %v1387 = vadd.f32 %v1088, %v1386
        %v1388 = vpop.f32.mrb[0].mxu0
        %1389 = vmatprep.mubr.f32.mxu0 0.0
        %v1390 = vand.u32 %v241, 4294901760
        %v1391 = vsub.f32 %v241, %v1390
        %v1392 = vand.u32 %v1391, 4294901760
        %1393 = vmatmul.mubr.f32.gmra.mrb[0].mxu0 %v1392
        %v1394 = vpop.f32.mrb[0].mxu0
        %v1395 = vadd.f32 %v1095, %v1394
        %v1396 = vpop.f32.mrb[0].mxu0
        %1397 = vmatprep.mubr.f32.mxu0 0.0
        %v1398 = vand.u32 %v244, 4294901760
        %v1399 = vsub.f32 %v244, %v1398
        %v1400 = vand.u32 %v1399, 4294901760
        %1401 = vmatmul.mubr.f32.gmra.mrb[0].mxu0 %v1400
        %v1402 = vpop.f32.mrb[0].mxu0
        %v1403 = vadd.f32 %v1102, %v1402
        %v1404 = vpop.f32.mrb[0].mxu0
        %1405 = vmatprep.mubr.f32.mxu0 0.0
        %v1406 = vand.u32 %v247, 4294901760
        %v1407 = vsub.f32 %v247, %v1406
        %v1408 = vand.u32 %v1407, 4294901760
        %1409 = vmatmul.mubr.f32.gmra.mrb[0].mxu0 %v1408
        %v1410 = vpop.f32.mrb[0].mxu0
        %v1411 = vadd.f32 %v1109, %v1410
        %v1412 = vpop.f32.mrb[0].mxu0
        %1413 = vmatprep.mubr.f32.mxu0 0.0
        %v1414 = vand.u32 %v250, 4294901760
        %v1415 = vsub.f32 %v250, %v1414
        %v1416 = vand.u32 %v1415, 4294901760
        %1417 = vmatmul.mubr.f32.gmra.mrb[0].mxu0 %v1416
        %v1418 = vpop.f32.mrb[0].mxu0
        %v1419 = vadd.f32 %v1116, %v1418
        %v1420 = vpop.f32.mrb[0].mxu0
        %1421 = vmatprep.mubr.f32.mxu0 0.0
        %v1422 = vand.u32 %v253, 4294901760
        %v1423 = vsub.f32 %v253, %v1422
        %v1424 = vand.u32 %v1423, 4294901760
        %1425 = vmatmul.mubr.f32.gmra.mrb[0].mxu0 %v1424
        %v1426 = vpop.f32.mrb[0].mxu0
        %v1427 = vadd.f32 %v1123, %v1426
        %v1428 = vpop.f32.mrb[0].mxu0
        %1429 = vmatprep.mubr.f32.mxu0 0.0
        %v1430 = vand.u32 %v256, 4294901760
        %v1431 = vsub.f32 %v256, %v1430
        %v1432 = vand.u32 %v1431, 4294901760
        %1433 = vmatmul.mubr.f32.gmra.mrb[0].mxu0 %v1432
        %v1434 = vpop.f32.mrb[0].mxu0
        %v1435 = vadd.f32 %v1130, %v1434
        %v1436 = vpop.f32.mrb[0].mxu0
        %1437 = vmatprep.mubr.f32.mxu0 0.0
        %v1438 = vand.u32 %v259, 4294901760
        %v1439 = vsub.f32 %v259, %v1438
        %v1440 = vand.u32 %v1439, 4294901760
        %1441 = vmatmul.mubr.f32.gmra.mrb[0].mxu0 %v1440
        %v1442 = vpop.f32.mrb[0].mxu0
        %v1443 = vadd.f32 %v1137, %v1442
        %v1444 = vpop.f32.mrb[0].mxu0
        %1445 = vmatprep.mubr.f32.mxu0 0.0
        %v1446 = vand.u32 %v262, 4294901760
        %v1447 = vsub.f32 %v262, %v1446
        %v1448 = vand.u32 %v1447, 4294901760
        %1449 = vmatmul.mubr.f32.gmra.mrb[0].mxu0 %v1448
        %v1450 = vpop.f32.mrb[0].mxu0
        %v1451 = vadd.f32 %v1144, %v1450
        %v1452 = vpop.f32.mrb[0].mxu0
        %1453 = vmatprep.mubr.f32.mxu0 0.0
        %v1454 = vand.u32 %v265, 4294901760
        %v1455 = vsub.f32 %v265, %v1454
        %v1456 = vand.u32 %v1455, 4294901760
        %1457 = vmatmul.mubr.f32.gmra.mrb[0].mxu0 %v1456
        %v1458 = vpop.f32.mrb[0].mxu0
        %v1459 = vadd.f32 %v1151, %v1458
        %v1460 = vpop.f32.mrb[0].mxu0
        %1461 = vmatprep.mubr.f32.mxu0 0.0
        %v1462 = vand.u32 %v268, 4294901760
        %v1463 = vsub.f32 %v268, %v1462
        %v1464 = vand.u32 %v1463, 4294901760
        %1465 = vmatmul.mubr.f32.gmra.mrb[0].mxu0 %v1464
        %v1466 = vpop.f32.mrb[0].mxu0
        %v1467 = vadd.f32 %v1158, %v1466
        %v1468 = vpop.f32.mrb[0].mxu0
        %1469 = vmatprep.mubr.f32.mxu0 0.0
        %v1470 = vand.u32 %v271, 4294901760
        %v1471 = vsub.f32 %v271, %v1470
        %v1472 = vand.u32 %v1471, 4294901760
        %1473 = vmatmul.mubr.f32.gmra.mrb[0].mxu0 %v1472
        %v1474 = vpop.f32.mrb[0].mxu0
        %v1475 = vadd.f32 %v1165, %v1474
        %v1476 = vpop.f32.mrb[0].mxu0
        %1477 = vmatprep.mubr.f32.mxu0 0.0
        %v1478 = vand.u32 %v274, 4294901760
        %v1479 = vsub.f32 %v274, %v1478
        %v1480 = vand.u32 %v1479, 4294901760
        %1481 = vmatmul.mubr.f32.gmra.mrb[0].mxu0 %v1480
        %v1482 = vpop.f32.mrb[0].mxu0
        %v1483 = vadd.f32 %v1172, %v1482
        %v1484 = vpop.f32.mrb[0].mxu0
        %1485 = vmatprep.mubr.f32.mxu0 0.0
        %v1486 = vand.u32 %v277, 4294901760
        %v1487 = vsub.f32 %v277, %v1486
        %v1488 = vand.u32 %v1487, 4294901760
        %1489 = vmatmul.mubr.f32.gmra.mrb[0].mxu0 %v1488
        %v1490 = vpop.f32.mrb[0].mxu0
        %v1491 = vadd.f32 %v1179, %v1490
        %v1492 = vpop.f32.mrb[0].mxu0
        %1493 = vmatprep.mubr.f32.mxu0 0.0
        %v1494 = vand.u32 %v280, 4294901760
        %v1495 = vsub.f32 %v280, %v1494
        %v1496 = vand.u32 %v1495, 4294901760
        %1497 = vmatmul.mubr.f32.gmra.mrb[0].mxu0 %v1496
        %v1498 = vpop.f32.mrb[0].mxu0
        %v1499 = vadd.f32 %v1186, %v1498
        %v1500 = vpop.f32.mrb[0].mxu0
        %1501 = vmatprep.mubr.f32.mxu0 0.0
        %v1502 = vand.u32 %v283, 4294901760
        %v1503 = vsub.f32 %v283, %v1502
        %v1504 = vand.u32 %v1503, 4294901760
        %1505 = vmatmul.mubr.f32.gmra.mrb[0].mxu0 %v1504
        %v1506 = vpop.f32.mrb[0].mxu0
        %v1507 = vadd.f32 %v1193, %v1506
        %v1508 = vpop.f32.mrb[0].mxu0
        %1509 = vmatprep.mubr.f32.mxu0 0.0
        %v1510 = vand.u32 %v286, 4294901760
        %v1511 = vsub.f32 %v286, %v1510
        %v1512 = vand.u32 %v1511, 4294901760
        %1513 = vmatmul.mubr.f32.gmra.mrb[0].mxu0 %v1512
        %v1514 = vpop.f32.mrb[0].mxu0
        %v1515 = vadd.f32 %v1200, %v1514
        %v1516 = vpop.f32.mrb[0].mxu0
        %1517 = vmatprep.mubr.f32.mxu0 0.0
        %v1518 = vand.u32 %v289, 4294901760
        %v1519 = vsub.f32 %v289, %v1518
        %v1520 = vand.u32 %v1519, 4294901760
        %1521 = vmatmul.mubr.f32.gmra.mrb[0].mxu0 %v1520
        %v1522 = vpop.f32.mrb[0].mxu0
        %v1523 = vadd.f32 %v1207, %v1522
        %v1524 = vpop.f32.mrb[0].mxu0
        %1525 = vmatprep.mubr.f32.mxu0 0.0
        %v1526 = vand.u32 %v292, 4294901760
        %v1527 = vsub.f32 %v292, %v1526
        %v1528 = vand.u32 %v1527, 4294901760
        %1529 = vmatmul.mubr.f32.gmra.mrb[0].mxu0 %v1528
        %v1530 = vpop.f32.mrb[0].mxu0
        %v1531 = vadd.f32 %v1214, %v1530
        %v1532 = vpop.f32.mrb[0].mxu0
        %1533 = vmatprep.mubr.f32.mxu0 0.0
        %v1534 = vand.u32 %v295, 4294901760
        %v1535 = vsub.f32 %v295, %v1534
        %v1536 = vand.u32 %v1535, 4294901760
        %1537 = vmatmul.mubr.f32.gmra.mrb[0].mxu0 %v1536
        %v1538 = vpop.f32.mrb[0].mxu0
        %v1539 = vadd.f32 %v1221, %v1538
        %v1540 = vpop.f32.mrb[0].mxu0
        %1541 = vmatprep.mubr.f32.mxu0 0.0
        %v1542 = vand.u32 %v298, 4294901760
        %v1543 = vsub.f32 %v298, %v1542
        %v1544 = vand.u32 %v1543, 4294901760
        %1545 = vmatmul.mubr.f32.gmra.mrb[0].mxu0 %v1544
        %v1546 = vpop.f32.mrb[0].mxu0
        %v1547 = vadd.f32 %v1228, %v1546
        %v1548 = vpop.f32.mrb[0].mxu0
        %1549 = vmatprep.mubr.f32.mxu0 0.0
        %v1550 = vand.u32 %v301, 4294901760
        %v1551 = vsub.f32 %v301, %v1550
        %v1552 = vand.u32 %v1551, 4294901760
        %1553 = vmatmul.mubr.f32.gmra.mrb[0].mxu0 %v1552
        %v1554 = vpop.f32.mrb[0].mxu0
        %v1555 = vadd.f32 %v1235, %v1554
        %v1556 = vpop.f32.mrb[0].mxu0
        %1557 = vmatprep.mubr.f32.mxu0 0.0
        %v1558 = vand.u32 %v304, 4294901760
        %v1559 = vsub.f32 %v304, %v1558
        %v1560 = vand.u32 %v1559, 4294901760
        %1561 = vmatmul.mubr.f32.gmra.mrb[0].mxu0 %v1560
        %v1562 = vpop.f32.mrb[0].mxu0
        %v1563 = vadd.f32 %v1242, %v1562
        %v1564 = vpop.f32.mrb[0].mxu0
        %1565 = vmatprep.mubr.f32.mxu0 0.0
        %v1566 = vand.u32 %v307, 4294901760
        %v1567 = vsub.f32 %v307, %v1566
        %v1568 = vand.u32 %v1567, 4294901760
        %1569 = vmatmul.mubr.f32.gmra.mrb[0].mxu0 %v1568
        %v1570 = vpop.f32.mrb[0].mxu0
        %v1571 = vadd.f32 %v1249, %v1570
        %v1572 = vpop.f32.mrb[0].mxu0
        %1573 = vdwg.mxu0
        %1574 = vmatprep.subr.mxu0 0.0
        %v1575 = vand.u32 %v311, 4294901760
        %v1576 = vsub.f32 %v311, %v1575
        %v1577 = vand.u32 %v1576, 4294901760
        %1578 = vmatpush1.msra.mxu0 %v1577
        %1579 = vmatprep.subr.mxu0 0.0
        %1580 = vmatpush1.msra.mxu0 0.0
        %1581 = vmatprep.subr.mxu0 0.0
        %1582 = vmatpush1.msra.mxu0 0.0
        %1583 = vmatprep.subr.mxu0 0.0
        %1584 = vmatpush1.msra.mxu0 0.0
        %1585 = vmatprep.subr.mxu0 0.0
        %1586 = vmatpush1.msra.mxu0 0.0
        %1587 = vmatprep.subr.mxu0 0.0
        %1588 = vmatpush1.msra.mxu0 0.0
        %1589 = vmatprep.subr.mxu0 0.0
        %1590 = vmatpush1.msra.mxu0 0.0
        %1591 = vmatprep.subr.mxu0 0.0
        %1592 = vmatpush1.msra.mxu0 0.0
        %1593 = vmatprep.subr.mxu0 0.0
        %1594 = vmatpush1.msra.mxu0 0.0
        %1595 = vmatprep.subr.mxu0 0.0
        %1596 = vmatpush1.msra.mxu0 0.0
        %1597 = vmatprep.subr.mxu0 0.0
        %1598 = vmatpush1.msra.mxu0 0.0
        %1599 = vmatprep.subr.mxu0 0.0
        %1600 = vmatpush1.msra.mxu0 0.0
        %1601 = vmatprep.subr.mxu0 0.0
        %1602 = vmatpush1.msra.mxu0 0.0
        %1603 = vmatprep.subr.mxu0 0.0
        %1604 = vmatpush1.msra.mxu0 0.0
        %1605 = vmatprep.subr.mxu0 0.0
        %1606 = vmatpush1.msra.mxu0 0.0
        %1607 = vmatprep.subr.mxu0 0.0
        %1608 = vmatpush1.msra.mxu0 0.0
        %1609 = vmatprep.subr.mxu0 0.0
        %1610 = vmatpush1.msra.mxu0 0.0
        %1611 = vmatprep.subr.mxu0 0.0
        %1612 = vmatpush1.msra.mxu0 0.0
        %1613 = vmatprep.subr.mxu0 0.0
        %1614 = vmatpush1.msra.mxu0 0.0
        %1615 = vmatprep.subr.mxu0 0.0
        %1616 = vmatpush1.msra.mxu0 0.0
        %1617 = vmatprep.subr.mxu0 0.0
        %1618 = vmatpush1.msra.mxu0 0.0
        %1619 = vmatprep.subr.mxu0 0.0
        %1620 = vmatpush1.msra.mxu0 0.0
        %1621 = vmatprep.subr.mxu0 0.0
        %1622 = vmatpush1.msra.mxu0 0.0
        %1623 = vmatprep.subr.mxu0 0.0
        %1624 = vmatpush1.msra.mxu0 0.0
        %1625 = vmatprep.subr.mxu0 0.0
        %1626 = vmatpush1.msra.mxu0 0.0
        %1627 = vmatprep.subr.mxu0 0.0
        %1628 = vmatpush1.msra.mxu0 0.0
        %1629 = vmatprep.subr.mxu0 0.0
        %1630 = vmatpush1.msra.mxu0 0.0
        %1631 = vmatprep.subr.mxu0 0.0
        %1632 = vmatpush1.msra.mxu0 0.0
        %1633 = vmatprep.subr.mxu0 0.0
        %1634 = vmatpush1.msra.mxu0 0.0
        %1635 = vmatprep.subr.mxu0 0.0
        %1636 = vmatpush1.msra.mxu0 0.0
        %1637 = vmatprep.subr.mxu0 0.0
        %1638 = vmatpush1.msra.mxu0 0.0
        %1639 = vmatprep.subr.mxu0 0.0
        %1640 = vmatpush1.msra.mxu0 0.0
        %1641 = vmatprep.mubr.f32.mxu0 0.0
        %v1642 = vand.u32 %v214, 4294901760
        %1643 = vmatmul.mubr.f32.gmra.mrb[0].mxu0 %v1642
        %v1644 = vpop.f32.mrb[0].mxu0
        %v1645 = vadd.f32 %v1323, %v1644
        %v1646 = vpop.f32.mrb[0].mxu0
        %1647 = vmatprep.mubr.f32.mxu0 0.0
        %v1648 = vand.u32 %v217, 4294901760
        %1649 = vmatmul.mubr.f32.gmra.mrb[0].mxu0 %v1648
        %v1650 = vpop.f32.mrb[0].mxu0
        %v1651 = vadd.f32 %v1331, %v1650
        %v1652 = vpop.f32.mrb[0].mxu0
        %1653 = vmatprep.mubr.f32.mxu0 0.0
        %v1654 = vand.u32 %v220, 4294901760
        %1655 = vmatmul.mubr.f32.gmra.mrb[0].mxu0 %v1654
        %v1656 = vpop.f32.mrb[0].mxu0
        %v1657 = vadd.f32 %v1339, %v1656
        %v1658 = vpop.f32.mrb[0].mxu0
        %1659 = vmatprep.mubr.f32.mxu0 0.0
        %v1660 = vand.u32 %v223, 4294901760
        %1661 = vmatmul.mubr.f32.gmra.mrb[0].mxu0 %v1660
        %v1662 = vpop.f32.mrb[0].mxu0
        %v1663 = vadd.f32 %v1347, %v1662
        %v1664 = vpop.f32.mrb[0].mxu0
        %1665 = vmatprep.mubr.f32.mxu0 0.0
        %v1666 = vand.u32 %v226, 4294901760
        %1667 = vmatmul.mubr.f32.gmra.mrb[0].mxu0 %v1666
        %v1668 = vpop.f32.mrb[0].mxu0
        %v1669 = vadd.f32 %v1355, %v1668
        %v1670 = vpop.f32.mrb[0].mxu0
        %1671 = vmatprep.mubr.f32.mxu0 0.0
        %v1672 = vand.u32 %v229, 4294901760
        %1673 = vmatmul.mubr.f32.gmra.mrb[0].mxu0 %v1672
        %v1674 = vpop.f32.mrb[0].mxu0
        %v1675 = vadd.f32 %v1363, %v1674
        %v1676 = vpop.f32.mrb[0].mxu0
        %1677 = vmatprep.mubr.f32.mxu0 0.0
        %v1678 = vand.u32 %v232, 4294901760
        %1679 = vmatmul.mubr.f32.gmra.mrb[0].mxu0 %v1678
        %v1680 = vpop.f32.mrb[0].mxu0
        %v1681 = vadd.f32 %v1371, %v1680
        %v1682 = vpop.f32.mrb[0].mxu0
        %1683 = vmatprep.mubr.f32.mxu0 0.0
        %v1684 = vand.u32 %v235, 4294901760
        %1685 = vmatmul.mubr.f32.gmra.mrb[0].mxu0 %v1684
        %v1686 = vpop.f32.mrb[0].mxu0
        %v1687 = vadd.f32 %v1379, %v1686
        %v1688 = vpop.f32.mrb[0].mxu0
        %1689 = vmatprep.mubr.f32.mxu0 0.0
        %v1690 = vand.u32 %v238, 4294901760
        %1691 = vmatmul.mubr.f32.gmra.mrb[0].mxu0 %v1690
        %v1692 = vpop.f32.mrb[0].mxu0
        %v1693 = vadd.f32 %v1387, %v1692
        %v1694 = vpop.f32.mrb[0].mxu0
        %1695 = vmatprep.mubr.f32.mxu0 0.0
        %v1696 = vand.u32 %v241, 4294901760
        %1697 = vmatmul.mubr.f32.gmra.mrb[0].mxu0 %v1696
        %v1698 = vpop.f32.mrb[0].mxu0
        %v1699 = vadd.f32 %v1395, %v1698
        %v1700 = vpop.f32.mrb[0].mxu0
        %1701 = vmatprep.mubr.f32.mxu0 0.0
        %v1702 = vand.u32 %v244, 4294901760
        %1703 = vmatmul.mubr.f32.gmra.mrb[0].mxu0 %v1702
        %v1704 = vpop.f32.mrb[0].mxu0
        %v1705 = vadd.f32 %v1403, %v1704
        %v1706 = vpop.f32.mrb[0].mxu0
        %1707 = vmatprep.mubr.f32.mxu0 0.0
        %v1708 = vand.u32 %v247, 4294901760
        %1709 = vmatmul.mubr.f32.gmra.mrb[0].mxu0 %v1708
        %v1710 = vpop.f32.mrb[0].mxu0
        %v1711 = vadd.f32 %v1411, %v1710
        %v1712 = vpop.f32.mrb[0].mxu0
        %1713 = vmatprep.mubr.f32.mxu0 0.0
        %v1714 = vand.u32 %v250, 4294901760
        %1715 = vmatmul.mubr.f32.gmra.mrb[0].mxu0 %v1714
        %v1716 = vpop.f32.mrb[0].mxu0
        %v1717 = vadd.f32 %v1419, %v1716
        %v1718 = vpop.f32.mrb[0].mxu0
        %1719 = vmatprep.mubr.f32.mxu0 0.0
        %v1720 = vand.u32 %v253, 4294901760
        %1721 = vmatmul.mubr.f32.gmra.mrb[0].mxu0 %v1720
        %v1722 = vpop.f32.mrb[0].mxu0
        %v1723 = vadd.f32 %v1427, %v1722
        %v1724 = vpop.f32.mrb[0].mxu0
        %1725 = vmatprep.mubr.f32.mxu0 0.0
        %v1726 = vand.u32 %v256, 4294901760
        %1727 = vmatmul.mubr.f32.gmra.mrb[0].mxu0 %v1726
        %v1728 = vpop.f32.mrb[0].mxu0
        %v1729 = vadd.f32 %v1435, %v1728
        %v1730 = vpop.f32.mrb[0].mxu0
        %1731 = vmatprep.mubr.f32.mxu0 0.0
        %v1732 = vand.u32 %v259, 4294901760
        %1733 = vmatmul.mubr.f32.gmra.mrb[0].mxu0 %v1732
        %v1734 = vpop.f32.mrb[0].mxu0
        %v1735 = vadd.f32 %v1443, %v1734
        %v1736 = vpop.f32.mrb[0].mxu0
        %1737 = vmatprep.mubr.f32.mxu0 0.0
        %v1738 = vand.u32 %v262, 4294901760
        %1739 = vmatmul.mubr.f32.gmra.mrb[0].mxu0 %v1738
        %v1740 = vpop.f32.mrb[0].mxu0
        %v1741 = vadd.f32 %v1451, %v1740
        %v1742 = vpop.f32.mrb[0].mxu0
        %1743 = vmatprep.mubr.f32.mxu0 0.0
        %v1744 = vand.u32 %v265, 4294901760
        %1745 = vmatmul.mubr.f32.gmra.mrb[0].mxu0 %v1744
        %v1746 = vpop.f32.mrb[0].mxu0
        %v1747 = vadd.f32 %v1459, %v1746
        %v1748 = vpop.f32.mrb[0].mxu0
        %1749 = vmatprep.mubr.f32.mxu0 0.0
        %v1750 = vand.u32 %v268, 4294901760
        %1751 = vmatmul.mubr.f32.gmra.mrb[0].mxu0 %v1750
        %v1752 = vpop.f32.mrb[0].mxu0
        %v1753 = vadd.f32 %v1467, %v1752
        %v1754 = vpop.f32.mrb[0].mxu0
        %1755 = vmatprep.mubr.f32.mxu0 0.0
        %v1756 = vand.u32 %v271, 4294901760
        %1757 = vmatmul.mubr.f32.gmra.mrb[0].mxu0 %v1756
        %v1758 = vpop.f32.mrb[0].mxu0
        %v1759 = vadd.f32 %v1475, %v1758
        %v1760 = vpop.f32.mrb[0].mxu0
        %1761 = vmatprep.mubr.f32.mxu0 0.0
        %v1762 = vand.u32 %v274, 4294901760
        %1763 = vmatmul.mubr.f32.gmra.mrb[0].mxu0 %v1762
        %v1764 = vpop.f32.mrb[0].mxu0
        %v1765 = vadd.f32 %v1483, %v1764
        %v1766 = vpop.f32.mrb[0].mxu0
        %1767 = vmatprep.mubr.f32.mxu0 0.0
        %v1768 = vand.u32 %v277, 4294901760
        %1769 = vmatmul.mubr.f32.gmra.mrb[0].mxu0 %v1768
        %v1770 = vpop.f32.mrb[0].mxu0
        %v1771 = vadd.f32 %v1491, %v1770
        %v1772 = vpop.f32.mrb[0].mxu0
        %1773 = vmatprep.mubr.f32.mxu0 0.0
        %v1774 = vand.u32 %v280, 4294901760
        %1775 = vmatmul.mubr.f32.gmra.mrb[0].mxu0 %v1774
        %v1776 = vpop.f32.mrb[0].mxu0
        %v1777 = vadd.f32 %v1499, %v1776
        %v1778 = vpop.f32.mrb[0].mxu0
        %1779 = vmatprep.mubr.f32.mxu0 0.0
        %v1780 = vand.u32 %v283, 4294901760
        %1781 = vmatmul.mubr.f32.gmra.mrb[0].mxu0 %v1780
        %v1782 = vpop.f32.mrb[0].mxu0
        %v1783 = vadd.f32 %v1507, %v1782
        %v1784 = vpop.f32.mrb[0].mxu0
        %1785 = vmatprep.mubr.f32.mxu0 0.0
        %v1786 = vand.u32 %v286, 4294901760
        %1787 = vmatmul.mubr.f32.gmra.mrb[0].mxu0 %v1786
        %v1788 = vpop.f32.mrb[0].mxu0
        %v1789 = vadd.f32 %v1515, %v1788
        %v1790 = vpop.f32.mrb[0].mxu0
        %1791 = vmatprep.mubr.f32.mxu0 0.0
        %v1792 = vand.u32 %v289, 4294901760
        %1793 = vmatmul.mubr.f32.gmra.mrb[0].mxu0 %v1792
        %v1794 = vpop.f32.mrb[0].mxu0
        %v1795 = vadd.f32 %v1523, %v1794
        %v1796 = vpop.f32.mrb[0].mxu0
        %1797 = vmatprep.mubr.f32.mxu0 0.0
        %v1798 = vand.u32 %v292, 4294901760
        %1799 = vmatmul.mubr.f32.gmra.mrb[0].mxu0 %v1798
        %v1800 = vpop.f32.mrb[0].mxu0
        %v1801 = vadd.f32 %v1531, %v1800
        %v1802 = vpop.f32.mrb[0].mxu0
        %1803 = vmatprep.mubr.f32.mxu0 0.0
        %v1804 = vand.u32 %v295, 4294901760
        %1805 = vmatmul.mubr.f32.gmra.mrb[0].mxu0 %v1804
        %v1806 = vpop.f32.mrb[0].mxu0
        %v1807 = vadd.f32 %v1539, %v1806
        %v1808 = vpop.f32.mrb[0].mxu0
        %1809 = vmatprep.mubr.f32.mxu0 0.0
        %v1810 = vand.u32 %v298, 4294901760
        %1811 = vmatmul.mubr.f32.gmra.mrb[0].mxu0 %v1810
        %v1812 = vpop.f32.mrb[0].mxu0
        %v1813 = vadd.f32 %v1547, %v1812
        %v1814 = vpop.f32.mrb[0].mxu0
        %1815 = vmatprep.mubr.f32.mxu0 0.0
        %v1816 = vand.u32 %v301, 4294901760
        %1817 = vmatmul.mubr.f32.gmra.mrb[0].mxu0 %v1816
        %v1818 = vpop.f32.mrb[0].mxu0
        %v1819 = vadd.f32 %v1555, %v1818
        %v1820 = vpop.f32.mrb[0].mxu0
        %1821 = vmatprep.mubr.f32.mxu0 0.0
        %v1822 = vand.u32 %v304, 4294901760
        %1823 = vmatmul.mubr.f32.gmra.mrb[0].mxu0 %v1822
        %v1824 = vpop.f32.mrb[0].mxu0
        %v1825 = vadd.f32 %v1563, %v1824
        %v1826 = vpop.f32.mrb[0].mxu0
        %1827 = vmatprep.mubr.f32.mxu0 0.0
        %v1828 = vand.u32 %v307, 4294901760
        %1829 = vmatmul.mubr.f32.gmra.mrb[0].mxu0 %v1828
        %v1830 = vpop.f32.mrb[0].mxu0
        %v1831 = vadd.f32 %v1571, %v1830
        %v1832 = vpop.f32.mrb[0].mxu0
        %1833 = vdwg.mxu0
        %1834 = vmatprep.subr.mxu0 0.0
        %v1835 = vand.u32 %v311, 4294901760
        %1836 = vmatpush1.msra.mxu0 %v1835
        %1837 = vmatprep.subr.mxu0 0.0
        %1838 = vmatpush1.msra.mxu0 0.0
        %1839 = vmatprep.subr.mxu0 0.0
        %1840 = vmatpush1.msra.mxu0 0.0
        %1841 = vmatprep.subr.mxu0 0.0
        %1842 = vmatpush1.msra.mxu0 0.0
        %1843 = vmatprep.subr.mxu0 0.0
        %1844 = vmatpush1.msra.mxu0 0.0
        %1845 = vmatprep.subr.mxu0 0.0
        %1846 = vmatpush1.msra.mxu0 0.0
        %1847 = vmatprep.subr.mxu0 0.0
        %1848 = vmatpush1.msra.mxu0 0.0
        %1849 = vmatprep.subr.mxu0 0.0
        %1850 = vmatpush1.msra.mxu0 0.0
        %1851 = vmatprep.subr.mxu0 0.0
        %1852 = vmatpush1.msra.mxu0 0.0
        %1853 = vmatprep.subr.mxu0 0.0
        %1854 = vmatpush1.msra.mxu0 0.0
        %1855 = vmatprep.subr.mxu0 0.0
        %1856 = vmatpush1.msra.mxu0 0.0
        %1857 = vmatprep.subr.mxu0 0.0
        %1858 = vmatpush1.msra.mxu0 0.0
        %1859 = vmatprep.subr.mxu0 0.0
        %1860 = vmatpush1.msra.mxu0 0.0
        %1861 = vmatprep.subr.mxu0 0.0
        %1862 = vmatpush1.msra.mxu0 0.0
        %1863 = vmatprep.subr.mxu0 0.0
        %1864 = vmatpush1.msra.mxu0 0.0
        %1865 = vmatprep.subr.mxu0 0.0
        %1866 = vmatpush1.msra.mxu0 0.0
        %1867 = vmatprep.subr.mxu0 0.0
        %1868 = vmatpush1.msra.mxu0 0.0
        %1869 = vmatprep.subr.mxu0 0.0
        %1870 = vmatpush1.msra.mxu0 0.0
        %1871 = vmatprep.subr.mxu0 0.0
        %1872 = vmatpush1.msra.mxu0 0.0
        %1873 = vmatprep.subr.mxu0 0.0
        %1874 = vmatpush1.msra.mxu0 0.0
        %1875 = vmatprep.subr.mxu0 0.0
        %1876 = vmatpush1.msra.mxu0 0.0
        %1877 = vmatprep.subr.mxu0 0.0
        %1878 = vmatpush1.msra.mxu0 0.0
        %1879 = vmatprep.subr.mxu0 0.0
        %1880 = vmatpush1.msra.mxu0 0.0
        %1881 = vmatprep.subr.mxu0 0.0
        %1882 = vmatpush1.msra.mxu0 0.0
        %1883 = vmatprep.subr.mxu0 0.0
        %1884 = vmatpush1.msra.mxu0 0.0
        %1885 = vmatprep.subr.mxu0 0.0
        %1886 = vmatpush1.msra.mxu0 0.0
        %1887 = vmatprep.subr.mxu0 0.0
        %1888 = vmatpush1.msra.mxu0 0.0
        %1889 = vmatprep.subr.mxu0 0.0
        %1890 = vmatpush1.msra.mxu0 0.0
        %1891 = vmatprep.subr.mxu0 0.0
        %1892 = vmatpush1.msra.mxu0 0.0
        %1893 = vmatprep.subr.mxu0 0.0
        %1894 = vmatpush1.msra.mxu0 0.0
        %1895 = vmatprep.subr.mxu0 0.0
        %1896 = vmatpush1.msra.mxu0 0.0
        %1897 = vmatprep.subr.mxu0 0.0
        %1898 = vmatpush1.msra.mxu0 0.0
        %1899 = vmatprep.mubr.f32.mxu0 0.0
        %v1900 = vand.u32 %v214, 4294901760
        %1901 = vmatmul.mubr.f32.gmra.mrb[0].mxu0 %v1900
        %v1902 = vpop.f32.mrb[0].mxu0
        %v1903 = vadd.f32 %v1645, %v1902
        %v1904 = vpop.f32.mrb[0].mxu0
        %1905 = vmatprep.mubr.f32.mxu0 0.0
        %v1906 = vand.u32 %v217, 4294901760
        %1907 = vmatmul.mubr.f32.gmra.mrb[0].mxu0 %v1906
        %v1908 = vpop.f32.mrb[0].mxu0
        %v1909 = vadd.f32 %v1651, %v1908
        %v1910 = vpop.f32.mrb[0].mxu0
        %1911 = vmatprep.mubr.f32.mxu0 0.0
        %v1912 = vand.u32 %v220, 4294901760
        %1913 = vmatmul.mubr.f32.gmra.mrb[0].mxu0 %v1912
        %v1914 = vpop.f32.mrb[0].mxu0
        %v1915 = vadd.f32 %v1657, %v1914
        %v1916 = vpop.f32.mrb[0].mxu0
        %1917 = vmatprep.mubr.f32.mxu0 0.0
        %v1918 = vand.u32 %v223, 4294901760
        %1919 = vmatmul.mubr.f32.gmra.mrb[0].mxu0 %v1918
        %v1920 = vpop.f32.mrb[0].mxu0
        %v1921 = vadd.f32 %v1663, %v1920
        %v1922 = vpop.f32.mrb[0].mxu0
        %1923 = vmatprep.mubr.f32.mxu0 0.0
        %v1924 = vand.u32 %v226, 4294901760
        %1925 = vmatmul.mubr.f32.gmra.mrb[0].mxu0 %v1924
        %v1926 = vpop.f32.mrb[0].mxu0
        %v1927 = vadd.f32 %v1669, %v1926
        %v1928 = vpop.f32.mrb[0].mxu0
        %1929 = vmatprep.mubr.f32.mxu0 0.0
        %v1930 = vand.u32 %v229, 4294901760
        %1931 = vmatmul.mubr.f32.gmra.mrb[0].mxu0 %v1930
        %v1932 = vpop.f32.mrb[0].mxu0
        %v1933 = vadd.f32 %v1675, %v1932
        %v1934 = vpop.f32.mrb[0].mxu0
        %1935 = vmatprep.mubr.f32.mxu0 0.0
        %v1936 = vand.u32 %v232, 4294901760
        %1937 = vmatmul.mubr.f32.gmra.mrb[0].mxu0 %v1936
        %v1938 = vpop.f32.mrb[0].mxu0
        %v1939 = vadd.f32 %v1681, %v1938
        %v1940 = vpop.f32.mrb[0].mxu0
        %1941 = vmatprep.mubr.f32.mxu0 0.0
        %v1942 = vand.u32 %v235, 4294901760
        %1943 = vmatmul.mubr.f32.gmra.mrb[0].mxu0 %v1942
        %v1944 = vpop.f32.mrb[0].mxu0
        %v1945 = vadd.f32 %v1687, %v1944
        %v1946 = vpop.f32.mrb[0].mxu0
        %1947 = vmatprep.mubr.f32.mxu0 0.0
        %v1948 = vand.u32 %v238, 4294901760
        %1949 = vmatmul.mubr.f32.gmra.mrb[0].mxu0 %v1948
        %v1950 = vpop.f32.mrb[0].mxu0
        %v1951 = vadd.f32 %v1693, %v1950
        %v1952 = vpop.f32.mrb[0].mxu0
        %1953 = vmatprep.mubr.f32.mxu0 0.0
        %v1954 = vand.u32 %v241, 4294901760
        %1955 = vmatmul.mubr.f32.gmra.mrb[0].mxu0 %v1954
        %v1956 = vpop.f32.mrb[0].mxu0
        %v1957 = vadd.f32 %v1699, %v1956
        %v1958 = vpop.f32.mrb[0].mxu0
        %1959 = vmatprep.mubr.f32.mxu0 0.0
        %v1960 = vand.u32 %v244, 4294901760
        %1961 = vmatmul.mubr.f32.gmra.mrb[0].mxu0 %v1960
        %v1962 = vpop.f32.mrb[0].mxu0
        %v1963 = vadd.f32 %v1705, %v1962
        %v1964 = vpop.f32.mrb[0].mxu0
        %1965 = vmatprep.mubr.f32.mxu0 0.0
        %v1966 = vand.u32 %v247, 4294901760
        %1967 = vmatmul.mubr.f32.gmra.mrb[0].mxu0 %v1966
        %v1968 = vpop.f32.mrb[0].mxu0
        %v1969 = vadd.f32 %v1711, %v1968
        %v1970 = vpop.f32.mrb[0].mxu0
        %1971 = vmatprep.mubr.f32.mxu0 0.0
        %v1972 = vand.u32 %v250, 4294901760
        %1973 = vmatmul.mubr.f32.gmra.mrb[0].mxu0 %v1972
        %v1974 = vpop.f32.mrb[0].mxu0
        %v1975 = vadd.f32 %v1717, %v1974
        %v1976 = vpop.f32.mrb[0].mxu0
        %1977 = vmatprep.mubr.f32.mxu0 0.0
        %v1978 = vand.u32 %v253, 4294901760
        %1979 = vmatmul.mubr.f32.gmra.mrb[0].mxu0 %v1978
        %v1980 = vpop.f32.mrb[0].mxu0
        %v1981 = vadd.f32 %v1723, %v1980
        %v1982 = vpop.f32.mrb[0].mxu0
        %1983 = vmatprep.mubr.f32.mxu0 0.0
        %v1984 = vand.u32 %v256, 4294901760
        %1985 = vmatmul.mubr.f32.gmra.mrb[0].mxu0 %v1984
        %v1986 = vpop.f32.mrb[0].mxu0
        %v1987 = vadd.f32 %v1729, %v1986
        %v1988 = vpop.f32.mrb[0].mxu0
        %1989 = vmatprep.mubr.f32.mxu0 0.0
        %v1990 = vand.u32 %v259, 4294901760
        %1991 = vmatmul.mubr.f32.gmra.mrb[0].mxu0 %v1990
        %v1992 = vpop.f32.mrb[0].mxu0
        %v1993 = vadd.f32 %v1735, %v1992
        %v1994 = vpop.f32.mrb[0].mxu0
        %1995 = vmatprep.mubr.f32.mxu0 0.0
        %v1996 = vand.u32 %v262, 4294901760
        %1997 = vmatmul.mubr.f32.gmra.mrb[0].mxu0 %v1996
        %v1998 = vpop.f32.mrb[0].mxu0
        %v1999 = vadd.f32 %v1741, %v1998
        %v2000 = vpop.f32.mrb[0].mxu0
        %2001 = vmatprep.mubr.f32.mxu0 0.0
        %v2002 = vand.u32 %v265, 4294901760
        %2003 = vmatmul.mubr.f32.gmra.mrb[0].mxu0 %v2002
        %v2004 = vpop.f32.mrb[0].mxu0
        %v2005 = vadd.f32 %v1747, %v2004
        %v2006 = vpop.f32.mrb[0].mxu0
        %2007 = vmatprep.mubr.f32.mxu0 0.0
        %v2008 = vand.u32 %v268, 4294901760
        %2009 = vmatmul.mubr.f32.gmra.mrb[0].mxu0 %v2008
        %v2010 = vpop.f32.mrb[0].mxu0
        %v2011 = vadd.f32 %v1753, %v2010
        %v2012 = vpop.f32.mrb[0].mxu0
        %2013 = vmatprep.mubr.f32.mxu0 0.0
        %v2014 = vand.u32 %v271, 4294901760
        %2015 = vmatmul.mubr.f32.gmra.mrb[0].mxu0 %v2014
        %v2016 = vpop.f32.mrb[0].mxu0
        %v2017 = vadd.f32 %v1759, %v2016
        %v2018 = vpop.f32.mrb[0].mxu0
        %2019 = vmatprep.mubr.f32.mxu0 0.0
        %v2020 = vand.u32 %v274, 4294901760
        %2021 = vmatmul.mubr.f32.gmra.mrb[0].mxu0 %v2020
        %v2022 = vpop.f32.mrb[0].mxu0
        %v2023 = vadd.f32 %v1765, %v2022
        %v2024 = vpop.f32.mrb[0].mxu0
        %2025 = vmatprep.mubr.f32.mxu0 0.0
        %v2026 = vand.u32 %v277, 4294901760
        %2027 = vmatmul.mubr.f32.gmra.mrb[0].mxu0 %v2026
        %v2028 = vpop.f32.mrb[0].mxu0
        %v2029 = vadd.f32 %v1771, %v2028
        %v2030 = vpop.f32.mrb[0].mxu0
        %2031 = vmatprep.mubr.f32.mxu0 0.0
        %v2032 = vand.u32 %v280, 4294901760
        %2033 = vmatmul.mubr.f32.gmra.mrb[0].mxu0 %v2032
        %v2034 = vpop.f32.mrb[0].mxu0
        %v2035 = vadd.f32 %v1777, %v2034
        %v2036 = vpop.f32.mrb[0].mxu0
        %2037 = vmatprep.mubr.f32.mxu0 0.0
        %v2038 = vand.u32 %v283, 4294901760
        %2039 = vmatmul.mubr.f32.gmra.mrb[0].mxu0 %v2038
        %v2040 = vpop.f32.mrb[0].mxu0
        %v2041 = vadd.f32 %v1783, %v2040
        %v2042 = vpop.f32.mrb[0].mxu0
        %2043 = vmatprep.mubr.f32.mxu0 0.0
        %v2044 = vand.u32 %v286, 4294901760
        %2045 = vmatmul.mubr.f32.gmra.mrb[0].mxu0 %v2044
        %v2046 = vpop.f32.mrb[0].mxu0
        %v2047 = vadd.f32 %v1789, %v2046
        %v2048 = vpop.f32.mrb[0].mxu0
        %2049 = vmatprep.mubr.f32.mxu0 0.0
        %v2050 = vand.u32 %v289, 4294901760
        %2051 = vmatmul.mubr.f32.gmra.mrb[0].mxu0 %v2050
        %v2052 = vpop.f32.mrb[0].mxu0
        %v2053 = vadd.f32 %v1795, %v2052
        %v2054 = vpop.f32.mrb[0].mxu0
        %2055 = vmatprep.mubr.f32.mxu0 0.0
        %v2056 = vand.u32 %v292, 4294901760
        %2057 = vmatmul.mubr.f32.gmra.mrb[0].mxu0 %v2056
        %v2058 = vpop.f32.mrb[0].mxu0
        %v2059 = vadd.f32 %v1801, %v2058
        %v2060 = vpop.f32.mrb[0].mxu0
        %2061 = vmatprep.mubr.f32.mxu0 0.0
        %v2062 = vand.u32 %v295, 4294901760
        %2063 = vmatmul.mubr.f32.gmra.mrb[0].mxu0 %v2062
        %v2064 = vpop.f32.mrb[0].mxu0
        %v2065 = vadd.f32 %v1807, %v2064
        %v2066 = vpop.f32.mrb[0].mxu0
        %2067 = vmatprep.mubr.f32.mxu0 0.0
        %v2068 = vand.u32 %v298, 4294901760
        %2069 = vmatmul.mubr.f32.gmra.mrb[0].mxu0 %v2068
        %v2070 = vpop.f32.mrb[0].mxu0
        %v2071 = vadd.f32 %v1813, %v2070
        %v2072 = vpop.f32.mrb[0].mxu0
        %2073 = vmatprep.mubr.f32.mxu0 0.0
        %v2074 = vand.u32 %v301, 4294901760
        %2075 = vmatmul.mubr.f32.gmra.mrb[0].mxu0 %v2074
        %v2076 = vpop.f32.mrb[0].mxu0
        %v2077 = vadd.f32 %v1819, %v2076
        %v2078 = vpop.f32.mrb[0].mxu0
        %2079 = vmatprep.mubr.f32.mxu0 0.0
        %v2080 = vand.u32 %v304, 4294901760
        %2081 = vmatmul.mubr.f32.gmra.mrb[0].mxu0 %v2080
        %v2082 = vpop.f32.mrb[0].mxu0
        %v2083 = vadd.f32 %v1825, %v2082
        %v2084 = vpop.f32.mrb[0].mxu0
        %2085 = vmatprep.mubr.f32.mxu0 0.0
        %v2086 = vand.u32 %v307, 4294901760
        %2087 = vmatmul.mubr.f32.gmra.mrb[0].mxu0 %v2086
        %v2088 = vpop.f32.mrb[0].mxu0
        %v2089 = vadd.f32 %v1831, %v2088
        %v2090 = vpop.f32.mrb[0].mxu0
        %2091 = vdwg.mxu0
        %v2092 = vand.u32 2147483647, %v1903
        %vm2093 = vcmp.le.f32.partialorder %v2092, 0.7853982
        %vm2094 = vcmp.lt.s32.totalorder %v1903, 0
        %v2095 = vand.u32 %v1903, 2139095040
        %v2096 = vshrl.u32 %v2095, 23
        %v2097 = vsub.s32 %v2096, 127
        %v2098 = vand.u32 2147483647, %v1903
        %v2099 = vand.u32 %v2098, 8388607
        %v2100 = vor.u32 %v2099, 8388608
        %v2101 = vsub.s32 0, %v2100
        %v2102 = vadd.s32 %v2097, 1
        %vm2103 = vcmp.gt.s32.totalorder %v2102, 0
        %v2104 = vsel %vm2103, %v2102, 0
        %v2105 = vshrl.u32 %v2104, 5
        %v2106 = vand.u32 %v2104, 31
        %v2107 = vsub.s32 32, %v2106
        %v2108 = vshrl.u32 683565275, %v2107
        %v2109 = vshll.u32 683565275, %v2106
        %v2110 = vshrl.u32 2475754826, %v2107
        %v2111 = vor.u32 %v2109, %v2110
        %v2112 = vshll.u32 2475754826, %v2106
        %v2113 = vshrl.u32 2131351028, %v2107
        %v2114 = vor.u32 %v2112, %v2113
        %v2115 = vshll.u32 2131351028, %v2106
        %v2116 = vshrl.u32 2102212464, %v2107
        %v2117 = vor.u32 %v2115, %v2116
        %v2118 = vshll.u32 2102212464, %v2106
        %v2119 = vshrl.u32 920167782, %v2107
        %v2120 = vor.u32 %v2118, %v2119
        %v2121 = vshll.u32 920167782, %v2106
        %v2122 = vshrl.u32 1326507024, %v2107
        %v2123 = vor.u32 %v2121, %v2122
        %vm2124 = vcmp.lt.s32.totalorder %v2105, 1
        %vm2125 = vcmp.lt.s32.totalorder %v2105, 2
        %vm2126 = vcmp.lt.s32.totalorder %v2105, 3
        %vm2127 = vcmp.lt.s32.totalorder %v2105, 4
        %v2128 = vsel %vm2124, %v2108, %v2111
        %v2129 = vsel %vm2127, %v2117, 2102212464
        %v2130 = vsel %vm2126, %v2114, %v2129
        %v2131 = vsel %vm2125, %v2128, %v2130
        %v2132 = vsel %vm2124, %v2111, %v2114
        %v2133 = vsel %vm2127, %v2120, 920167782
        %v2134 = vsel %vm2126, %v2117, %v2133
        %v2135 = vsel %vm2125, %v2132, %v2134
        %v2136 = vsel %vm2124, %v2114, %v2117
        %v2137 = vsel %vm2127, %v2123, 1326507024
        %v2138 = vsel %vm2126, %v2120, %v2137
        %v2139 = vsel %vm2125, %v2136, %v2138
        %v2140 = vshll.u32 %v2100, 8
        %v2141 = vmul.u32.u64.compose %v2140, %v2139
        %v2142 = vextract.low.u32 %v2141
        %v2143 = vextract.high.u32 %v2141
        %v2144 = vmul.u32.u64.compose %v2140, %v2135
        %v2145 = vextract.low.u32 %v2144
        %v2146 = vextract.high.u32 %v2144
        %v2147 = vmul.u32 %v2140, %v2131
        %v2148 = vadd.s32 %v2143, %v2145
        %vm2149 = vc.u32 %v2143, %v2145
        %v2150 = vadd.s32 %v2146, 1
        %v2151 = vsel %vm2149, %v2150, %v2146
        %v2152 = vadd.s32 %v2147, %v2151
        %v2153 = vadd.s32 %v2152, 536870912
        %v2154 = vshrl.u32 %v2153, 30
        %v2155 = vshll.u32 %v2154, 30
        %v2156 = vsub.s32 %v2152, %v2155
        %vm2157 = vcmp.lt.s32.totalorder %v2156, 0
        %v2158 = vsub.s32 0, %v2156
        %v2159 = vsel %vm2157, %v2158, %v2156
        %v2160 = vclz %v2159
        %v2161 = vsub.s32 %v2160, 2
        %vm2162 = vcmp.gt.s32.totalorder 0, %v2161
        %v2163 = vsel %vm2162, 0, %v2161
        %v2164 = vsub.s32 32, %v2163
        %v2165 = vshll.u32 %v2156, %v2163
        %v2166 = vshrl.u32 %v2148, %v2164
        %v2167 = vor.u32 %v2165, %v2166
        %v2168 = vsub.s32 4294967266, %v2163
        %v2169 = vadd.s32 %v2168, 127
        %v2170 = vshll.u32 %v2169, 23
        %v2171 = vor.u32 4788187, %v2170
        %v2172 = vand.u32 2147483647, %v2171
        %v2174 = vcvt.s32.f32 %v2167
        %v2175 = vmul.f32 %v2174, %v2172
        %v2176 = vxor.u32 %v2175, 2147483648
        %v2177 = vsel %vm2094, %v2176, %v2175
        %v2178 = vsub.s32 4, %v2154
        %v2179 = vsel %vm2094, %v2178, %v2154
        %v2180 = vsel %vm2093, %v1903, %v2177
        %v2181 = vsel %vm2093, 0, %v2179
        %v2182 = vcosq.f32.pop %v2180
        %v2183 = vsinq.f32.pop %v2180
        %vm2184 = vweird.f32 %v1903
        %v2185 = vand.u32 %v2181, 3
        %vm2186 = vcmp.lt.s32.totalorder %v2185, 2
        %vm2187 = vcmp.eq.s32.totalorder %v2185, 0
        %v2188 = vxor.u32 %v2183, 2147483648
        %v2189 = vsel %vm2187, %v2182, %v2188
        %vm2190 = vcmp.eq.s32.totalorder %v2185, 2
        %v2191 = vxor.u32 %v2182, 2147483648
        %v2192 = vsel %vm2190, %v2191, %v2183
        %v2193 = vsel %vm2186, %v2189, %v2192
        %v2194 = vsel %vm2184, nan, %v2193
        %v2195 = vand.u32 2147483647, %v1909
        %vm2196 = vcmp.le.f32.partialorder %v2195, 0.7853982
        %vm2197 = vcmp.lt.s32.totalorder %v1909, 0
        %v2198 = vand.u32 %v1909, 2139095040
        %v2199 = vshrl.u32 %v2198, 23
        %v2200 = vsub.s32 %v2199, 127
        %v2201 = vand.u32 2147483647, %v1909
        %v2202 = vand.u32 %v2201, 8388607
        %v2203 = vor.u32 %v2202, 8388608
        %v2204 = vsub.s32 0, %v2203
        %v2205 = vadd.s32 %v2200, 1
        %vm2206 = vcmp.gt.s32.totalorder %v2205, 0
        %v2207 = vsel %vm2206, %v2205, 0
        %v2208 = vshrl.u32 %v2207, 5
        %v2209 = vand.u32 %v2207, 31
        %v2210 = vsub.s32 32, %v2209
        %v2211 = vshrl.u32 683565275, %v2210
        %v2212 = vshll.u32 683565275, %v2209
        %v2213 = vshrl.u32 2475754826, %v2210
        %v2214 = vor.u32 %v2212, %v2213
        %v2215 = vshll.u32 2475754826, %v2209
        %v2216 = vshrl.u32 2131351028, %v2210
        %v2217 = vor.u32 %v2215, %v2216
        %v2218 = vshll.u32 2131351028, %v2209
        %v2219 = vshrl.u32 2102212464, %v2210
        %v2220 = vor.u32 %v2218, %v2219
        %v2221 = vshll.u32 2102212464, %v2209
        %v2222 = vshrl.u32 920167782, %v2210
        %v2223 = vor.u32 %v2221, %v2222
        %v2224 = vshll.u32 920167782, %v2209
        %v2225 = vshrl.u32 1326507024, %v2210
        %v2226 = vor.u32 %v2224, %v2225
        %vm2227 = vcmp.lt.s32.totalorder %v2208, 1
        %vm2228 = vcmp.lt.s32.totalorder %v2208, 2
        %vm2229 = vcmp.lt.s32.totalorder %v2208, 3
        %vm2230 = vcmp.lt.s32.totalorder %v2208, 4
        %v2231 = vsel %vm2227, %v2211, %v2214
        %v2232 = vsel %vm2230, %v2220, 2102212464
        %v2233 = vsel %vm2229, %v2217, %v2232
        %v2234 = vsel %vm2228, %v2231, %v2233
        %v2235 = vsel %vm2227, %v2214, %v2217
        %v2236 = vsel %vm2230, %v2223, 920167782
        %v2237 = vsel %vm2229, %v2220, %v2236
        %v2238 = vsel %vm2228, %v2235, %v2237
        %v2239 = vsel %vm2227, %v2217, %v2220
        %v2240 = vsel %vm2230, %v2226, 1326507024
        %v2241 = vsel %vm2229, %v2223, %v2240
        %v2242 = vsel %vm2228, %v2239, %v2241
        %v2243 = vshll.u32 %v2203, 8
        %v2244 = vmul.u32.u64.compose %v2243, %v2242
        %v2245 = vextract.low.u32 %v2244
        %v2246 = vextract.high.u32 %v2244
        %v2247 = vmul.u32.u64.compose %v2243, %v2238
        %v2248 = vextract.low.u32 %v2247
        %v2249 = vextract.high.u32 %v2247
        %v2250 = vmul.u32 %v2243, %v2234
        %v2251 = vadd.s32 %v2246, %v2248
        %vm2252 = vc.u32 %v2246, %v2248
        %v2253 = vadd.s32 %v2249, 1
        %v2254 = vsel %vm2252, %v2253, %v2249
        %v2255 = vadd.s32 %v2250, %v2254
        %v2256 = vadd.s32 %v2255, 536870912
        %v2257 = vshrl.u32 %v2256, 30
        %v2258 = vshll.u32 %v2257, 30
        %v2259 = vsub.s32 %v2255, %v2258
        %vm2260 = vcmp.lt.s32.totalorder %v2259, 0
        %v2261 = vsub.s32 0, %v2259
        %v2262 = vsel %vm2260, %v2261, %v2259
        %v2263 = vclz %v2262
        %v2264 = vsub.s32 %v2263, 2
        %vm2265 = vcmp.gt.s32.totalorder 0, %v2264
        %v2266 = vsel %vm2265, 0, %v2264
        %v2267 = vsub.s32 32, %v2266
        %v2268 = vshll.u32 %v2259, %v2266
        %v2269 = vshrl.u32 %v2251, %v2267
        %v2270 = vor.u32 %v2268, %v2269
        %v2271 = vsub.s32 4294967266, %v2266
        %v2272 = vadd.s32 %v2271, 127
        %v2273 = vshll.u32 %v2272, 23
        %v2274 = vor.u32 4788187, %v2273
        %v2275 = vand.u32 2147483647, %v2274
        %v2277 = vcvt.s32.f32 %v2270
        %v2278 = vmul.f32 %v2277, %v2275
        %v2279 = vxor.u32 %v2278, 2147483648
        %v2280 = vsel %vm2197, %v2279, %v2278
        %v2281 = vsub.s32 4, %v2257
        %v2282 = vsel %vm2197, %v2281, %v2257
        %v2283 = vsel %vm2196, %v1909, %v2280
        %v2284 = vsel %vm2196, 0, %v2282
        %v2285 = vcosq.f32.pop %v2283
        %v2286 = vsinq.f32.pop %v2283
        %vm2287 = vweird.f32 %v1909
        %v2288 = vand.u32 %v2284, 3
        %vm2289 = vcmp.lt.s32.totalorder %v2288, 2
        %vm2290 = vcmp.eq.s32.totalorder %v2288, 0
        %v2291 = vxor.u32 %v2286, 2147483648
        %v2292 = vsel %vm2290, %v2285, %v2291
        %vm2293 = vcmp.eq.s32.totalorder %v2288, 2
        %v2294 = vxor.u32 %v2285, 2147483648
        %v2295 = vsel %vm2293, %v2294, %v2286
        %v2296 = vsel %vm2289, %v2292, %v2295
        %v2297 = vsel %vm2287, nan, %v2296
        %v2298 = vand.u32 2147483647, %v1915
        %vm2299 = vcmp.le.f32.partialorder %v2298, 0.7853982
        %vm2300 = vcmp.lt.s32.totalorder %v1915, 0
        %v2301 = vand.u32 %v1915, 2139095040
        %v2302 = vshrl.u32 %v2301, 23
        %v2303 = vsub.s32 %v2302, 127
        %v2304 = vand.u32 2147483647, %v1915
        %v2305 = vand.u32 %v2304, 8388607
        %v2306 = vor.u32 %v2305, 8388608
        %v2307 = vsub.s32 0, %v2306
        %v2308 = vadd.s32 %v2303, 1
        %vm2309 = vcmp.gt.s32.totalorder %v2308, 0
        %v2310 = vsel %vm2309, %v2308, 0
        %v2311 = vshrl.u32 %v2310, 5
        %v2312 = vand.u32 %v2310, 31
        %v2313 = vsub.s32 32, %v2312
        %v2314 = vshrl.u32 683565275, %v2313
        %v2315 = vshll.u32 683565275, %v2312
        %v2316 = vshrl.u32 2475754826, %v2313
        %v2317 = vor.u32 %v2315, %v2316
        %v2318 = vshll.u32 2475754826, %v2312
        %v2319 = vshrl.u32 2131351028, %v2313
        %v2320 = vor.u32 %v2318, %v2319
        %v2321 = vshll.u32 2131351028, %v2312
        %v2322 = vshrl.u32 2102212464, %v2313
        %v2323 = vor.u32 %v2321, %v2322
        %v2324 = vshll.u32 2102212464, %v2312
        %v2325 = vshrl.u32 920167782, %v2313
        %v2326 = vor.u32 %v2324, %v2325
        %v2327 = vshll.u32 920167782, %v2312
        %v2328 = vshrl.u32 1326507024, %v2313
        %v2329 = vor.u32 %v2327, %v2328
        %vm2330 = vcmp.lt.s32.totalorder %v2311, 1
        %vm2331 = vcmp.lt.s32.totalorder %v2311, 2
        %vm2332 = vcmp.lt.s32.totalorder %v2311, 3
        %vm2333 = vcmp.lt.s32.totalorder %v2311, 4
        %v2334 = vsel %vm2330, %v2314, %v2317
        %v2335 = vsel %vm2333, %v2323, 2102212464
        %v2336 = vsel %vm2332, %v2320, %v2335
        %v2337 = vsel %vm2331, %v2334, %v2336
        %v2338 = vsel %vm2330, %v2317, %v2320
        %v2339 = vsel %vm2333, %v2326, 920167782
        %v2340 = vsel %vm2332, %v2323, %v2339
        %v2341 = vsel %vm2331, %v2338, %v2340
        %v2342 = vsel %vm2330, %v2320, %v2323
        %v2343 = vsel %vm2333, %v2329, 1326507024
        %v2344 = vsel %vm2332, %v2326, %v2343
        %v2345 = vsel %vm2331, %v2342, %v2344
        %v2346 = vshll.u32 %v2306, 8
        %v2347 = vmul.u32.u64.compose %v2346, %v2345
        %v2348 = vextract.low.u32 %v2347
        %v2349 = vextract.high.u32 %v2347
        %v2350 = vmul.u32.u64.compose %v2346, %v2341
        %v2351 = vextract.low.u32 %v2350
        %v2352 = vextract.high.u32 %v2350
        %v2353 = vmul.u32 %v2346, %v2337
        %v2354 = vadd.s32 %v2349, %v2351
        %vm2355 = vc.u32 %v2349, %v2351
        %v2356 = vadd.s32 %v2352, 1
        %v2357 = vsel %vm2355, %v2356, %v2352
        %v2358 = vadd.s32 %v2353, %v2357
        %v2359 = vadd.s32 %v2358, 536870912
        %v2360 = vshrl.u32 %v2359, 30
        %v2361 = vshll.u32 %v2360, 30
        %v2362 = vsub.s32 %v2358, %v2361
        %vm2363 = vcmp.lt.s32.totalorder %v2362, 0
        %v2364 = vsub.s32 0, %v2362
        %v2365 = vsel %vm2363, %v2364, %v2362
        %v2366 = vclz %v2365
        %v2367 = vsub.s32 %v2366, 2
        %vm2368 = vcmp.gt.s32.totalorder 0, %v2367
        %v2369 = vsel %vm2368, 0, %v2367
        %v2370 = vsub.s32 32, %v2369
        %v2371 = vshll.u32 %v2362, %v2369
        %v2372 = vshrl.u32 %v2354, %v2370
        %v2373 = vor.u32 %v2371, %v2372
        %v2374 = vsub.s32 4294967266, %v2369
        %v2375 = vadd.s32 %v2374, 127
        %v2376 = vshll.u32 %v2375, 23
        %v2377 = vor.u32 4788187, %v2376
        %v2378 = vand.u32 2147483647, %v2377
        %v2380 = vcvt.s32.f32 %v2373
        %v2381 = vmul.f32 %v2380, %v2378
        %v2382 = vxor.u32 %v2381, 2147483648
        %v2383 = vsel %vm2300, %v2382, %v2381
        %v2384 = vsub.s32 4, %v2360
        %v2385 = vsel %vm2300, %v2384, %v2360
        %v2386 = vsel %vm2299, %v1915, %v2383
        %v2387 = vsel %vm2299, 0, %v2385
        %v2388 = vcosq.f32.pop %v2386
        %v2389 = vsinq.f32.pop %v2386
        %vm2390 = vweird.f32 %v1915
        %v2391 = vand.u32 %v2387, 3
        %vm2392 = vcmp.lt.s32.totalorder %v2391, 2
        %vm2393 = vcmp.eq.s32.totalorder %v2391, 0
        %v2394 = vxor.u32 %v2389, 2147483648
        %v2395 = vsel %vm2393, %v2388, %v2394
        %vm2396 = vcmp.eq.s32.totalorder %v2391, 2
        %v2397 = vxor.u32 %v2388, 2147483648
        %v2398 = vsel %vm2396, %v2397, %v2389
        %v2399 = vsel %vm2392, %v2395, %v2398
        %v2400 = vsel %vm2390, nan, %v2399
        %v2401 = vand.u32 2147483647, %v1921
        %vm2402 = vcmp.le.f32.partialorder %v2401, 0.7853982
        %vm2403 = vcmp.lt.s32.totalorder %v1921, 0
        %v2404 = vand.u32 %v1921, 2139095040
        %v2405 = vshrl.u32 %v2404, 23
        %v2406 = vsub.s32 %v2405, 127
        %v2407 = vand.u32 2147483647, %v1921
        %v2408 = vand.u32 %v2407, 8388607
        %v2409 = vor.u32 %v2408, 8388608
        %v2410 = vsub.s32 0, %v2409
        %v2411 = vadd.s32 %v2406, 1
        %vm2412 = vcmp.gt.s32.totalorder %v2411, 0
        %v2413 = vsel %vm2412, %v2411, 0
        %v2414 = vshrl.u32 %v2413, 5
        %v2415 = vand.u32 %v2413, 31
        %v2416 = vsub.s32 32, %v2415
        %v2417 = vshrl.u32 683565275, %v2416
        %v2418 = vshll.u32 683565275, %v2415
        %v2419 = vshrl.u32 2475754826, %v2416
        %v2420 = vor.u32 %v2418, %v2419
        %v2421 = vshll.u32 2475754826, %v2415
        %v2422 = vshrl.u32 2131351028, %v2416
        %v2423 = vor.u32 %v2421, %v2422
        %v2424 = vshll.u32 2131351028, %v2415
        %v2425 = vshrl.u32 2102212464, %v2416
        %v2426 = vor.u32 %v2424, %v2425
        %v2427 = vshll.u32 2102212464, %v2415
        %v2428 = vshrl.u32 920167782, %v2416
        %v2429 = vor.u32 %v2427, %v2428
        %v2430 = vshll.u32 920167782, %v2415
        %v2431 = vshrl.u32 1326507024, %v2416
        %v2432 = vor.u32 %v2430, %v2431
        %vm2433 = vcmp.lt.s32.totalorder %v2414, 1
        %vm2434 = vcmp.lt.s32.totalorder %v2414, 2
        %vm2435 = vcmp.lt.s32.totalorder %v2414, 3
        %vm2436 = vcmp.lt.s32.totalorder %v2414, 4
        %v2437 = vsel %vm2433, %v2417, %v2420
        %v2438 = vsel %vm2436, %v2426, 2102212464
        %v2439 = vsel %vm2435, %v2423, %v2438
        %v2440 = vsel %vm2434, %v2437, %v2439
        %v2441 = vsel %vm2433, %v2420, %v2423
        %v2442 = vsel %vm2436, %v2429, 920167782
        %v2443 = vsel %vm2435, %v2426, %v2442
        %v2444 = vsel %vm2434, %v2441, %v2443
        %v2445 = vsel %vm2433, %v2423, %v2426
        %v2446 = vsel %vm2436, %v2432, 1326507024
        %v2447 = vsel %vm2435, %v2429, %v2446
        %v2448 = vsel %vm2434, %v2445, %v2447
        %v2449 = vshll.u32 %v2409, 8
        %v2450 = vmul.u32.u64.compose %v2449, %v2448
        %v2451 = vextract.low.u32 %v2450
        %v2452 = vextract.high.u32 %v2450
        %v2453 = vmul.u32.u64.compose %v2449, %v2444
        %v2454 = vextract.low.u32 %v2453
        %v2455 = vextract.high.u32 %v2453
        %v2456 = vmul.u32 %v2449, %v2440
        %v2457 = vadd.s32 %v2452, %v2454
        %vm2458 = vc.u32 %v2452, %v2454
        %v2459 = vadd.s32 %v2455, 1
        %v2460 = vsel %vm2458, %v2459, %v2455
        %v2461 = vadd.s32 %v2456, %v2460
        %v2462 = vadd.s32 %v2461, 536870912
        %v2463 = vshrl.u32 %v2462, 30
        %v2464 = vshll.u32 %v2463, 30
        %v2465 = vsub.s32 %v2461, %v2464
        %vm2466 = vcmp.lt.s32.totalorder %v2465, 0
        %v2467 = vsub.s32 0, %v2465
        %v2468 = vsel %vm2466, %v2467, %v2465
        %v2469 = vclz %v2468
        %v2470 = vsub.s32 %v2469, 2
        %vm2471 = vcmp.gt.s32.totalorder 0, %v2470
        %v2472 = vsel %vm2471, 0, %v2470
        %v2473 = vsub.s32 32, %v2472
        %v2474 = vshll.u32 %v2465, %v2472
        %v2475 = vshrl.u32 %v2457, %v2473
        %v2476 = vor.u32 %v2474, %v2475
        %v2477 = vsub.s32 4294967266, %v2472
        %v2478 = vadd.s32 %v2477, 127
        %v2479 = vshll.u32 %v2478, 23
        %v2480 = vor.u32 4788187, %v2479
        %v2481 = vand.u32 2147483647, %v2480
        %v2483 = vcvt.s32.f32 %v2476
        %v2484 = vmul.f32 %v2483, %v2481
        %v2485 = vxor.u32 %v2484, 2147483648
        %v2486 = vsel %vm2403, %v2485, %v2484
        %v2487 = vsub.s32 4, %v2463
        %v2488 = vsel %vm2403, %v2487, %v2463
        %v2489 = vsel %vm2402, %v1921, %v2486
        %v2490 = vsel %vm2402, 0, %v2488
        %v2491 = vcosq.f32.pop %v2489
        %v2492 = vsinq.f32.pop %v2489
        %vm2493 = vweird.f32 %v1921
        %v2494 = vand.u32 %v2490, 3
        %vm2495 = vcmp.lt.s32.totalorder %v2494, 2
        %vm2496 = vcmp.eq.s32.totalorder %v2494, 0
        %v2497 = vxor.u32 %v2492, 2147483648
        %v2498 = vsel %vm2496, %v2491, %v2497
        %vm2499 = vcmp.eq.s32.totalorder %v2494, 2
        %v2500 = vxor.u32 %v2491, 2147483648
        %v2501 = vsel %vm2499, %v2500, %v2492
        %v2502 = vsel %vm2495, %v2498, %v2501
        %v2503 = vsel %vm2493, nan, %v2502
        %v2504 = vand.u32 2147483647, %v1927
        %vm2505 = vcmp.le.f32.partialorder %v2504, 0.7853982
        %vm2506 = vcmp.lt.s32.totalorder %v1927, 0
        %v2507 = vand.u32 %v1927, 2139095040
        %v2508 = vshrl.u32 %v2507, 23
        %v2509 = vsub.s32 %v2508, 127
        %v2510 = vand.u32 2147483647, %v1927
        %v2511 = vand.u32 %v2510, 8388607
        %v2512 = vor.u32 %v2511, 8388608
        %v2513 = vsub.s32 0, %v2512
        %v2514 = vadd.s32 %v2509, 1
        %vm2515 = vcmp.gt.s32.totalorder %v2514, 0
        %v2516 = vsel %vm2515, %v2514, 0
        %v2517 = vshrl.u32 %v2516, 5
        %v2518 = vand.u32 %v2516, 31
        %v2519 = vsub.s32 32, %v2518
        %v2520 = vshrl.u32 683565275, %v2519
        %v2521 = vshll.u32 683565275, %v2518
        %v2522 = vshrl.u32 2475754826, %v2519
        %v2523 = vor.u32 %v2521, %v2522
        %v2524 = vshll.u32 2475754826, %v2518
        %v2525 = vshrl.u32 2131351028, %v2519
        %v2526 = vor.u32 %v2524, %v2525
        %v2527 = vshll.u32 2131351028, %v2518
        %v2528 = vshrl.u32 2102212464, %v2519
        %v2529 = vor.u32 %v2527, %v2528
        %v2530 = vshll.u32 2102212464, %v2518
        %v2531 = vshrl.u32 920167782, %v2519
        %v2532 = vor.u32 %v2530, %v2531
        %v2533 = vshll.u32 920167782, %v2518
        %v2534 = vshrl.u32 1326507024, %v2519
        %v2535 = vor.u32 %v2533, %v2534
        %vm2536 = vcmp.lt.s32.totalorder %v2517, 1
        %vm2537 = vcmp.lt.s32.totalorder %v2517, 2
        %vm2538 = vcmp.lt.s32.totalorder %v2517, 3
        %vm2539 = vcmp.lt.s32.totalorder %v2517, 4
        %v2540 = vsel %vm2536, %v2520, %v2523
        %v2541 = vsel %vm2539, %v2529, 2102212464
        %v2542 = vsel %vm2538, %v2526, %v2541
        %v2543 = vsel %vm2537, %v2540, %v2542
        %v2544 = vsel %vm2536, %v2523, %v2526
        %v2545 = vsel %vm2539, %v2532, 920167782
        %v2546 = vsel %vm2538, %v2529, %v2545
        %v2547 = vsel %vm2537, %v2544, %v2546
        %v2548 = vsel %vm2536, %v2526, %v2529
        %v2549 = vsel %vm2539, %v2535, 1326507024
        %v2550 = vsel %vm2538, %v2532, %v2549
        %v2551 = vsel %vm2537, %v2548, %v2550
        %v2552 = vshll.u32 %v2512, 8
        %v2553 = vmul.u32.u64.compose %v2552, %v2551
        %v2554 = vextract.low.u32 %v2553
        %v2555 = vextract.high.u32 %v2553
        %v2556 = vmul.u32.u64.compose %v2552, %v2547
        %v2557 = vextract.low.u32 %v2556
        %v2558 = vextract.high.u32 %v2556
        %v2559 = vmul.u32 %v2552, %v2543
        %v2560 = vadd.s32 %v2555, %v2557
        %vm2561 = vc.u32 %v2555, %v2557
        %v2562 = vadd.s32 %v2558, 1
        %v2563 = vsel %vm2561, %v2562, %v2558
        %v2564 = vadd.s32 %v2559, %v2563
        %v2565 = vadd.s32 %v2564, 536870912
        %v2566 = vshrl.u32 %v2565, 30
        %v2567 = vshll.u32 %v2566, 30
        %v2568 = vsub.s32 %v2564, %v2567
        %vm2569 = vcmp.lt.s32.totalorder %v2568, 0
        %v2570 = vsub.s32 0, %v2568
        %v2571 = vsel %vm2569, %v2570, %v2568
        %v2572 = vclz %v2571
        %v2573 = vsub.s32 %v2572, 2
        %vm2574 = vcmp.gt.s32.totalorder 0, %v2573
        %v2575 = vsel %vm2574, 0, %v2573
        %v2576 = vsub.s32 32, %v2575
        %v2577 = vshll.u32 %v2568, %v2575
        %v2578 = vshrl.u32 %v2560, %v2576
        %v2579 = vor.u32 %v2577, %v2578
        %v2580 = vsub.s32 4294967266, %v2575
        %v2581 = vadd.s32 %v2580, 127
        %v2582 = vshll.u32 %v2581, 23
        %v2583 = vor.u32 4788187, %v2582
        %v2584 = vand.u32 2147483647, %v2583
        %v2586 = vcvt.s32.f32 %v2579
        %v2587 = vmul.f32 %v2586, %v2584
        %v2588 = vxor.u32 %v2587, 2147483648
        %v2589 = vsel %vm2506, %v2588, %v2587
        %v2590 = vsub.s32 4, %v2566
        %v2591 = vsel %vm2506, %v2590, %v2566
        %v2592 = vsel %vm2505, %v1927, %v2589
        %v2593 = vsel %vm2505, 0, %v2591
        %v2594 = vcosq.f32.pop %v2592
        %v2595 = vsinq.f32.pop %v2592
        %vm2596 = vweird.f32 %v1927
        %v2597 = vand.u32 %v2593, 3
        %vm2598 = vcmp.lt.s32.totalorder %v2597, 2
        %vm2599 = vcmp.eq.s32.totalorder %v2597, 0
        %v2600 = vxor.u32 %v2595, 2147483648
        %v2601 = vsel %vm2599, %v2594, %v2600
        %vm2602 = vcmp.eq.s32.totalorder %v2597, 2
        %v2603 = vxor.u32 %v2594, 2147483648
        %v2604 = vsel %vm2602, %v2603, %v2595
        %v2605 = vsel %vm2598, %v2601, %v2604
        %v2606 = vsel %vm2596, nan, %v2605
        %v2607 = vand.u32 2147483647, %v1933
        %vm2608 = vcmp.le.f32.partialorder %v2607, 0.7853982
        %vm2609 = vcmp.lt.s32.totalorder %v1933, 0
        %v2610 = vand.u32 %v1933, 2139095040
        %v2611 = vshrl.u32 %v2610, 23
        %v2612 = vsub.s32 %v2611, 127
        %v2613 = vand.u32 2147483647, %v1933
        %v2614 = vand.u32 %v2613, 8388607
        %v2615 = vor.u32 %v2614, 8388608
        %v2616 = vsub.s32 0, %v2615
        %v2617 = vadd.s32 %v2612, 1
        %vm2618 = vcmp.gt.s32.totalorder %v2617, 0
        %v2619 = vsel %vm2618, %v2617, 0
        %v2620 = vshrl.u32 %v2619, 5
        %v2621 = vand.u32 %v2619, 31
        %v2622 = vsub.s32 32, %v2621
        %v2623 = vshrl.u32 683565275, %v2622
        %v2624 = vshll.u32 683565275, %v2621
        %v2625 = vshrl.u32 2475754826, %v2622
        %v2626 = vor.u32 %v2624, %v2625
        %v2627 = vshll.u32 2475754826, %v2621
        %v2628 = vshrl.u32 2131351028, %v2622
        %v2629 = vor.u32 %v2627, %v2628
        %v2630 = vshll.u32 2131351028, %v2621
        %v2631 = vshrl.u32 2102212464, %v2622
        %v2632 = vor.u32 %v2630, %v2631
        %v2633 = vshll.u32 2102212464, %v2621
        %v2634 = vshrl.u32 920167782, %v2622
        %v2635 = vor.u32 %v2633, %v2634
        %v2636 = vshll.u32 920167782, %v2621
        %v2637 = vshrl.u32 1326507024, %v2622
        %v2638 = vor.u32 %v2636, %v2637
        %vm2639 = vcmp.lt.s32.totalorder %v2620, 1
        %vm2640 = vcmp.lt.s32.totalorder %v2620, 2
        %vm2641 = vcmp.lt.s32.totalorder %v2620, 3
        %vm2642 = vcmp.lt.s32.totalorder %v2620, 4
        %v2643 = vsel %vm2639, %v2623, %v2626
        %v2644 = vsel %vm2642, %v2632, 2102212464
        %v2645 = vsel %vm2641, %v2629, %v2644
        %v2646 = vsel %vm2640, %v2643, %v2645
        %v2647 = vsel %vm2639, %v2626, %v2629
        %v2648 = vsel %vm2642, %v2635, 920167782
        %v2649 = vsel %vm2641, %v2632, %v2648
        %v2650 = vsel %vm2640, %v2647, %v2649
        %v2651 = vsel %vm2639, %v2629, %v2632
        %v2652 = vsel %vm2642, %v2638, 1326507024
        %v2653 = vsel %vm2641, %v2635, %v2652
        %v2654 = vsel %vm2640, %v2651, %v2653
        %v2655 = vshll.u32 %v2615, 8
        %v2656 = vmul.u32.u64.compose %v2655, %v2654
        %v2657 = vextract.low.u32 %v2656
        %v2658 = vextract.high.u32 %v2656
        %v2659 = vmul.u32.u64.compose %v2655, %v2650
        %v2660 = vextract.low.u32 %v2659
        %v2661 = vextract.high.u32 %v2659
        %v2662 = vmul.u32 %v2655, %v2646
        %v2663 = vadd.s32 %v2658, %v2660
        %vm2664 = vc.u32 %v2658, %v2660
        %v2665 = vadd.s32 %v2661, 1
        %v2666 = vsel %vm2664, %v2665, %v2661
        %v2667 = vadd.s32 %v2662, %v2666
        %v2668 = vadd.s32 %v2667, 536870912
        %v2669 = vshrl.u32 %v2668, 30
        %v2670 = vshll.u32 %v2669, 30
        %v2671 = vsub.s32 %v2667, %v2670
        %vm2672 = vcmp.lt.s32.totalorder %v2671, 0
        %v2673 = vsub.s32 0, %v2671
        %v2674 = vsel %vm2672, %v2673, %v2671
        %v2675 = vclz %v2674
        %v2676 = vsub.s32 %v2675, 2
        %vm2677 = vcmp.gt.s32.totalorder 0, %v2676
        %v2678 = vsel %vm2677, 0, %v2676
        %v2679 = vsub.s32 32, %v2678
        %v2680 = vshll.u32 %v2671, %v2678
        %v2681 = vshrl.u32 %v2663, %v2679
        %v2682 = vor.u32 %v2680, %v2681
        %v2683 = vsub.s32 4294967266, %v2678
        %v2684 = vadd.s32 %v2683, 127
        %v2685 = vshll.u32 %v2684, 23
        %v2686 = vor.u32 4788187, %v2685
        %v2687 = vand.u32 2147483647, %v2686
        %v2689 = vcvt.s32.f32 %v2682
        %v2690 = vmul.f32 %v2689, %v2687
        %v2691 = vxor.u32 %v2690, 2147483648
        %v2692 = vsel %vm2609, %v2691, %v2690
        %v2693 = vsub.s32 4, %v2669
        %v2694 = vsel %vm2609, %v2693, %v2669
        %v2695 = vsel %vm2608, %v1933, %v2692
        %v2696 = vsel %vm2608, 0, %v2694
        %v2697 = vcosq.f32.pop %v2695
        %v2698 = vsinq.f32.pop %v2695
        %vm2699 = vweird.f32 %v1933
        %v2700 = vand.u32 %v2696, 3
        %vm2701 = vcmp.lt.s32.totalorder %v2700, 2
        %vm2702 = vcmp.eq.s32.totalorder %v2700, 0
        %v2703 = vxor.u32 %v2698, 2147483648
        %v2704 = vsel %vm2702, %v2697, %v2703
        %vm2705 = vcmp.eq.s32.totalorder %v2700, 2
        %v2706 = vxor.u32 %v2697, 2147483648
        %v2707 = vsel %vm2705, %v2706, %v2698
        %v2708 = vsel %vm2701, %v2704, %v2707
        %v2709 = vsel %vm2699, nan, %v2708
        %v2710 = vand.u32 2147483647, %v1939
        %vm2711 = vcmp.le.f32.partialorder %v2710, 0.7853982
        %vm2712 = vcmp.lt.s32.totalorder %v1939, 0
        %v2713 = vand.u32 %v1939, 2139095040
        %v2714 = vshrl.u32 %v2713, 23
        %v2715 = vsub.s32 %v2714, 127
        %v2716 = vand.u32 2147483647, %v1939
        %v2717 = vand.u32 %v2716, 8388607
        %v2718 = vor.u32 %v2717, 8388608
        %v2719 = vsub.s32 0, %v2718
        %v2720 = vadd.s32 %v2715, 1
        %vm2721 = vcmp.gt.s32.totalorder %v2720, 0
        %v2722 = vsel %vm2721, %v2720, 0
        %v2723 = vshrl.u32 %v2722, 5
        %v2724 = vand.u32 %v2722, 31
        %v2725 = vsub.s32 32, %v2724
        %v2726 = vshrl.u32 683565275, %v2725
        %v2727 = vshll.u32 683565275, %v2724
        %v2728 = vshrl.u32 2475754826, %v2725
        %v2729 = vor.u32 %v2727, %v2728
        %v2730 = vshll.u32 2475754826, %v2724
        %v2731 = vshrl.u32 2131351028, %v2725
        %v2732 = vor.u32 %v2730, %v2731
        %v2733 = vshll.u32 2131351028, %v2724
        %v2734 = vshrl.u32 2102212464, %v2725
        %v2735 = vor.u32 %v2733, %v2734
        %v2736 = vshll.u32 2102212464, %v2724
        %v2737 = vshrl.u32 920167782, %v2725
        %v2738 = vor.u32 %v2736, %v2737
        %v2739 = vshll.u32 920167782, %v2724
        %v2740 = vshrl.u32 1326507024, %v2725
        %v2741 = vor.u32 %v2739, %v2740
        %vm2742 = vcmp.lt.s32.totalorder %v2723, 1
        %vm2743 = vcmp.lt.s32.totalorder %v2723, 2
        %vm2744 = vcmp.lt.s32.totalorder %v2723, 3
        %vm2745 = vcmp.lt.s32.totalorder %v2723, 4
        %v2746 = vsel %vm2742, %v2726, %v2729
        %v2747 = vsel %vm2745, %v2735, 2102212464
        %v2748 = vsel %vm2744, %v2732, %v2747
        %v2749 = vsel %vm2743, %v2746, %v2748
        %v2750 = vsel %vm2742, %v2729, %v2732
        %v2751 = vsel %vm2745, %v2738, 920167782
        %v2752 = vsel %vm2744, %v2735, %v2751
        %v2753 = vsel %vm2743, %v2750, %v2752
        %v2754 = vsel %vm2742, %v2732, %v2735
        %v2755 = vsel %vm2745, %v2741, 1326507024
        %v2756 = vsel %vm2744, %v2738, %v2755
        %v2757 = vsel %vm2743, %v2754, %v2756
        %v2758 = vshll.u32 %v2718, 8
        %v2759 = vmul.u32.u64.compose %v2758, %v2757
        %v2760 = vextract.low.u32 %v2759
        %v2761 = vextract.high.u32 %v2759
        %v2762 = vmul.u32.u64.compose %v2758, %v2753
        %v2763 = vextract.low.u32 %v2762
        %v2764 = vextract.high.u32 %v2762
        %v2765 = vmul.u32 %v2758, %v2749
        %v2766 = vadd.s32 %v2761, %v2763
        %vm2767 = vc.u32 %v2761, %v2763
        %v2768 = vadd.s32 %v2764, 1
        %v2769 = vsel %vm2767, %v2768, %v2764
        %v2770 = vadd.s32 %v2765, %v2769
        %v2771 = vadd.s32 %v2770, 536870912
        %v2772 = vshrl.u32 %v2771, 30
        %v2773 = vshll.u32 %v2772, 30
        %v2774 = vsub.s32 %v2770, %v2773
        %vm2775 = vcmp.lt.s32.totalorder %v2774, 0
        %v2776 = vsub.s32 0, %v2774
        %v2777 = vsel %vm2775, %v2776, %v2774
        %v2778 = vclz %v2777
        %v2779 = vsub.s32 %v2778, 2
        %vm2780 = vcmp.gt.s32.totalorder 0, %v2779
        %v2781 = vsel %vm2780, 0, %v2779
        %v2782 = vsub.s32 32, %v2781
        %v2783 = vshll.u32 %v2774, %v2781
        %v2784 = vshrl.u32 %v2766, %v2782
        %v2785 = vor.u32 %v2783, %v2784
        %v2786 = vsub.s32 4294967266, %v2781
        %v2787 = vadd.s32 %v2786, 127
        %v2788 = vshll.u32 %v2787, 23
        %v2789 = vor.u32 4788187, %v2788
        %v2790 = vand.u32 2147483647, %v2789
        %v2792 = vcvt.s32.f32 %v2785
        %v2793 = vmul.f32 %v2792, %v2790
        %v2794 = vxor.u32 %v2793, 2147483648
        %v2795 = vsel %vm2712, %v2794, %v2793
        %v2796 = vsub.s32 4, %v2772
        %v2797 = vsel %vm2712, %v2796, %v2772
        %v2798 = vsel %vm2711, %v1939, %v2795
        %v2799 = vsel %vm2711, 0, %v2797
        %v2800 = vcosq.f32.pop %v2798
        %v2801 = vsinq.f32.pop %v2798
        %vm2802 = vweird.f32 %v1939
        %v2803 = vand.u32 %v2799, 3
        %vm2804 = vcmp.lt.s32.totalorder %v2803, 2
        %vm2805 = vcmp.eq.s32.totalorder %v2803, 0
        %v2806 = vxor.u32 %v2801, 2147483648
        %v2807 = vsel %vm2805, %v2800, %v2806
        %vm2808 = vcmp.eq.s32.totalorder %v2803, 2
        %v2809 = vxor.u32 %v2800, 2147483648
        %v2810 = vsel %vm2808, %v2809, %v2801
        %v2811 = vsel %vm2804, %v2807, %v2810
        %v2812 = vsel %vm2802, nan, %v2811
        %v2813 = vand.u32 2147483647, %v1945
        %vm2814 = vcmp.le.f32.partialorder %v2813, 0.7853982
        %vm2815 = vcmp.lt.s32.totalorder %v1945, 0
        %v2816 = vand.u32 %v1945, 2139095040
        %v2817 = vshrl.u32 %v2816, 23
        %v2818 = vsub.s32 %v2817, 127
        %v2819 = vand.u32 2147483647, %v1945
        %v2820 = vand.u32 %v2819, 8388607
        %v2821 = vor.u32 %v2820, 8388608
        %v2822 = vsub.s32 0, %v2821
        %v2823 = vadd.s32 %v2818, 1
        %vm2824 = vcmp.gt.s32.totalorder %v2823, 0
        %v2825 = vsel %vm2824, %v2823, 0
        %v2826 = vshrl.u32 %v2825, 5
        %v2827 = vand.u32 %v2825, 31
        %v2828 = vsub.s32 32, %v2827
        %v2829 = vshrl.u32 683565275, %v2828
        %v2830 = vshll.u32 683565275, %v2827
        %v2831 = vshrl.u32 2475754826, %v2828
        %v2832 = vor.u32 %v2830, %v2831
        %v2833 = vshll.u32 2475754826, %v2827
        %v2834 = vshrl.u32 2131351028, %v2828
        %v2835 = vor.u32 %v2833, %v2834
        %v2836 = vshll.u32 2131351028, %v2827
        %v2837 = vshrl.u32 2102212464, %v2828
        %v2838 = vor.u32 %v2836, %v2837
        %v2839 = vshll.u32 2102212464, %v2827
        %v2840 = vshrl.u32 920167782, %v2828
        %v2841 = vor.u32 %v2839, %v2840
        %v2842 = vshll.u32 920167782, %v2827
        %v2843 = vshrl.u32 1326507024, %v2828
        %v2844 = vor.u32 %v2842, %v2843
        %vm2845 = vcmp.lt.s32.totalorder %v2826, 1
        %vm2846 = vcmp.lt.s32.totalorder %v2826, 2
        %vm2847 = vcmp.lt.s32.totalorder %v2826, 3
        %vm2848 = vcmp.lt.s32.totalorder %v2826, 4
        %v2849 = vsel %vm2845, %v2829, %v2832
        %v2850 = vsel %vm2848, %v2838, 2102212464
        %v2851 = vsel %vm2847, %v2835, %v2850
        %v2852 = vsel %vm2846, %v2849, %v2851
        %v2853 = vsel %vm2845, %v2832, %v2835
        %v2854 = vsel %vm2848, %v2841, 920167782
        %v2855 = vsel %vm2847, %v2838, %v2854
        %v2856 = vsel %vm2846, %v2853, %v2855
        %v2857 = vsel %vm2845, %v2835, %v2838
        %v2858 = vsel %vm2848, %v2844, 1326507024
        %v2859 = vsel %vm2847, %v2841, %v2858
        %v2860 = vsel %vm2846, %v2857, %v2859
        %v2861 = vshll.u32 %v2821, 8
        %v2862 = vmul.u32.u64.compose %v2861, %v2860
        %v2863 = vextract.low.u32 %v2862
        %v2864 = vextract.high.u32 %v2862
        %v2865 = vmul.u32.u64.compose %v2861, %v2856
        %v2866 = vextract.low.u32 %v2865
        %v2867 = vextract.high.u32 %v2865
        %v2868 = vmul.u32 %v2861, %v2852
        %v2869 = vadd.s32 %v2864, %v2866
        %vm2870 = vc.u32 %v2864, %v2866
        %v2871 = vadd.s32 %v2867, 1
        %v2872 = vsel %vm2870, %v2871, %v2867
        %v2873 = vadd.s32 %v2868, %v2872
        %v2874 = vadd.s32 %v2873, 536870912
        %v2875 = vshrl.u32 %v2874, 30
        %v2876 = vshll.u32 %v2875, 30
        %v2877 = vsub.s32 %v2873, %v2876
        %vm2878 = vcmp.lt.s32.totalorder %v2877, 0
        %v2879 = vsub.s32 0, %v2877
        %v2880 = vsel %vm2878, %v2879, %v2877
        %v2881 = vclz %v2880
        %v2882 = vsub.s32 %v2881, 2
        %vm2883 = vcmp.gt.s32.totalorder 0, %v2882
        %v2884 = vsel %vm2883, 0, %v2882
        %v2885 = vsub.s32 32, %v2884
        %v2886 = vshll.u32 %v2877, %v2884
        %v2887 = vshrl.u32 %v2869, %v2885
        %v2888 = vor.u32 %v2886, %v2887
        %v2889 = vsub.s32 4294967266, %v2884
        %v2890 = vadd.s32 %v2889, 127
        %v2891 = vshll.u32 %v2890, 23
        %v2892 = vor.u32 4788187, %v2891
        %v2893 = vand.u32 2147483647, %v2892
        %v2895 = vcvt.s32.f32 %v2888
        %v2896 = vmul.f32 %v2895, %v2893
        %v2897 = vxor.u32 %v2896, 2147483648
        %v2898 = vsel %vm2815, %v2897, %v2896
        %v2899 = vsub.s32 4, %v2875
        %v2900 = vsel %vm2815, %v2899, %v2875
        %v2901 = vsel %vm2814, %v1945, %v2898
        %v2902 = vsel %vm2814, 0, %v2900
        %v2903 = vcosq.f32.pop %v2901
        %v2904 = vsinq.f32.pop %v2901
        %vm2905 = vweird.f32 %v1945
        %v2906 = vand.u32 %v2902, 3
        %vm2907 = vcmp.lt.s32.totalorder %v2906, 2
        %vm2908 = vcmp.eq.s32.totalorder %v2906, 0
        %v2909 = vxor.u32 %v2904, 2147483648
        %v2910 = vsel %vm2908, %v2903, %v2909
        %vm2911 = vcmp.eq.s32.totalorder %v2906, 2
        %v2912 = vxor.u32 %v2903, 2147483648
        %v2913 = vsel %vm2911, %v2912, %v2904
        %v2914 = vsel %vm2907, %v2910, %v2913
        %v2915 = vsel %vm2905, nan, %v2914
        %v2916 = vand.u32 2147483647, %v1951
        %vm2917 = vcmp.le.f32.partialorder %v2916, 0.7853982
        %vm2918 = vcmp.lt.s32.totalorder %v1951, 0
        %v2919 = vand.u32 %v1951, 2139095040
        %v2920 = vshrl.u32 %v2919, 23
        %v2921 = vsub.s32 %v2920, 127
        %v2922 = vand.u32 2147483647, %v1951
        %v2923 = vand.u32 %v2922, 8388607
        %v2924 = vor.u32 %v2923, 8388608
        %v2925 = vsub.s32 0, %v2924
        %v2926 = vadd.s32 %v2921, 1
        %vm2927 = vcmp.gt.s32.totalorder %v2926, 0
        %v2928 = vsel %vm2927, %v2926, 0
        %v2929 = vshrl.u32 %v2928, 5
        %v2930 = vand.u32 %v2928, 31
        %v2931 = vsub.s32 32, %v2930
        %v2932 = vshrl.u32 683565275, %v2931
        %v2933 = vshll.u32 683565275, %v2930
        %v2934 = vshrl.u32 2475754826, %v2931
        %v2935 = vor.u32 %v2933, %v2934
        %v2936 = vshll.u32 2475754826, %v2930
        %v2937 = vshrl.u32 2131351028, %v2931
        %v2938 = vor.u32 %v2936, %v2937
        %v2939 = vshll.u32 2131351028, %v2930
        %v2940 = vshrl.u32 2102212464, %v2931
        %v2941 = vor.u32 %v2939, %v2940
        %v2942 = vshll.u32 2102212464, %v2930
        %v2943 = vshrl.u32 920167782, %v2931
        %v2944 = vor.u32 %v2942, %v2943
        %v2945 = vshll.u32 920167782, %v2930
        %v2946 = vshrl.u32 1326507024, %v2931
        %v2947 = vor.u32 %v2945, %v2946
        %vm2948 = vcmp.lt.s32.totalorder %v2929, 1
        %vm2949 = vcmp.lt.s32.totalorder %v2929, 2
        %vm2950 = vcmp.lt.s32.totalorder %v2929, 3
        %vm2951 = vcmp.lt.s32.totalorder %v2929, 4
        %v2952 = vsel %vm2948, %v2932, %v2935
        %v2953 = vsel %vm2951, %v2941, 2102212464
        %v2954 = vsel %vm2950, %v2938, %v2953
        %v2955 = vsel %vm2949, %v2952, %v2954
        %v2956 = vsel %vm2948, %v2935, %v2938
        %v2957 = vsel %vm2951, %v2944, 920167782
        %v2958 = vsel %vm2950, %v2941, %v2957
        %v2959 = vsel %vm2949, %v2956, %v2958
        %v2960 = vsel %vm2948, %v2938, %v2941
        %v2961 = vsel %vm2951, %v2947, 1326507024
        %v2962 = vsel %vm2950, %v2944, %v2961
        %v2963 = vsel %vm2949, %v2960, %v2962
        %v2964 = vshll.u32 %v2924, 8
        %v2965 = vmul.u32.u64.compose %v2964, %v2963
        %v2966 = vextract.low.u32 %v2965
        %v2967 = vextract.high.u32 %v2965
        %v2968 = vmul.u32.u64.compose %v2964, %v2959
        %v2969 = vextract.low.u32 %v2968
        %v2970 = vextract.high.u32 %v2968
        %v2971 = vmul.u32 %v2964, %v2955
        %v2972 = vadd.s32 %v2967, %v2969
        %vm2973 = vc.u32 %v2967, %v2969
        %v2974 = vadd.s32 %v2970, 1
        %v2975 = vsel %vm2973, %v2974, %v2970
        %v2976 = vadd.s32 %v2971, %v2975
        %v2977 = vadd.s32 %v2976, 536870912
        %v2978 = vshrl.u32 %v2977, 30
        %v2979 = vshll.u32 %v2978, 30
        %v2980 = vsub.s32 %v2976, %v2979
        %vm2981 = vcmp.lt.s32.totalorder %v2980, 0
        %v2982 = vsub.s32 0, %v2980
        %v2983 = vsel %vm2981, %v2982, %v2980
        %v2984 = vclz %v2983
        %v2985 = vsub.s32 %v2984, 2
        %vm2986 = vcmp.gt.s32.totalorder 0, %v2985
        %v2987 = vsel %vm2986, 0, %v2985
        %v2988 = vsub.s32 32, %v2987
        %v2989 = vshll.u32 %v2980, %v2987
        %v2990 = vshrl.u32 %v2972, %v2988
        %v2991 = vor.u32 %v2989, %v2990
        %v2992 = vsub.s32 4294967266, %v2987
        %v2993 = vadd.s32 %v2992, 127
        %v2994 = vshll.u32 %v2993, 23
        %v2995 = vor.u32 4788187, %v2994
        %v2996 = vand.u32 2147483647, %v2995
        %v2998 = vcvt.s32.f32 %v2991
        %v2999 = vmul.f32 %v2998, %v2996
        %v3000 = vxor.u32 %v2999, 2147483648
        %v3001 = vsel %vm2918, %v3000, %v2999
        %v3002 = vsub.s32 4, %v2978
        %v3003 = vsel %vm2918, %v3002, %v2978
        %v3004 = vsel %vm2917, %v1951, %v3001
        %v3005 = vsel %vm2917, 0, %v3003
        %v3006 = vcosq.f32.pop %v3004
        %v3007 = vsinq.f32.pop %v3004
        %vm3008 = vweird.f32 %v1951
        %v3009 = vand.u32 %v3005, 3
        %vm3010 = vcmp.lt.s32.totalorder %v3009, 2
        %vm3011 = vcmp.eq.s32.totalorder %v3009, 0
        %v3012 = vxor.u32 %v3007, 2147483648
        %v3013 = vsel %vm3011, %v3006, %v3012
        %vm3014 = vcmp.eq.s32.totalorder %v3009, 2
        %v3015 = vxor.u32 %v3006, 2147483648
        %v3016 = vsel %vm3014, %v3015, %v3007
        %v3017 = vsel %vm3010, %v3013, %v3016
        %v3018 = vsel %vm3008, nan, %v3017
        %v3019 = vand.u32 2147483647, %v1957
        %vm3020 = vcmp.le.f32.partialorder %v3019, 0.7853982
        %vm3021 = vcmp.lt.s32.totalorder %v1957, 0
        %v3022 = vand.u32 %v1957, 2139095040
        %v3023 = vshrl.u32 %v3022, 23
        %v3024 = vsub.s32 %v3023, 127
        %v3025 = vand.u32 2147483647, %v1957
        %v3026 = vand.u32 %v3025, 8388607
        %v3027 = vor.u32 %v3026, 8388608
        %v3028 = vsub.s32 0, %v3027
        %v3029 = vadd.s32 %v3024, 1
        %vm3030 = vcmp.gt.s32.totalorder %v3029, 0
        %v3031 = vsel %vm3030, %v3029, 0
        %v3032 = vshrl.u32 %v3031, 5
        %v3033 = vand.u32 %v3031, 31
        %v3034 = vsub.s32 32, %v3033
        %v3035 = vshrl.u32 683565275, %v3034
        %v3036 = vshll.u32 683565275, %v3033
        %v3037 = vshrl.u32 2475754826, %v3034
        %v3038 = vor.u32 %v3036, %v3037
        %v3039 = vshll.u32 2475754826, %v3033
        %v3040 = vshrl.u32 2131351028, %v3034
        %v3041 = vor.u32 %v3039, %v3040
        %v3042 = vshll.u32 2131351028, %v3033
        %v3043 = vshrl.u32 2102212464, %v3034
        %v3044 = vor.u32 %v3042, %v3043
        %v3045 = vshll.u32 2102212464, %v3033
        %v3046 = vshrl.u32 920167782, %v3034
        %v3047 = vor.u32 %v3045, %v3046
        %v3048 = vshll.u32 920167782, %v3033
        %v3049 = vshrl.u32 1326507024, %v3034
        %v3050 = vor.u32 %v3048, %v3049
        %vm3051 = vcmp.lt.s32.totalorder %v3032, 1
        %vm3052 = vcmp.lt.s32.totalorder %v3032, 2
        %vm3053 = vcmp.lt.s32.totalorder %v3032, 3
        %vm3054 = vcmp.lt.s32.totalorder %v3032, 4
        %v3055 = vsel %vm3051, %v3035, %v3038
        %v3056 = vsel %vm3054, %v3044, 2102212464
        %v3057 = vsel %vm3053, %v3041, %v3056
        %v3058 = vsel %vm3052, %v3055, %v3057
        %v3059 = vsel %vm3051, %v3038, %v3041
        %v3060 = vsel %vm3054, %v3047, 920167782
        %v3061 = vsel %vm3053, %v3044, %v3060
        %v3062 = vsel %vm3052, %v3059, %v3061
        %v3063 = vsel %vm3051, %v3041, %v3044
        %v3064 = vsel %vm3054, %v3050, 1326507024
        %v3065 = vsel %vm3053, %v3047, %v3064
        %v3066 = vsel %vm3052, %v3063, %v3065
        %v3067 = vshll.u32 %v3027, 8
        %v3068 = vmul.u32.u64.compose %v3067, %v3066
        %v3069 = vextract.low.u32 %v3068
        %v3070 = vextract.high.u32 %v3068
        %v3071 = vmul.u32.u64.compose %v3067, %v3062
        %v3072 = vextract.low.u32 %v3071
        %v3073 = vextract.high.u32 %v3071
        %v3074 = vmul.u32 %v3067, %v3058
        %v3075 = vadd.s32 %v3070, %v3072
        %vm3076 = vc.u32 %v3070, %v3072
        %v3077 = vadd.s32 %v3073, 1
        %v3078 = vsel %vm3076, %v3077, %v3073
        %v3079 = vadd.s32 %v3074, %v3078
        %v3080 = vadd.s32 %v3079, 536870912
        %v3081 = vshrl.u32 %v3080, 30
        %v3082 = vshll.u32 %v3081, 30
        %v3083 = vsub.s32 %v3079, %v3082
        %vm3084 = vcmp.lt.s32.totalorder %v3083, 0
        %v3085 = vsub.s32 0, %v3083
        %v3086 = vsel %vm3084, %v3085, %v3083
        %v3087 = vclz %v3086
        %v3088 = vsub.s32 %v3087, 2
        %vm3089 = vcmp.gt.s32.totalorder 0, %v3088
        %v3090 = vsel %vm3089, 0, %v3088
        %v3091 = vsub.s32 32, %v3090
        %v3092 = vshll.u32 %v3083, %v3090
        %v3093 = vshrl.u32 %v3075, %v3091
        %v3094 = vor.u32 %v3092, %v3093
        %v3095 = vsub.s32 4294967266, %v3090
        %v3096 = vadd.s32 %v3095, 127
        %v3097 = vshll.u32 %v3096, 23
        %v3098 = vor.u32 4788187, %v3097
        %v3099 = vand.u32 2147483647, %v3098
        %v3101 = vcvt.s32.f32 %v3094
        %v3102 = vmul.f32 %v3101, %v3099
        %v3103 = vxor.u32 %v3102, 2147483648
        %v3104 = vsel %vm3021, %v3103, %v3102
        %v3105 = vsub.s32 4, %v3081
        %v3106 = vsel %vm3021, %v3105, %v3081
        %v3107 = vsel %vm3020, %v1957, %v3104
        %v3108 = vsel %vm3020, 0, %v3106
        %v3109 = vcosq.f32.pop %v3107
        %v3110 = vsinq.f32.pop %v3107
        %vm3111 = vweird.f32 %v1957
        %v3112 = vand.u32 %v3108, 3
        %vm3113 = vcmp.lt.s32.totalorder %v3112, 2
        %vm3114 = vcmp.eq.s32.totalorder %v3112, 0
        %v3115 = vxor.u32 %v3110, 2147483648
        %v3116 = vsel %vm3114, %v3109, %v3115
        %vm3117 = vcmp.eq.s32.totalorder %v3112, 2
        %v3118 = vxor.u32 %v3109, 2147483648
        %v3119 = vsel %vm3117, %v3118, %v3110
        %v3120 = vsel %vm3113, %v3116, %v3119
        %v3121 = vsel %vm3111, nan, %v3120
        %v3122 = vand.u32 2147483647, %v1963
        %vm3123 = vcmp.le.f32.partialorder %v3122, 0.7853982
        %vm3124 = vcmp.lt.s32.totalorder %v1963, 0
        %v3125 = vand.u32 %v1963, 2139095040
        %v3126 = vshrl.u32 %v3125, 23
        %v3127 = vsub.s32 %v3126, 127
        %v3128 = vand.u32 2147483647, %v1963
        %v3129 = vand.u32 %v3128, 8388607
        %v3130 = vor.u32 %v3129, 8388608
        %v3131 = vsub.s32 0, %v3130
        %v3132 = vadd.s32 %v3127, 1
        %vm3133 = vcmp.gt.s32.totalorder %v3132, 0
        %v3134 = vsel %vm3133, %v3132, 0
        %v3135 = vshrl.u32 %v3134, 5
        %v3136 = vand.u32 %v3134, 31
        %v3137 = vsub.s32 32, %v3136
        %v3138 = vshrl.u32 683565275, %v3137
        %v3139 = vshll.u32 683565275, %v3136
        %v3140 = vshrl.u32 2475754826, %v3137
        %v3141 = vor.u32 %v3139, %v3140
        %v3142 = vshll.u32 2475754826, %v3136
        %v3143 = vshrl.u32 2131351028, %v3137
        %v3144 = vor.u32 %v3142, %v3143
        %v3145 = vshll.u32 2131351028, %v3136
        %v3146 = vshrl.u32 2102212464, %v3137
        %v3147 = vor.u32 %v3145, %v3146
        %v3148 = vshll.u32 2102212464, %v3136
        %v3149 = vshrl.u32 920167782, %v3137
        %v3150 = vor.u32 %v3148, %v3149
        %v3151 = vshll.u32 920167782, %v3136
        %v3152 = vshrl.u32 1326507024, %v3137
        %v3153 = vor.u32 %v3151, %v3152
        %vm3154 = vcmp.lt.s32.totalorder %v3135, 1
        %vm3155 = vcmp.lt.s32.totalorder %v3135, 2
        %vm3156 = vcmp.lt.s32.totalorder %v3135, 3
        %vm3157 = vcmp.lt.s32.totalorder %v3135, 4
        %v3158 = vsel %vm3154, %v3138, %v3141
        %v3159 = vsel %vm3157, %v3147, 2102212464
        %v3160 = vsel %vm3156, %v3144, %v3159
        %v3161 = vsel %vm3155, %v3158, %v3160
        %v3162 = vsel %vm3154, %v3141, %v3144
        %v3163 = vsel %vm3157, %v3150, 920167782
        %v3164 = vsel %vm3156, %v3147, %v3163
        %v3165 = vsel %vm3155, %v3162, %v3164
        %v3166 = vsel %vm3154, %v3144, %v3147
        %v3167 = vsel %vm3157, %v3153, 1326507024
        %v3168 = vsel %vm3156, %v3150, %v3167
        %v3169 = vsel %vm3155, %v3166, %v3168
        %v3170 = vshll.u32 %v3130, 8
        %v3171 = vmul.u32.u64.compose %v3170, %v3169
        %v3172 = vextract.low.u32 %v3171
        %v3173 = vextract.high.u32 %v3171
        %v3174 = vmul.u32.u64.compose %v3170, %v3165
        %v3175 = vextract.low.u32 %v3174
        %v3176 = vextract.high.u32 %v3174
        %v3177 = vmul.u32 %v3170, %v3161
        %v3178 = vadd.s32 %v3173, %v3175
        %vm3179 = vc.u32 %v3173, %v3175
        %v3180 = vadd.s32 %v3176, 1
        %v3181 = vsel %vm3179, %v3180, %v3176
        %v3182 = vadd.s32 %v3177, %v3181
        %v3183 = vadd.s32 %v3182, 536870912
        %v3184 = vshrl.u32 %v3183, 30
        %v3185 = vshll.u32 %v3184, 30
        %v3186 = vsub.s32 %v3182, %v3185
        %vm3187 = vcmp.lt.s32.totalorder %v3186, 0
        %v3188 = vsub.s32 0, %v3186
        %v3189 = vsel %vm3187, %v3188, %v3186
        %v3190 = vclz %v3189
        %v3191 = vsub.s32 %v3190, 2
        %vm3192 = vcmp.gt.s32.totalorder 0, %v3191
        %v3193 = vsel %vm3192, 0, %v3191
        %v3194 = vsub.s32 32, %v3193
        %v3195 = vshll.u32 %v3186, %v3193
        %v3196 = vshrl.u32 %v3178, %v3194
        %v3197 = vor.u32 %v3195, %v3196
        %v3198 = vsub.s32 4294967266, %v3193
        %v3199 = vadd.s32 %v3198, 127
        %v3200 = vshll.u32 %v3199, 23
        %v3201 = vor.u32 4788187, %v3200
        %v3202 = vand.u32 2147483647, %v3201
        %v3204 = vcvt.s32.f32 %v3197
        %v3205 = vmul.f32 %v3204, %v3202
        %v3206 = vxor.u32 %v3205, 2147483648
        %v3207 = vsel %vm3124, %v3206, %v3205
        %v3208 = vsub.s32 4, %v3184
        %v3209 = vsel %vm3124, %v3208, %v3184
        %v3210 = vsel %vm3123, %v1963, %v3207
        %v3211 = vsel %vm3123, 0, %v3209
        %v3212 = vcosq.f32.pop %v3210
        %v3213 = vsinq.f32.pop %v3210
        %vm3214 = vweird.f32 %v1963
        %v3215 = vand.u32 %v3211, 3
        %vm3216 = vcmp.lt.s32.totalorder %v3215, 2
        %vm3217 = vcmp.eq.s32.totalorder %v3215, 0
        %v3218 = vxor.u32 %v3213, 2147483648
        %v3219 = vsel %vm3217, %v3212, %v3218
        %vm3220 = vcmp.eq.s32.totalorder %v3215, 2
        %v3221 = vxor.u32 %v3212, 2147483648
        %v3222 = vsel %vm3220, %v3221, %v3213
        %v3223 = vsel %vm3216, %v3219, %v3222
        %v3224 = vsel %vm3214, nan, %v3223
        %v3225 = vand.u32 2147483647, %v1969
        %vm3226 = vcmp.le.f32.partialorder %v3225, 0.7853982
        %vm3227 = vcmp.lt.s32.totalorder %v1969, 0
        %v3228 = vand.u32 %v1969, 2139095040
        %v3229 = vshrl.u32 %v3228, 23
        %v3230 = vsub.s32 %v3229, 127
        %v3231 = vand.u32 2147483647, %v1969
        %v3232 = vand.u32 %v3231, 8388607
        %v3233 = vor.u32 %v3232, 8388608
        %v3234 = vsub.s32 0, %v3233
        %v3235 = vadd.s32 %v3230, 1
        %vm3236 = vcmp.gt.s32.totalorder %v3235, 0
        %v3237 = vsel %vm3236, %v3235, 0
        %v3238 = vshrl.u32 %v3237, 5
        %v3239 = vand.u32 %v3237, 31
        %v3240 = vsub.s32 32, %v3239
        %v3241 = vshrl.u32 683565275, %v3240
        %v3242 = vshll.u32 683565275, %v3239
        %v3243 = vshrl.u32 2475754826, %v3240
        %v3244 = vor.u32 %v3242, %v3243
        %v3245 = vshll.u32 2475754826, %v3239
        %v3246 = vshrl.u32 2131351028, %v3240
        %v3247 = vor.u32 %v3245, %v3246
        %v3248 = vshll.u32 2131351028, %v3239
        %v3249 = vshrl.u32 2102212464, %v3240
        %v3250 = vor.u32 %v3248, %v3249
        %v3251 = vshll.u32 2102212464, %v3239
        %v3252 = vshrl.u32 920167782, %v3240
        %v3253 = vor.u32 %v3251, %v3252
        %v3254 = vshll.u32 920167782, %v3239
        %v3255 = vshrl.u32 1326507024, %v3240
        %v3256 = vor.u32 %v3254, %v3255
        %vm3257 = vcmp.lt.s32.totalorder %v3238, 1
        %vm3258 = vcmp.lt.s32.totalorder %v3238, 2
        %vm3259 = vcmp.lt.s32.totalorder %v3238, 3
        %vm3260 = vcmp.lt.s32.totalorder %v3238, 4
        %v3261 = vsel %vm3257, %v3241, %v3244
        %v3262 = vsel %vm3260, %v3250, 2102212464
        %v3263 = vsel %vm3259, %v3247, %v3262
        %v3264 = vsel %vm3258, %v3261, %v3263
        %v3265 = vsel %vm3257, %v3244, %v3247
        %v3266 = vsel %vm3260, %v3253, 920167782
        %v3267 = vsel %vm3259, %v3250, %v3266
        %v3268 = vsel %vm3258, %v3265, %v3267
        %v3269 = vsel %vm3257, %v3247, %v3250
        %v3270 = vsel %vm3260, %v3256, 1326507024
        %v3271 = vsel %vm3259, %v3253, %v3270
        %v3272 = vsel %vm3258, %v3269, %v3271
        %v3273 = vshll.u32 %v3233, 8
        %v3274 = vmul.u32.u64.compose %v3273, %v3272
        %v3275 = vextract.low.u32 %v3274
        %v3276 = vextract.high.u32 %v3274
        %v3277 = vmul.u32.u64.compose %v3273, %v3268
        %v3278 = vextract.low.u32 %v3277
        %v3279 = vextract.high.u32 %v3277
        %v3280 = vmul.u32 %v3273, %v3264
        %v3281 = vadd.s32 %v3276, %v3278
        %vm3282 = vc.u32 %v3276, %v3278
        %v3283 = vadd.s32 %v3279, 1
        %v3284 = vsel %vm3282, %v3283, %v3279
        %v3285 = vadd.s32 %v3280, %v3284
        %v3286 = vadd.s32 %v3285, 536870912
        %v3287 = vshrl.u32 %v3286, 30
        %v3288 = vshll.u32 %v3287, 30
        %v3289 = vsub.s32 %v3285, %v3288
        %vm3290 = vcmp.lt.s32.totalorder %v3289, 0
        %v3291 = vsub.s32 0, %v3289
        %v3292 = vsel %vm3290, %v3291, %v3289
        %v3293 = vclz %v3292
        %v3294 = vsub.s32 %v3293, 2
        %vm3295 = vcmp.gt.s32.totalorder 0, %v3294
        %v3296 = vsel %vm3295, 0, %v3294
        %v3297 = vsub.s32 32, %v3296
        %v3298 = vshll.u32 %v3289, %v3296
        %v3299 = vshrl.u32 %v3281, %v3297
        %v3300 = vor.u32 %v3298, %v3299
        %v3301 = vsub.s32 4294967266, %v3296
        %v3302 = vadd.s32 %v3301, 127
        %v3303 = vshll.u32 %v3302, 23
        %v3304 = vor.u32 4788187, %v3303
        %v3305 = vand.u32 2147483647, %v3304
        %v3307 = vcvt.s32.f32 %v3300
        %v3308 = vmul.f32 %v3307, %v3305
        %v3309 = vxor.u32 %v3308, 2147483648
        %v3310 = vsel %vm3227, %v3309, %v3308
        %v3311 = vsub.s32 4, %v3287
        %v3312 = vsel %vm3227, %v3311, %v3287
        %v3313 = vsel %vm3226, %v1969, %v3310
        %v3314 = vsel %vm3226, 0, %v3312
        %v3315 = vcosq.f32.pop %v3313
        %v3316 = vsinq.f32.pop %v3313
        %vm3317 = vweird.f32 %v1969
        %v3318 = vand.u32 %v3314, 3
        %vm3319 = vcmp.lt.s32.totalorder %v3318, 2
        %vm3320 = vcmp.eq.s32.totalorder %v3318, 0
        %v3321 = vxor.u32 %v3316, 2147483648
        %v3322 = vsel %vm3320, %v3315, %v3321
        %vm3323 = vcmp.eq.s32.totalorder %v3318, 2
        %v3324 = vxor.u32 %v3315, 2147483648
        %v3325 = vsel %vm3323, %v3324, %v3316
        %v3326 = vsel %vm3319, %v3322, %v3325
        %v3327 = vsel %vm3317, nan, %v3326
        %v3328 = vand.u32 2147483647, %v1975
        %vm3329 = vcmp.le.f32.partialorder %v3328, 0.7853982
        %vm3330 = vcmp.lt.s32.totalorder %v1975, 0
        %v3331 = vand.u32 %v1975, 2139095040
        %v3332 = vshrl.u32 %v3331, 23
        %v3333 = vsub.s32 %v3332, 127
        %v3334 = vand.u32 2147483647, %v1975
        %v3335 = vand.u32 %v3334, 8388607
        %v3336 = vor.u32 %v3335, 8388608
        %v3337 = vsub.s32 0, %v3336
        %v3338 = vadd.s32 %v3333, 1
        %vm3339 = vcmp.gt.s32.totalorder %v3338, 0
        %v3340 = vsel %vm3339, %v3338, 0
        %v3341 = vshrl.u32 %v3340, 5
        %v3342 = vand.u32 %v3340, 31
        %v3343 = vsub.s32 32, %v3342
        %v3344 = vshrl.u32 683565275, %v3343
        %v3345 = vshll.u32 683565275, %v3342
        %v3346 = vshrl.u32 2475754826, %v3343
        %v3347 = vor.u32 %v3345, %v3346
        %v3348 = vshll.u32 2475754826, %v3342
        %v3349 = vshrl.u32 2131351028, %v3343
        %v3350 = vor.u32 %v3348, %v3349
        %v3351 = vshll.u32 2131351028, %v3342
        %v3352 = vshrl.u32 2102212464, %v3343
        %v3353 = vor.u32 %v3351, %v3352
        %v3354 = vshll.u32 2102212464, %v3342
        %v3355 = vshrl.u32 920167782, %v3343
        %v3356 = vor.u32 %v3354, %v3355
        %v3357 = vshll.u32 920167782, %v3342
        %v3358 = vshrl.u32 1326507024, %v3343
        %v3359 = vor.u32 %v3357, %v3358
        %vm3360 = vcmp.lt.s32.totalorder %v3341, 1
        %vm3361 = vcmp.lt.s32.totalorder %v3341, 2
        %vm3362 = vcmp.lt.s32.totalorder %v3341, 3
        %vm3363 = vcmp.lt.s32.totalorder %v3341, 4
        %v3364 = vsel %vm3360, %v3344, %v3347
        %v3365 = vsel %vm3363, %v3353, 2102212464
        %v3366 = vsel %vm3362, %v3350, %v3365
        %v3367 = vsel %vm3361, %v3364, %v3366
        %v3368 = vsel %vm3360, %v3347, %v3350
        %v3369 = vsel %vm3363, %v3356, 920167782
        %v3370 = vsel %vm3362, %v3353, %v3369
        %v3371 = vsel %vm3361, %v3368, %v3370
        %v3372 = vsel %vm3360, %v3350, %v3353
        %v3373 = vsel %vm3363, %v3359, 1326507024
        %v3374 = vsel %vm3362, %v3356, %v3373
        %v3375 = vsel %vm3361, %v3372, %v3374
        %v3376 = vshll.u32 %v3336, 8
        %v3377 = vmul.u32.u64.compose %v3376, %v3375
        %v3378 = vextract.low.u32 %v3377
        %v3379 = vextract.high.u32 %v3377
        %v3380 = vmul.u32.u64.compose %v3376, %v3371
        %v3381 = vextract.low.u32 %v3380
        %v3382 = vextract.high.u32 %v3380
        %v3383 = vmul.u32 %v3376, %v3367
        %v3384 = vadd.s32 %v3379, %v3381
        %vm3385 = vc.u32 %v3379, %v3381
        %v3386 = vadd.s32 %v3382, 1
        %v3387 = vsel %vm3385, %v3386, %v3382
        %v3388 = vadd.s32 %v3383, %v3387
        %v3389 = vadd.s32 %v3388, 536870912
        %v3390 = vshrl.u32 %v3389, 30
        %v3391 = vshll.u32 %v3390, 30
        %v3392 = vsub.s32 %v3388, %v3391
        %vm3393 = vcmp.lt.s32.totalorder %v3392, 0
        %v3394 = vsub.s32 0, %v3392
        %v3395 = vsel %vm3393, %v3394, %v3392
        %v3396 = vclz %v3395
        %v3397 = vsub.s32 %v3396, 2
        %vm3398 = vcmp.gt.s32.totalorder 0, %v3397
        %v3399 = vsel %vm3398, 0, %v3397
        %v3400 = vsub.s32 32, %v3399
        %v3401 = vshll.u32 %v3392, %v3399
        %v3402 = vshrl.u32 %v3384, %v3400
        %v3403 = vor.u32 %v3401, %v3402
        %v3404 = vsub.s32 4294967266, %v3399
        %v3405 = vadd.s32 %v3404, 127
        %v3406 = vshll.u32 %v3405, 23
        %v3407 = vor.u32 4788187, %v3406
        %v3408 = vand.u32 2147483647, %v3407
        %v3410 = vcvt.s32.f32 %v3403
        %v3411 = vmul.f32 %v3410, %v3408
        %v3412 = vxor.u32 %v3411, 2147483648
        %v3413 = vsel %vm3330, %v3412, %v3411
        %v3414 = vsub.s32 4, %v3390
        %v3415 = vsel %vm3330, %v3414, %v3390
        %v3416 = vsel %vm3329, %v1975, %v3413
        %v3417 = vsel %vm3329, 0, %v3415
        %v3418 = vcosq.f32.pop %v3416
        %v3419 = vsinq.f32.pop %v3416
        %vm3420 = vweird.f32 %v1975
        %v3421 = vand.u32 %v3417, 3
        %vm3422 = vcmp.lt.s32.totalorder %v3421, 2
        %vm3423 = vcmp.eq.s32.totalorder %v3421, 0
        %v3424 = vxor.u32 %v3419, 2147483648
        %v3425 = vsel %vm3423, %v3418, %v3424
        %vm3426 = vcmp.eq.s32.totalorder %v3421, 2
        %v3427 = vxor.u32 %v3418, 2147483648
        %v3428 = vsel %vm3426, %v3427, %v3419
        %v3429 = vsel %vm3422, %v3425, %v3428
        %v3430 = vsel %vm3420, nan, %v3429
        %v3431 = vand.u32 2147483647, %v1981
        %vm3432 = vcmp.le.f32.partialorder %v3431, 0.7853982
        %vm3433 = vcmp.lt.s32.totalorder %v1981, 0
        %v3434 = vand.u32 %v1981, 2139095040
        %v3435 = vshrl.u32 %v3434, 23
        %v3436 = vsub.s32 %v3435, 127
        %v3437 = vand.u32 2147483647, %v1981
        %v3438 = vand.u32 %v3437, 8388607
        %v3439 = vor.u32 %v3438, 8388608
        %v3440 = vsub.s32 0, %v3439
        %v3441 = vadd.s32 %v3436, 1
        %vm3442 = vcmp.gt.s32.totalorder %v3441, 0
        %v3443 = vsel %vm3442, %v3441, 0
        %v3444 = vshrl.u32 %v3443, 5
        %v3445 = vand.u32 %v3443, 31
        %v3446 = vsub.s32 32, %v3445
        %v3447 = vshrl.u32 683565275, %v3446
        %v3448 = vshll.u32 683565275, %v3445
        %v3449 = vshrl.u32 2475754826, %v3446
        %v3450 = vor.u32 %v3448, %v3449
        %v3451 = vshll.u32 2475754826, %v3445
        %v3452 = vshrl.u32 2131351028, %v3446
        %v3453 = vor.u32 %v3451, %v3452
        %v3454 = vshll.u32 2131351028, %v3445
        %v3455 = vshrl.u32 2102212464, %v3446
        %v3456 = vor.u32 %v3454, %v3455
        %v3457 = vshll.u32 2102212464, %v3445
        %v3458 = vshrl.u32 920167782, %v3446
        %v3459 = vor.u32 %v3457, %v3458
        %v3460 = vshll.u32 920167782, %v3445
        %v3461 = vshrl.u32 1326507024, %v3446
        %v3462 = vor.u32 %v3460, %v3461
        %vm3463 = vcmp.lt.s32.totalorder %v3444, 1
        %vm3464 = vcmp.lt.s32.totalorder %v3444, 2
        %vm3465 = vcmp.lt.s32.totalorder %v3444, 3
        %vm3466 = vcmp.lt.s32.totalorder %v3444, 4
        %v3467 = vsel %vm3463, %v3447, %v3450
        %v3468 = vsel %vm3466, %v3456, 2102212464
        %v3469 = vsel %vm3465, %v3453, %v3468
        %v3470 = vsel %vm3464, %v3467, %v3469
        %v3471 = vsel %vm3463, %v3450, %v3453
        %v3472 = vsel %vm3466, %v3459, 920167782
        %v3473 = vsel %vm3465, %v3456, %v3472
        %v3474 = vsel %vm3464, %v3471, %v3473
        %v3475 = vsel %vm3463, %v3453, %v3456
        %v3476 = vsel %vm3466, %v3462, 1326507024
        %v3477 = vsel %vm3465, %v3459, %v3476
        %v3478 = vsel %vm3464, %v3475, %v3477
        %v3479 = vshll.u32 %v3439, 8
        %v3480 = vmul.u32.u64.compose %v3479, %v3478
        %v3481 = vextract.low.u32 %v3480
        %v3482 = vextract.high.u32 %v3480
        %v3483 = vmul.u32.u64.compose %v3479, %v3474
        %v3484 = vextract.low.u32 %v3483
        %v3485 = vextract.high.u32 %v3483
        %v3486 = vmul.u32 %v3479, %v3470
        %v3487 = vadd.s32 %v3482, %v3484
        %vm3488 = vc.u32 %v3482, %v3484
        %v3489 = vadd.s32 %v3485, 1
        %v3490 = vsel %vm3488, %v3489, %v3485
        %v3491 = vadd.s32 %v3486, %v3490
        %v3492 = vadd.s32 %v3491, 536870912
        %v3493 = vshrl.u32 %v3492, 30
        %v3494 = vshll.u32 %v3493, 30
        %v3495 = vsub.s32 %v3491, %v3494
        %vm3496 = vcmp.lt.s32.totalorder %v3495, 0
        %v3497 = vsub.s32 0, %v3495
        %v3498 = vsel %vm3496, %v3497, %v3495
        %v3499 = vclz %v3498
        %v3500 = vsub.s32 %v3499, 2
        %vm3501 = vcmp.gt.s32.totalorder 0, %v3500
        %v3502 = vsel %vm3501, 0, %v3500
        %v3503 = vsub.s32 32, %v3502
        %v3504 = vshll.u32 %v3495, %v3502
        %v3505 = vshrl.u32 %v3487, %v3503
        %v3506 = vor.u32 %v3504, %v3505
        %v3507 = vsub.s32 4294967266, %v3502
        %v3508 = vadd.s32 %v3507, 127
        %v3509 = vshll.u32 %v3508, 23
        %v3510 = vor.u32 4788187, %v3509
        %v3511 = vand.u32 2147483647, %v3510
        %v3513 = vcvt.s32.f32 %v3506
        %v3514 = vmul.f32 %v3513, %v3511
        %v3515 = vxor.u32 %v3514, 2147483648
        %v3516 = vsel %vm3433, %v3515, %v3514
        %v3517 = vsub.s32 4, %v3493
        %v3518 = vsel %vm3433, %v3517, %v3493
        %v3519 = vsel %vm3432, %v1981, %v3516
        %v3520 = vsel %vm3432, 0, %v3518
        %v3521 = vcosq.f32.pop %v3519
        %v3522 = vsinq.f32.pop %v3519
        %vm3523 = vweird.f32 %v1981
        %v3524 = vand.u32 %v3520, 3
        %vm3525 = vcmp.lt.s32.totalorder %v3524, 2
        %vm3526 = vcmp.eq.s32.totalorder %v3524, 0
        %v3527 = vxor.u32 %v3522, 2147483648
        %v3528 = vsel %vm3526, %v3521, %v3527
        %vm3529 = vcmp.eq.s32.totalorder %v3524, 2
        %v3530 = vxor.u32 %v3521, 2147483648
        %v3531 = vsel %vm3529, %v3530, %v3522
        %v3532 = vsel %vm3525, %v3528, %v3531
        %v3533 = vsel %vm3523, nan, %v3532
        %v3534 = vand.u32 2147483647, %v1987
        %vm3535 = vcmp.le.f32.partialorder %v3534, 0.7853982
        %vm3536 = vcmp.lt.s32.totalorder %v1987, 0
        %v3537 = vand.u32 %v1987, 2139095040
        %v3538 = vshrl.u32 %v3537, 23
        %v3539 = vsub.s32 %v3538, 127
        %v3540 = vand.u32 2147483647, %v1987
        %v3541 = vand.u32 %v3540, 8388607
        %v3542 = vor.u32 %v3541, 8388608
        %v3543 = vsub.s32 0, %v3542
        %v3544 = vadd.s32 %v3539, 1
        %vm3545 = vcmp.gt.s32.totalorder %v3544, 0
        %v3546 = vsel %vm3545, %v3544, 0
        %v3547 = vshrl.u32 %v3546, 5
        %v3548 = vand.u32 %v3546, 31
        %v3549 = vsub.s32 32, %v3548
        %v3550 = vshrl.u32 683565275, %v3549
        %v3551 = vshll.u32 683565275, %v3548
        %v3552 = vshrl.u32 2475754826, %v3549
        %v3553 = vor.u32 %v3551, %v3552
        %v3554 = vshll.u32 2475754826, %v3548
        %v3555 = vshrl.u32 2131351028, %v3549
        %v3556 = vor.u32 %v3554, %v3555
        %v3557 = vshll.u32 2131351028, %v3548
        %v3558 = vshrl.u32 2102212464, %v3549
        %v3559 = vor.u32 %v3557, %v3558
        %v3560 = vshll.u32 2102212464, %v3548
        %v3561 = vshrl.u32 920167782, %v3549
        %v3562 = vor.u32 %v3560, %v3561
        %v3563 = vshll.u32 920167782, %v3548
        %v3564 = vshrl.u32 1326507024, %v3549
        %v3565 = vor.u32 %v3563, %v3564
        %vm3566 = vcmp.lt.s32.totalorder %v3547, 1
        %vm3567 = vcmp.lt.s32.totalorder %v3547, 2
        %vm3568 = vcmp.lt.s32.totalorder %v3547, 3
        %vm3569 = vcmp.lt.s32.totalorder %v3547, 4
        %v3570 = vsel %vm3566, %v3550, %v3553
        %v3571 = vsel %vm3569, %v3559, 2102212464
        %v3572 = vsel %vm3568, %v3556, %v3571
        %v3573 = vsel %vm3567, %v3570, %v3572
        %v3574 = vsel %vm3566, %v3553, %v3556
        %v3575 = vsel %vm3569, %v3562, 920167782
        %v3576 = vsel %vm3568, %v3559, %v3575
        %v3577 = vsel %vm3567, %v3574, %v3576
        %v3578 = vsel %vm3566, %v3556, %v3559
        %v3579 = vsel %vm3569, %v3565, 1326507024
        %v3580 = vsel %vm3568, %v3562, %v3579
        %v3581 = vsel %vm3567, %v3578, %v3580
        %v3582 = vshll.u32 %v3542, 8
        %v3583 = vmul.u32.u64.compose %v3582, %v3581
        %v3584 = vextract.low.u32 %v3583
        %v3585 = vextract.high.u32 %v3583
        %v3586 = vmul.u32.u64.compose %v3582, %v3577
        %v3587 = vextract.low.u32 %v3586
        %v3588 = vextract.high.u32 %v3586
        %v3589 = vmul.u32 %v3582, %v3573
        %v3590 = vadd.s32 %v3585, %v3587
        %vm3591 = vc.u32 %v3585, %v3587
        %v3592 = vadd.s32 %v3588, 1
        %v3593 = vsel %vm3591, %v3592, %v3588
        %v3594 = vadd.s32 %v3589, %v3593
        %v3595 = vadd.s32 %v3594, 536870912
        %v3596 = vshrl.u32 %v3595, 30
        %v3597 = vshll.u32 %v3596, 30
        %v3598 = vsub.s32 %v3594, %v3597
        %vm3599 = vcmp.lt.s32.totalorder %v3598, 0
        %v3600 = vsub.s32 0, %v3598
        %v3601 = vsel %vm3599, %v3600, %v3598
        %v3602 = vclz %v3601
        %v3603 = vsub.s32 %v3602, 2
        %vm3604 = vcmp.gt.s32.totalorder 0, %v3603
        %v3605 = vsel %vm3604, 0, %v3603
        %v3606 = vsub.s32 32, %v3605
        %v3607 = vshll.u32 %v3598, %v3605
        %v3608 = vshrl.u32 %v3590, %v3606
        %v3609 = vor.u32 %v3607, %v3608
        %v3610 = vsub.s32 4294967266, %v3605
        %v3611 = vadd.s32 %v3610, 127
        %v3612 = vshll.u32 %v3611, 23
        %v3613 = vor.u32 4788187, %v3612
        %v3614 = vand.u32 2147483647, %v3613
        %v3616 = vcvt.s32.f32 %v3609
        %v3617 = vmul.f32 %v3616, %v3614
        %v3618 = vxor.u32 %v3617, 2147483648
        %v3619 = vsel %vm3536, %v3618, %v3617
        %v3620 = vsub.s32 4, %v3596
        %v3621 = vsel %vm3536, %v3620, %v3596
        %v3622 = vsel %vm3535, %v1987, %v3619
        %v3623 = vsel %vm3535, 0, %v3621
        %v3624 = vcosq.f32.pop %v3622
        %v3625 = vsinq.f32.pop %v3622
        %vm3626 = vweird.f32 %v1987
        %v3627 = vand.u32 %v3623, 3
        %vm3628 = vcmp.lt.s32.totalorder %v3627, 2
        %vm3629 = vcmp.eq.s32.totalorder %v3627, 0
        %v3630 = vxor.u32 %v3625, 2147483648
        %v3631 = vsel %vm3629, %v3624, %v3630
        %vm3632 = vcmp.eq.s32.totalorder %v3627, 2
        %v3633 = vxor.u32 %v3624, 2147483648
        %v3634 = vsel %vm3632, %v3633, %v3625
        %v3635 = vsel %vm3628, %v3631, %v3634
        %v3636 = vsel %vm3626, nan, %v3635
        %v3637 = vand.u32 2147483647, %v1993
        %vm3638 = vcmp.le.f32.partialorder %v3637, 0.7853982
        %vm3639 = vcmp.lt.s32.totalorder %v1993, 0
        %v3640 = vand.u32 %v1993, 2139095040
        %v3641 = vshrl.u32 %v3640, 23
        %v3642 = vsub.s32 %v3641, 127
        %v3643 = vand.u32 2147483647, %v1993
        %v3644 = vand.u32 %v3643, 8388607
        %v3645 = vor.u32 %v3644, 8388608
        %v3646 = vsub.s32 0, %v3645
        %v3647 = vadd.s32 %v3642, 1
        %vm3648 = vcmp.gt.s32.totalorder %v3647, 0
        %v3649 = vsel %vm3648, %v3647, 0
        %v3650 = vshrl.u32 %v3649, 5
        %v3651 = vand.u32 %v3649, 31
        %v3652 = vsub.s32 32, %v3651
        %v3653 = vshrl.u32 683565275, %v3652
        %v3654 = vshll.u32 683565275, %v3651
        %v3655 = vshrl.u32 2475754826, %v3652
        %v3656 = vor.u32 %v3654, %v3655
        %v3657 = vshll.u32 2475754826, %v3651
        %v3658 = vshrl.u32 2131351028, %v3652
        %v3659 = vor.u32 %v3657, %v3658
        %v3660 = vshll.u32 2131351028, %v3651
        %v3661 = vshrl.u32 2102212464, %v3652
        %v3662 = vor.u32 %v3660, %v3661
        %v3663 = vshll.u32 2102212464, %v3651
        %v3664 = vshrl.u32 920167782, %v3652
        %v3665 = vor.u32 %v3663, %v3664
        %v3666 = vshll.u32 920167782, %v3651
        %v3667 = vshrl.u32 1326507024, %v3652
        %v3668 = vor.u32 %v3666, %v3667
        %vm3669 = vcmp.lt.s32.totalorder %v3650, 1
        %vm3670 = vcmp.lt.s32.totalorder %v3650, 2
        %vm3671 = vcmp.lt.s32.totalorder %v3650, 3
        %vm3672 = vcmp.lt.s32.totalorder %v3650, 4
        %v3673 = vsel %vm3669, %v3653, %v3656
        %v3674 = vsel %vm3672, %v3662, 2102212464
        %v3675 = vsel %vm3671, %v3659, %v3674
        %v3676 = vsel %vm3670, %v3673, %v3675
        %v3677 = vsel %vm3669, %v3656, %v3659
        %v3678 = vsel %vm3672, %v3665, 920167782
        %v3679 = vsel %vm3671, %v3662, %v3678
        %v3680 = vsel %vm3670, %v3677, %v3679
        %v3681 = vsel %vm3669, %v3659, %v3662
        %v3682 = vsel %vm3672, %v3668, 1326507024
        %v3683 = vsel %vm3671, %v3665, %v3682
        %v3684 = vsel %vm3670, %v3681, %v3683
        %v3685 = vshll.u32 %v3645, 8
        %v3686 = vmul.u32.u64.compose %v3685, %v3684
        %v3687 = vextract.low.u32 %v3686
        %v3688 = vextract.high.u32 %v3686
        %v3689 = vmul.u32.u64.compose %v3685, %v3680
        %v3690 = vextract.low.u32 %v3689
        %v3691 = vextract.high.u32 %v3689
        %v3692 = vmul.u32 %v3685, %v3676
        %v3693 = vadd.s32 %v3688, %v3690
        %vm3694 = vc.u32 %v3688, %v3690
        %v3695 = vadd.s32 %v3691, 1
        %v3696 = vsel %vm3694, %v3695, %v3691
        %v3697 = vadd.s32 %v3692, %v3696
        %v3698 = vadd.s32 %v3697, 536870912
        %v3699 = vshrl.u32 %v3698, 30
        %v3700 = vshll.u32 %v3699, 30
        %v3701 = vsub.s32 %v3697, %v3700
        %vm3702 = vcmp.lt.s32.totalorder %v3701, 0
        %v3703 = vsub.s32 0, %v3701
        %v3704 = vsel %vm3702, %v3703, %v3701
        %v3705 = vclz %v3704
        %v3706 = vsub.s32 %v3705, 2
        %vm3707 = vcmp.gt.s32.totalorder 0, %v3706
        %v3708 = vsel %vm3707, 0, %v3706
        %v3709 = vsub.s32 32, %v3708
        %v3710 = vshll.u32 %v3701, %v3708
        %v3711 = vshrl.u32 %v3693, %v3709
        %v3712 = vor.u32 %v3710, %v3711
        %v3713 = vsub.s32 4294967266, %v3708
        %v3714 = vadd.s32 %v3713, 127
        %v3715 = vshll.u32 %v3714, 23
        %v3716 = vor.u32 4788187, %v3715
        %v3717 = vand.u32 2147483647, %v3716
        %v3719 = vcvt.s32.f32 %v3712
        %v3720 = vmul.f32 %v3719, %v3717
        %v3721 = vxor.u32 %v3720, 2147483648
        %v3722 = vsel %vm3639, %v3721, %v3720
        %v3723 = vsub.s32 4, %v3699
        %v3724 = vsel %vm3639, %v3723, %v3699
        %v3725 = vsel %vm3638, %v1993, %v3722
        %v3726 = vsel %vm3638, 0, %v3724
        %v3727 = vcosq.f32.pop %v3725
        %v3728 = vsinq.f32.pop %v3725
        %vm3729 = vweird.f32 %v1993
        %v3730 = vand.u32 %v3726, 3
        %vm3731 = vcmp.lt.s32.totalorder %v3730, 2
        %vm3732 = vcmp.eq.s32.totalorder %v3730, 0
        %v3733 = vxor.u32 %v3728, 2147483648
        %v3734 = vsel %vm3732, %v3727, %v3733
        %vm3735 = vcmp.eq.s32.totalorder %v3730, 2
        %v3736 = vxor.u32 %v3727, 2147483648
        %v3737 = vsel %vm3735, %v3736, %v3728
        %v3738 = vsel %vm3731, %v3734, %v3737
        %v3739 = vsel %vm3729, nan, %v3738
        %v3740 = vand.u32 2147483647, %v1999
        %vm3741 = vcmp.le.f32.partialorder %v3740, 0.7853982
        %vm3742 = vcmp.lt.s32.totalorder %v1999, 0
        %v3743 = vand.u32 %v1999, 2139095040
        %v3744 = vshrl.u32 %v3743, 23
        %v3745 = vsub.s32 %v3744, 127
        %v3746 = vand.u32 2147483647, %v1999
        %v3747 = vand.u32 %v3746, 8388607
        %v3748 = vor.u32 %v3747, 8388608
        %v3749 = vsub.s32 0, %v3748
        %v3750 = vadd.s32 %v3745, 1
        %vm3751 = vcmp.gt.s32.totalorder %v3750, 0
        %v3752 = vsel %vm3751, %v3750, 0
        %v3753 = vshrl.u32 %v3752, 5
        %v3754 = vand.u32 %v3752, 31
        %v3755 = vsub.s32 32, %v3754
        %v3756 = vshrl.u32 683565275, %v3755
        %v3757 = vshll.u32 683565275, %v3754
        %v3758 = vshrl.u32 2475754826, %v3755
        %v3759 = vor.u32 %v3757, %v3758
        %v3760 = vshll.u32 2475754826, %v3754
        %v3761 = vshrl.u32 2131351028, %v3755
        %v3762 = vor.u32 %v3760, %v3761
        %v3763 = vshll.u32 2131351028, %v3754
        %v3764 = vshrl.u32 2102212464, %v3755
        %v3765 = vor.u32 %v3763, %v3764
        %v3766 = vshll.u32 2102212464, %v3754
        %v3767 = vshrl.u32 920167782, %v3755
        %v3768 = vor.u32 %v3766, %v3767
        %v3769 = vshll.u32 920167782, %v3754
        %v3770 = vshrl.u32 1326507024, %v3755
        %v3771 = vor.u32 %v3769, %v3770
        %vm3772 = vcmp.lt.s32.totalorder %v3753, 1
        %vm3773 = vcmp.lt.s32.totalorder %v3753, 2
        %vm3774 = vcmp.lt.s32.totalorder %v3753, 3
        %vm3775 = vcmp.lt.s32.totalorder %v3753, 4
        %v3776 = vsel %vm3772, %v3756, %v3759
        %v3777 = vsel %vm3775, %v3765, 2102212464
        %v3778 = vsel %vm3774, %v3762, %v3777
        %v3779 = vsel %vm3773, %v3776, %v3778
        %v3780 = vsel %vm3772, %v3759, %v3762
        %v3781 = vsel %vm3775, %v3768, 920167782
        %v3782 = vsel %vm3774, %v3765, %v3781
        %v3783 = vsel %vm3773, %v3780, %v3782
        %v3784 = vsel %vm3772, %v3762, %v3765
        %v3785 = vsel %vm3775, %v3771, 1326507024
        %v3786 = vsel %vm3774, %v3768, %v3785
        %v3787 = vsel %vm3773, %v3784, %v3786
        %v3788 = vshll.u32 %v3748, 8
        %v3789 = vmul.u32.u64.compose %v3788, %v3787
        %v3790 = vextract.low.u32 %v3789
        %v3791 = vextract.high.u32 %v3789
        %v3792 = vmul.u32.u64.compose %v3788, %v3783
        %v3793 = vextract.low.u32 %v3792
        %v3794 = vextract.high.u32 %v3792
        %v3795 = vmul.u32 %v3788, %v3779
        %v3796 = vadd.s32 %v3791, %v3793
        %vm3797 = vc.u32 %v3791, %v3793
        %v3798 = vadd.s32 %v3794, 1
        %v3799 = vsel %vm3797, %v3798, %v3794
        %v3800 = vadd.s32 %v3795, %v3799
        %v3801 = vadd.s32 %v3800, 536870912
        %v3802 = vshrl.u32 %v3801, 30
        %v3803 = vshll.u32 %v3802, 30
        %v3804 = vsub.s32 %v3800, %v3803
        %vm3805 = vcmp.lt.s32.totalorder %v3804, 0
        %v3806 = vsub.s32 0, %v3804
        %v3807 = vsel %vm3805, %v3806, %v3804
        %v3808 = vclz %v3807
        %v3809 = vsub.s32 %v3808, 2
        %vm3810 = vcmp.gt.s32.totalorder 0, %v3809
        %v3811 = vsel %vm3810, 0, %v3809
        %v3812 = vsub.s32 32, %v3811
        %v3813 = vshll.u32 %v3804, %v3811
        %v3814 = vshrl.u32 %v3796, %v3812
        %v3815 = vor.u32 %v3813, %v3814
        %v3816 = vsub.s32 4294967266, %v3811
        %v3817 = vadd.s32 %v3816, 127
        %v3818 = vshll.u32 %v3817, 23
        %v3819 = vor.u32 4788187, %v3818
        %v3820 = vand.u32 2147483647, %v3819
        %v3822 = vcvt.s32.f32 %v3815
        %v3823 = vmul.f32 %v3822, %v3820
        %v3824 = vxor.u32 %v3823, 2147483648
        %v3825 = vsel %vm3742, %v3824, %v3823
        %v3826 = vsub.s32 4, %v3802
        %v3827 = vsel %vm3742, %v3826, %v3802
        %v3828 = vsel %vm3741, %v1999, %v3825
        %v3829 = vsel %vm3741, 0, %v3827
        %v3830 = vcosq.f32.pop %v3828
        %v3831 = vsinq.f32.pop %v3828
        %vm3832 = vweird.f32 %v1999
        %v3833 = vand.u32 %v3829, 3
        %vm3834 = vcmp.lt.s32.totalorder %v3833, 2
        %vm3835 = vcmp.eq.s32.totalorder %v3833, 0
        %v3836 = vxor.u32 %v3831, 2147483648
        %v3837 = vsel %vm3835, %v3830, %v3836
        %vm3838 = vcmp.eq.s32.totalorder %v3833, 2
        %v3839 = vxor.u32 %v3830, 2147483648
        %v3840 = vsel %vm3838, %v3839, %v3831
        %v3841 = vsel %vm3834, %v3837, %v3840
        %v3842 = vsel %vm3832, nan, %v3841
        %v3843 = vand.u32 2147483647, %v2005
        %vm3844 = vcmp.le.f32.partialorder %v3843, 0.7853982
        %vm3845 = vcmp.lt.s32.totalorder %v2005, 0
        %v3846 = vand.u32 %v2005, 2139095040
        %v3847 = vshrl.u32 %v3846, 23
        %v3848 = vsub.s32 %v3847, 127
        %v3849 = vand.u32 2147483647, %v2005
        %v3850 = vand.u32 %v3849, 8388607
        %v3851 = vor.u32 %v3850, 8388608
        %v3852 = vsub.s32 0, %v3851
        %v3853 = vadd.s32 %v3848, 1
        %vm3854 = vcmp.gt.s32.totalorder %v3853, 0
        %v3855 = vsel %vm3854, %v3853, 0
        %v3856 = vshrl.u32 %v3855, 5
        %v3857 = vand.u32 %v3855, 31
        %v3858 = vsub.s32 32, %v3857
        %v3859 = vshrl.u32 683565275, %v3858
        %v3860 = vshll.u32 683565275, %v3857
        %v3861 = vshrl.u32 2475754826, %v3858
        %v3862 = vor.u32 %v3860, %v3861
        %v3863 = vshll.u32 2475754826, %v3857
        %v3864 = vshrl.u32 2131351028, %v3858
        %v3865 = vor.u32 %v3863, %v3864
        %v3866 = vshll.u32 2131351028, %v3857
        %v3867 = vshrl.u32 2102212464, %v3858
        %v3868 = vor.u32 %v3866, %v3867
        %v3869 = vshll.u32 2102212464, %v3857
        %v3870 = vshrl.u32 920167782, %v3858
        %v3871 = vor.u32 %v3869, %v3870
        %v3872 = vshll.u32 920167782, %v3857
        %v3873 = vshrl.u32 1326507024, %v3858
        %v3874 = vor.u32 %v3872, %v3873
        %vm3875 = vcmp.lt.s32.totalorder %v3856, 1
        %vm3876 = vcmp.lt.s32.totalorder %v3856, 2
        %vm3877 = vcmp.lt.s32.totalorder %v3856, 3
        %vm3878 = vcmp.lt.s32.totalorder %v3856, 4
        %v3879 = vsel %vm3875, %v3859, %v3862
        %v3880 = vsel %vm3878, %v3868, 2102212464
        %v3881 = vsel %vm3877, %v3865, %v3880
        %v3882 = vsel %vm3876, %v3879, %v3881
        %v3883 = vsel %vm3875, %v3862, %v3865
        %v3884 = vsel %vm3878, %v3871, 920167782
        %v3885 = vsel %vm3877, %v3868, %v3884
        %v3886 = vsel %vm3876, %v3883, %v3885
        %v3887 = vsel %vm3875, %v3865, %v3868
        %v3888 = vsel %vm3878, %v3874, 1326507024
        %v3889 = vsel %vm3877, %v3871, %v3888
        %v3890 = vsel %vm3876, %v3887, %v3889
        %v3891 = vshll.u32 %v3851, 8
        %v3892 = vmul.u32.u64.compose %v3891, %v3890
        %v3893 = vextract.low.u32 %v3892
        %v3894 = vextract.high.u32 %v3892
        %v3895 = vmul.u32.u64.compose %v3891, %v3886
        %v3896 = vextract.low.u32 %v3895
        %v3897 = vextract.high.u32 %v3895
        %v3898 = vmul.u32 %v3891, %v3882
        %v3899 = vadd.s32 %v3894, %v3896
        %vm3900 = vc.u32 %v3894, %v3896
        %v3901 = vadd.s32 %v3897, 1
        %v3902 = vsel %vm3900, %v3901, %v3897
        %v3903 = vadd.s32 %v3898, %v3902
        %v3904 = vadd.s32 %v3903, 536870912
        %v3905 = vshrl.u32 %v3904, 30
        %v3906 = vshll.u32 %v3905, 30
        %v3907 = vsub.s32 %v3903, %v3906
        %vm3908 = vcmp.lt.s32.totalorder %v3907, 0
        %v3909 = vsub.s32 0, %v3907
        %v3910 = vsel %vm3908, %v3909, %v3907
        %v3911 = vclz %v3910
        %v3912 = vsub.s32 %v3911, 2
        %vm3913 = vcmp.gt.s32.totalorder 0, %v3912
        %v3914 = vsel %vm3913, 0, %v3912
        %v3915 = vsub.s32 32, %v3914
        %v3916 = vshll.u32 %v3907, %v3914
        %v3917 = vshrl.u32 %v3899, %v3915
        %v3918 = vor.u32 %v3916, %v3917
        %v3919 = vsub.s32 4294967266, %v3914
        %v3920 = vadd.s32 %v3919, 127
        %v3921 = vshll.u32 %v3920, 23
        %v3922 = vor.u32 4788187, %v3921
        %v3923 = vand.u32 2147483647, %v3922
        %v3925 = vcvt.s32.f32 %v3918
        %v3926 = vmul.f32 %v3925, %v3923
        %v3927 = vxor.u32 %v3926, 2147483648
        %v3928 = vsel %vm3845, %v3927, %v3926
        %v3929 = vsub.s32 4, %v3905
        %v3930 = vsel %vm3845, %v3929, %v3905
        %v3931 = vsel %vm3844, %v2005, %v3928
        %v3932 = vsel %vm3844, 0, %v3930
        %v3933 = vcosq.f32.pop %v3931
        %v3934 = vsinq.f32.pop %v3931
        %vm3935 = vweird.f32 %v2005
        %v3936 = vand.u32 %v3932, 3
        %vm3937 = vcmp.lt.s32.totalorder %v3936, 2
        %vm3938 = vcmp.eq.s32.totalorder %v3936, 0
        %v3939 = vxor.u32 %v3934, 2147483648
        %v3940 = vsel %vm3938, %v3933, %v3939
        %vm3941 = vcmp.eq.s32.totalorder %v3936, 2
        %v3942 = vxor.u32 %v3933, 2147483648
        %v3943 = vsel %vm3941, %v3942, %v3934
        %v3944 = vsel %vm3937, %v3940, %v3943
        %v3945 = vsel %vm3935, nan, %v3944
        %v3946 = vand.u32 2147483647, %v2011
        %vm3947 = vcmp.le.f32.partialorder %v3946, 0.7853982
        %vm3948 = vcmp.lt.s32.totalorder %v2011, 0
        %v3949 = vand.u32 %v2011, 2139095040
        %v3950 = vshrl.u32 %v3949, 23
        %v3951 = vsub.s32 %v3950, 127
        %v3952 = vand.u32 2147483647, %v2011
        %v3953 = vand.u32 %v3952, 8388607
        %v3954 = vor.u32 %v3953, 8388608
        %v3955 = vsub.s32 0, %v3954
        %v3956 = vadd.s32 %v3951, 1
        %vm3957 = vcmp.gt.s32.totalorder %v3956, 0
        %v3958 = vsel %vm3957, %v3956, 0
        %v3959 = vshrl.u32 %v3958, 5
        %v3960 = vand.u32 %v3958, 31
        %v3961 = vsub.s32 32, %v3960
        %v3962 = vshrl.u32 683565275, %v3961
        %v3963 = vshll.u32 683565275, %v3960
        %v3964 = vshrl.u32 2475754826, %v3961
        %v3965 = vor.u32 %v3963, %v3964
        %v3966 = vshll.u32 2475754826, %v3960
        %v3967 = vshrl.u32 2131351028, %v3961
        %v3968 = vor.u32 %v3966, %v3967
        %v3969 = vshll.u32 2131351028, %v3960
        %v3970 = vshrl.u32 2102212464, %v3961
        %v3971 = vor.u32 %v3969, %v3970
        %v3972 = vshll.u32 2102212464, %v3960
        %v3973 = vshrl.u32 920167782, %v3961
        %v3974 = vor.u32 %v3972, %v3973
        %v3975 = vshll.u32 920167782, %v3960
        %v3976 = vshrl.u32 1326507024, %v3961
        %v3977 = vor.u32 %v3975, %v3976
        %vm3978 = vcmp.lt.s32.totalorder %v3959, 1
        %vm3979 = vcmp.lt.s32.totalorder %v3959, 2
        %vm3980 = vcmp.lt.s32.totalorder %v3959, 3
        %vm3981 = vcmp.lt.s32.totalorder %v3959, 4
        %v3982 = vsel %vm3978, %v3962, %v3965
        %v3983 = vsel %vm3981, %v3971, 2102212464
        %v3984 = vsel %vm3980, %v3968, %v3983
        %v3985 = vsel %vm3979, %v3982, %v3984
        %v3986 = vsel %vm3978, %v3965, %v3968
        %v3987 = vsel %vm3981, %v3974, 920167782
        %v3988 = vsel %vm3980, %v3971, %v3987
        %v3989 = vsel %vm3979, %v3986, %v3988
        %v3990 = vsel %vm3978, %v3968, %v3971
        %v3991 = vsel %vm3981, %v3977, 1326507024
        %v3992 = vsel %vm3980, %v3974, %v3991
        %v3993 = vsel %vm3979, %v3990, %v3992
        %v3994 = vshll.u32 %v3954, 8
        %v3995 = vmul.u32.u64.compose %v3994, %v3993
        %v3996 = vextract.low.u32 %v3995
        %v3997 = vextract.high.u32 %v3995
        %v3998 = vmul.u32.u64.compose %v3994, %v3989
        %v3999 = vextract.low.u32 %v3998
        %v4000 = vextract.high.u32 %v3998
        %v4001 = vmul.u32 %v3994, %v3985
        %v4002 = vadd.s32 %v3997, %v3999
        %vm4003 = vc.u32 %v3997, %v3999
        %v4004 = vadd.s32 %v4000, 1
        %v4005 = vsel %vm4003, %v4004, %v4000
        %v4006 = vadd.s32 %v4001, %v4005
        %v4007 = vadd.s32 %v4006, 536870912
        %v4008 = vshrl.u32 %v4007, 30
        %v4009 = vshll.u32 %v4008, 30
        %v4010 = vsub.s32 %v4006, %v4009
        %vm4011 = vcmp.lt.s32.totalorder %v4010, 0
        %v4012 = vsub.s32 0, %v4010
        %v4013 = vsel %vm4011, %v4012, %v4010
        %v4014 = vclz %v4013
        %v4015 = vsub.s32 %v4014, 2
        %vm4016 = vcmp.gt.s32.totalorder 0, %v4015
        %v4017 = vsel %vm4016, 0, %v4015
        %v4018 = vsub.s32 32, %v4017
        %v4019 = vshll.u32 %v4010, %v4017
        %v4020 = vshrl.u32 %v4002, %v4018
        %v4021 = vor.u32 %v4019, %v4020
        %v4022 = vsub.s32 4294967266, %v4017
        %v4023 = vadd.s32 %v4022, 127
        %v4024 = vshll.u32 %v4023, 23
        %v4025 = vor.u32 4788187, %v4024
        %v4026 = vand.u32 2147483647, %v4025
        %v4028 = vcvt.s32.f32 %v4021
        %v4029 = vmul.f32 %v4028, %v4026
        %v4030 = vxor.u32 %v4029, 2147483648
        %v4031 = vsel %vm3948, %v4030, %v4029
        %v4032 = vsub.s32 4, %v4008
        %v4033 = vsel %vm3948, %v4032, %v4008
        %v4034 = vsel %vm3947, %v2011, %v4031
        %v4035 = vsel %vm3947, 0, %v4033
        %v4036 = vcosq.f32.pop %v4034
        %v4037 = vsinq.f32.pop %v4034
        %vm4038 = vweird.f32 %v2011
        %v4039 = vand.u32 %v4035, 3
        %vm4040 = vcmp.lt.s32.totalorder %v4039, 2
        %vm4041 = vcmp.eq.s32.totalorder %v4039, 0
        %v4042 = vxor.u32 %v4037, 2147483648
        %v4043 = vsel %vm4041, %v4036, %v4042
        %vm4044 = vcmp.eq.s32.totalorder %v4039, 2
        %v4045 = vxor.u32 %v4036, 2147483648
        %v4046 = vsel %vm4044, %v4045, %v4037
        %v4047 = vsel %vm4040, %v4043, %v4046
        %v4048 = vsel %vm4038, nan, %v4047
        %v4049 = vand.u32 2147483647, %v2017
        %vm4050 = vcmp.le.f32.partialorder %v4049, 0.7853982
        %vm4051 = vcmp.lt.s32.totalorder %v2017, 0
        %v4052 = vand.u32 %v2017, 2139095040
        %v4053 = vshrl.u32 %v4052, 23
        %v4054 = vsub.s32 %v4053, 127
        %v4055 = vand.u32 2147483647, %v2017
        %v4056 = vand.u32 %v4055, 8388607
        %v4057 = vor.u32 %v4056, 8388608
        %v4058 = vsub.s32 0, %v4057
        %v4059 = vadd.s32 %v4054, 1
        %vm4060 = vcmp.gt.s32.totalorder %v4059, 0
        %v4061 = vsel %vm4060, %v4059, 0
        %v4062 = vshrl.u32 %v4061, 5
        %v4063 = vand.u32 %v4061, 31
        %v4064 = vsub.s32 32, %v4063
        %v4065 = vshrl.u32 683565275, %v4064
        %v4066 = vshll.u32 683565275, %v4063
        %v4067 = vshrl.u32 2475754826, %v4064
        %v4068 = vor.u32 %v4066, %v4067
        %v4069 = vshll.u32 2475754826, %v4063
        %v4070 = vshrl.u32 2131351028, %v4064
        %v4071 = vor.u32 %v4069, %v4070
        %v4072 = vshll.u32 2131351028, %v4063
        %v4073 = vshrl.u32 2102212464, %v4064
        %v4074 = vor.u32 %v4072, %v4073
        %v4075 = vshll.u32 2102212464, %v4063
        %v4076 = vshrl.u32 920167782, %v4064
        %v4077 = vor.u32 %v4075, %v4076
        %v4078 = vshll.u32 920167782, %v4063
        %v4079 = vshrl.u32 1326507024, %v4064
        %v4080 = vor.u32 %v4078, %v4079
        %vm4081 = vcmp.lt.s32.totalorder %v4062, 1
        %vm4082 = vcmp.lt.s32.totalorder %v4062, 2
        %vm4083 = vcmp.lt.s32.totalorder %v4062, 3
        %vm4084 = vcmp.lt.s32.totalorder %v4062, 4
        %v4085 = vsel %vm4081, %v4065, %v4068
        %v4086 = vsel %vm4084, %v4074, 2102212464
        %v4087 = vsel %vm4083, %v4071, %v4086
        %v4088 = vsel %vm4082, %v4085, %v4087
        %v4089 = vsel %vm4081, %v4068, %v4071
        %v4090 = vsel %vm4084, %v4077, 920167782
        %v4091 = vsel %vm4083, %v4074, %v4090
        %v4092 = vsel %vm4082, %v4089, %v4091
        %v4093 = vsel %vm4081, %v4071, %v4074
        %v4094 = vsel %vm4084, %v4080, 1326507024
        %v4095 = vsel %vm4083, %v4077, %v4094
        %v4096 = vsel %vm4082, %v4093, %v4095
        %v4097 = vshll.u32 %v4057, 8
        %v4098 = vmul.u32.u64.compose %v4097, %v4096
        %v4099 = vextract.low.u32 %v4098
        %v4100 = vextract.high.u32 %v4098
        %v4101 = vmul.u32.u64.compose %v4097, %v4092
        %v4102 = vextract.low.u32 %v4101
        %v4103 = vextract.high.u32 %v4101
        %v4104 = vmul.u32 %v4097, %v4088
        %v4105 = vadd.s32 %v4100, %v4102
        %vm4106 = vc.u32 %v4100, %v4102
        %v4107 = vadd.s32 %v4103, 1
        %v4108 = vsel %vm4106, %v4107, %v4103
        %v4109 = vadd.s32 %v4104, %v4108
        %v4110 = vadd.s32 %v4109, 536870912
        %v4111 = vshrl.u32 %v4110, 30
        %v4112 = vshll.u32 %v4111, 30
        %v4113 = vsub.s32 %v4109, %v4112
        %vm4114 = vcmp.lt.s32.totalorder %v4113, 0
        %v4115 = vsub.s32 0, %v4113
        %v4116 = vsel %vm4114, %v4115, %v4113
        %v4117 = vclz %v4116
        %v4118 = vsub.s32 %v4117, 2
        %vm4119 = vcmp.gt.s32.totalorder 0, %v4118
        %v4120 = vsel %vm4119, 0, %v4118
        %v4121 = vsub.s32 32, %v4120
        %v4122 = vshll.u32 %v4113, %v4120
        %v4123 = vshrl.u32 %v4105, %v4121
        %v4124 = vor.u32 %v4122, %v4123
        %v4125 = vsub.s32 4294967266, %v4120
        %v4126 = vadd.s32 %v4125, 127
        %v4127 = vshll.u32 %v4126, 23
        %v4128 = vor.u32 4788187, %v4127
        %v4129 = vand.u32 2147483647, %v4128
        %v4131 = vcvt.s32.f32 %v4124
        %v4132 = vmul.f32 %v4131, %v4129
        %v4133 = vxor.u32 %v4132, 2147483648
        %v4134 = vsel %vm4051, %v4133, %v4132
        %v4135 = vsub.s32 4, %v4111
        %v4136 = vsel %vm4051, %v4135, %v4111
        %v4137 = vsel %vm4050, %v2017, %v4134
        %v4138 = vsel %vm4050, 0, %v4136
        %v4139 = vcosq.f32.pop %v4137
        %v4140 = vsinq.f32.pop %v4137
        %vm4141 = vweird.f32 %v2017
        %v4142 = vand.u32 %v4138, 3
        %vm4143 = vcmp.lt.s32.totalorder %v4142, 2
        %vm4144 = vcmp.eq.s32.totalorder %v4142, 0
        %v4145 = vxor.u32 %v4140, 2147483648
        %v4146 = vsel %vm4144, %v4139, %v4145
        %vm4147 = vcmp.eq.s32.totalorder %v4142, 2
        %v4148 = vxor.u32 %v4139, 2147483648
        %v4149 = vsel %vm4147, %v4148, %v4140
        %v4150 = vsel %vm4143, %v4146, %v4149
        %v4151 = vsel %vm4141, nan, %v4150
        %v4152 = vand.u32 2147483647, %v2023
        %vm4153 = vcmp.le.f32.partialorder %v4152, 0.7853982
        %vm4154 = vcmp.lt.s32.totalorder %v2023, 0
        %v4155 = vand.u32 %v2023, 2139095040
        %v4156 = vshrl.u32 %v4155, 23
        %v4157 = vsub.s32 %v4156, 127
        %v4158 = vand.u32 2147483647, %v2023
        %v4159 = vand.u32 %v4158, 8388607
        %v4160 = vor.u32 %v4159, 8388608
        %v4161 = vsub.s32 0, %v4160
        %v4162 = vadd.s32 %v4157, 1
        %vm4163 = vcmp.gt.s32.totalorder %v4162, 0
        %v4164 = vsel %vm4163, %v4162, 0
        %v4165 = vshrl.u32 %v4164, 5
        %v4166 = vand.u32 %v4164, 31
        %v4167 = vsub.s32 32, %v4166
        %v4168 = vshrl.u32 683565275, %v4167
        %v4169 = vshll.u32 683565275, %v4166
        %v4170 = vshrl.u32 2475754826, %v4167
        %v4171 = vor.u32 %v4169, %v4170
        %v4172 = vshll.u32 2475754826, %v4166
        %v4173 = vshrl.u32 2131351028, %v4167
        %v4174 = vor.u32 %v4172, %v4173
        %v4175 = vshll.u32 2131351028, %v4166
        %v4176 = vshrl.u32 2102212464, %v4167
        %v4177 = vor.u32 %v4175, %v4176
        %v4178 = vshll.u32 2102212464, %v4166
        %v4179 = vshrl.u32 920167782, %v4167
        %v4180 = vor.u32 %v4178, %v4179
        %v4181 = vshll.u32 920167782, %v4166
        %v4182 = vshrl.u32 1326507024, %v4167
        %v4183 = vor.u32 %v4181, %v4182
        %vm4184 = vcmp.lt.s32.totalorder %v4165, 1
        %vm4185 = vcmp.lt.s32.totalorder %v4165, 2
        %vm4186 = vcmp.lt.s32.totalorder %v4165, 3
        %vm4187 = vcmp.lt.s32.totalorder %v4165, 4
        %v4188 = vsel %vm4184, %v4168, %v4171
        %v4189 = vsel %vm4187, %v4177, 2102212464
        %v4190 = vsel %vm4186, %v4174, %v4189
        %v4191 = vsel %vm4185, %v4188, %v4190
        %v4192 = vsel %vm4184, %v4171, %v4174
        %v4193 = vsel %vm4187, %v4180, 920167782
        %v4194 = vsel %vm4186, %v4177, %v4193
        %v4195 = vsel %vm4185, %v4192, %v4194
        %v4196 = vsel %vm4184, %v4174, %v4177
        %v4197 = vsel %vm4187, %v4183, 1326507024
        %v4198 = vsel %vm4186, %v4180, %v4197
        %v4199 = vsel %vm4185, %v4196, %v4198
        %v4200 = vshll.u32 %v4160, 8
        %v4201 = vmul.u32.u64.compose %v4200, %v4199
        %v4202 = vextract.low.u32 %v4201
        %v4203 = vextract.high.u32 %v4201
        %v4204 = vmul.u32.u64.compose %v4200, %v4195
        %v4205 = vextract.low.u32 %v4204
        %v4206 = vextract.high.u32 %v4204
        %v4207 = vmul.u32 %v4200, %v4191
        %v4208 = vadd.s32 %v4203, %v4205
        %vm4209 = vc.u32 %v4203, %v4205
        %v4210 = vadd.s32 %v4206, 1
        %v4211 = vsel %vm4209, %v4210, %v4206
        %v4212 = vadd.s32 %v4207, %v4211
        %v4213 = vadd.s32 %v4212, 536870912
        %v4214 = vshrl.u32 %v4213, 30
        %v4215 = vshll.u32 %v4214, 30
        %v4216 = vsub.s32 %v4212, %v4215
        %vm4217 = vcmp.lt.s32.totalorder %v4216, 0
        %v4218 = vsub.s32 0, %v4216
        %v4219 = vsel %vm4217, %v4218, %v4216
        %v4220 = vclz %v4219
        %v4221 = vsub.s32 %v4220, 2
        %vm4222 = vcmp.gt.s32.totalorder 0, %v4221
        %v4223 = vsel %vm4222, 0, %v4221
        %v4224 = vsub.s32 32, %v4223
        %v4225 = vshll.u32 %v4216, %v4223
        %v4226 = vshrl.u32 %v4208, %v4224
        %v4227 = vor.u32 %v4225, %v4226
        %v4228 = vsub.s32 4294967266, %v4223
        %v4229 = vadd.s32 %v4228, 127
        %v4230 = vshll.u32 %v4229, 23
        %v4231 = vor.u32 4788187, %v4230
        %v4232 = vand.u32 2147483647, %v4231
        %v4234 = vcvt.s32.f32 %v4227
        %v4235 = vmul.f32 %v4234, %v4232
        %v4236 = vxor.u32 %v4235, 2147483648
        %v4237 = vsel %vm4154, %v4236, %v4235
        %v4238 = vsub.s32 4, %v4214
        %v4239 = vsel %vm4154, %v4238, %v4214
        %v4240 = vsel %vm4153, %v2023, %v4237
        %v4241 = vsel %vm4153, 0, %v4239
        %v4242 = vcosq.f32.pop %v4240
        %v4243 = vsinq.f32.pop %v4240
        %vm4244 = vweird.f32 %v2023
        %v4245 = vand.u32 %v4241, 3
        %vm4246 = vcmp.lt.s32.totalorder %v4245, 2
        %vm4247 = vcmp.eq.s32.totalorder %v4245, 0
        %v4248 = vxor.u32 %v4243, 2147483648
        %v4249 = vsel %vm4247, %v4242, %v4248
        %vm4250 = vcmp.eq.s32.totalorder %v4245, 2
        %v4251 = vxor.u32 %v4242, 2147483648
        %v4252 = vsel %vm4250, %v4251, %v4243
        %v4253 = vsel %vm4246, %v4249, %v4252
        %v4254 = vsel %vm4244, nan, %v4253
        %v4255 = vand.u32 2147483647, %v2029
        %vm4256 = vcmp.le.f32.partialorder %v4255, 0.7853982
        %vm4257 = vcmp.lt.s32.totalorder %v2029, 0
        %v4258 = vand.u32 %v2029, 2139095040
        %v4259 = vshrl.u32 %v4258, 23
        %v4260 = vsub.s32 %v4259, 127
        %v4261 = vand.u32 2147483647, %v2029
        %v4262 = vand.u32 %v4261, 8388607
        %v4263 = vor.u32 %v4262, 8388608
        %v4264 = vsub.s32 0, %v4263
        %v4265 = vadd.s32 %v4260, 1
        %vm4266 = vcmp.gt.s32.totalorder %v4265, 0
        %v4267 = vsel %vm4266, %v4265, 0
        %v4268 = vshrl.u32 %v4267, 5
        %v4269 = vand.u32 %v4267, 31
        %v4270 = vsub.s32 32, %v4269
        %v4271 = vshrl.u32 683565275, %v4270
        %v4272 = vshll.u32 683565275, %v4269
        %v4273 = vshrl.u32 2475754826, %v4270
        %v4274 = vor.u32 %v4272, %v4273
        %v4275 = vshll.u32 2475754826, %v4269
        %v4276 = vshrl.u32 2131351028, %v4270
        %v4277 = vor.u32 %v4275, %v4276
        %v4278 = vshll.u32 2131351028, %v4269
        %v4279 = vshrl.u32 2102212464, %v4270
        %v4280 = vor.u32 %v4278, %v4279
        %v4281 = vshll.u32 2102212464, %v4269
        %v4282 = vshrl.u32 920167782, %v4270
        %v4283 = vor.u32 %v4281, %v4282
        %v4284 = vshll.u32 920167782, %v4269
        %v4285 = vshrl.u32 1326507024, %v4270
        %v4286 = vor.u32 %v4284, %v4285
        %vm4287 = vcmp.lt.s32.totalorder %v4268, 1
        %vm4288 = vcmp.lt.s32.totalorder %v4268, 2
        %vm4289 = vcmp.lt.s32.totalorder %v4268, 3
        %vm4290 = vcmp.lt.s32.totalorder %v4268, 4
        %v4291 = vsel %vm4287, %v4271, %v4274
        %v4292 = vsel %vm4290, %v4280, 2102212464
        %v4293 = vsel %vm4289, %v4277, %v4292
        %v4294 = vsel %vm4288, %v4291, %v4293
        %v4295 = vsel %vm4287, %v4274, %v4277
        %v4296 = vsel %vm4290, %v4283, 920167782
        %v4297 = vsel %vm4289, %v4280, %v4296
        %v4298 = vsel %vm4288, %v4295, %v4297
        %v4299 = vsel %vm4287, %v4277, %v4280
        %v4300 = vsel %vm4290, %v4286, 1326507024
        %v4301 = vsel %vm4289, %v4283, %v4300
        %v4302 = vsel %vm4288, %v4299, %v4301
        %v4303 = vshll.u32 %v4263, 8
        %v4304 = vmul.u32.u64.compose %v4303, %v4302
        %v4305 = vextract.low.u32 %v4304
        %v4306 = vextract.high.u32 %v4304
        %v4307 = vmul.u32.u64.compose %v4303, %v4298
        %v4308 = vextract.low.u32 %v4307
        %v4309 = vextract.high.u32 %v4307
        %v4310 = vmul.u32 %v4303, %v4294
        %v4311 = vadd.s32 %v4306, %v4308
        %vm4312 = vc.u32 %v4306, %v4308
        %v4313 = vadd.s32 %v4309, 1
        %v4314 = vsel %vm4312, %v4313, %v4309
        %v4315 = vadd.s32 %v4310, %v4314
        %v4316 = vadd.s32 %v4315, 536870912
        %v4317 = vshrl.u32 %v4316, 30
        %v4318 = vshll.u32 %v4317, 30
        %v4319 = vsub.s32 %v4315, %v4318
        %vm4320 = vcmp.lt.s32.totalorder %v4319, 0
        %v4321 = vsub.s32 0, %v4319
        %v4322 = vsel %vm4320, %v4321, %v4319
        %v4323 = vclz %v4322
        %v4324 = vsub.s32 %v4323, 2
        %vm4325 = vcmp.gt.s32.totalorder 0, %v4324
        %v4326 = vsel %vm4325, 0, %v4324
        %v4327 = vsub.s32 32, %v4326
        %v4328 = vshll.u32 %v4319, %v4326
        %v4329 = vshrl.u32 %v4311, %v4327
        %v4330 = vor.u32 %v4328, %v4329
        %v4331 = vsub.s32 4294967266, %v4326
        %v4332 = vadd.s32 %v4331, 127
        %v4333 = vshll.u32 %v4332, 23
        %v4334 = vor.u32 4788187, %v4333
        %v4335 = vand.u32 2147483647, %v4334
        %v4337 = vcvt.s32.f32 %v4330
        %v4338 = vmul.f32 %v4337, %v4335
        %v4339 = vxor.u32 %v4338, 2147483648
        %v4340 = vsel %vm4257, %v4339, %v4338
        %v4341 = vsub.s32 4, %v4317
        %v4342 = vsel %vm4257, %v4341, %v4317
        %v4343 = vsel %vm4256, %v2029, %v4340
        %v4344 = vsel %vm4256, 0, %v4342
        %v4345 = vcosq.f32.pop %v4343
        %v4346 = vsinq.f32.pop %v4343
        %vm4347 = vweird.f32 %v2029
        %v4348 = vand.u32 %v4344, 3
        %vm4349 = vcmp.lt.s32.totalorder %v4348, 2
        %vm4350 = vcmp.eq.s32.totalorder %v4348, 0
        %v4351 = vxor.u32 %v4346, 2147483648
        %v4352 = vsel %vm4350, %v4345, %v4351
        %vm4353 = vcmp.eq.s32.totalorder %v4348, 2
        %v4354 = vxor.u32 %v4345, 2147483648
        %v4355 = vsel %vm4353, %v4354, %v4346
        %v4356 = vsel %vm4349, %v4352, %v4355
        %v4357 = vsel %vm4347, nan, %v4356
        %v4358 = vand.u32 2147483647, %v2035
        %vm4359 = vcmp.le.f32.partialorder %v4358, 0.7853982
        %vm4360 = vcmp.lt.s32.totalorder %v2035, 0
        %v4361 = vand.u32 %v2035, 2139095040
        %v4362 = vshrl.u32 %v4361, 23
        %v4363 = vsub.s32 %v4362, 127
        %v4364 = vand.u32 2147483647, %v2035
        %v4365 = vand.u32 %v4364, 8388607
        %v4366 = vor.u32 %v4365, 8388608
        %v4367 = vsub.s32 0, %v4366
        %v4368 = vadd.s32 %v4363, 1
        %vm4369 = vcmp.gt.s32.totalorder %v4368, 0
        %v4370 = vsel %vm4369, %v4368, 0
        %v4371 = vshrl.u32 %v4370, 5
        %v4372 = vand.u32 %v4370, 31
        %v4373 = vsub.s32 32, %v4372
        %v4374 = vshrl.u32 683565275, %v4373
        %v4375 = vshll.u32 683565275, %v4372
        %v4376 = vshrl.u32 2475754826, %v4373
        %v4377 = vor.u32 %v4375, %v4376
        %v4378 = vshll.u32 2475754826, %v4372
        %v4379 = vshrl.u32 2131351028, %v4373
        %v4380 = vor.u32 %v4378, %v4379
        %v4381 = vshll.u32 2131351028, %v4372
        %v4382 = vshrl.u32 2102212464, %v4373
        %v4383 = vor.u32 %v4381, %v4382
        %v4384 = vshll.u32 2102212464, %v4372
        %v4385 = vshrl.u32 920167782, %v4373
        %v4386 = vor.u32 %v4384, %v4385
        %v4387 = vshll.u32 920167782, %v4372
        %v4388 = vshrl.u32 1326507024, %v4373
        %v4389 = vor.u32 %v4387, %v4388
        %vm4390 = vcmp.lt.s32.totalorder %v4371, 1
        %vm4391 = vcmp.lt.s32.totalorder %v4371, 2
        %vm4392 = vcmp.lt.s32.totalorder %v4371, 3
        %vm4393 = vcmp.lt.s32.totalorder %v4371, 4
        %v4394 = vsel %vm4390, %v4374, %v4377
        %v4395 = vsel %vm4393, %v4383, 2102212464
        %v4396 = vsel %vm4392, %v4380, %v4395
        %v4397 = vsel %vm4391, %v4394, %v4396
        %v4398 = vsel %vm4390, %v4377, %v4380
        %v4399 = vsel %vm4393, %v4386, 920167782
        %v4400 = vsel %vm4392, %v4383, %v4399
        %v4401 = vsel %vm4391, %v4398, %v4400
        %v4402 = vsel %vm4390, %v4380, %v4383
        %v4403 = vsel %vm4393, %v4389, 1326507024
        %v4404 = vsel %vm4392, %v4386, %v4403
        %v4405 = vsel %vm4391, %v4402, %v4404
        %v4406 = vshll.u32 %v4366, 8
        %v4407 = vmul.u32.u64.compose %v4406, %v4405
        %v4408 = vextract.low.u32 %v4407
        %v4409 = vextract.high.u32 %v4407
        %v4410 = vmul.u32.u64.compose %v4406, %v4401
        %v4411 = vextract.low.u32 %v4410
        %v4412 = vextract.high.u32 %v4410
        %v4413 = vmul.u32 %v4406, %v4397
        %v4414 = vadd.s32 %v4409, %v4411
        %vm4415 = vc.u32 %v4409, %v4411
        %v4416 = vadd.s32 %v4412, 1
        %v4417 = vsel %vm4415, %v4416, %v4412
        %v4418 = vadd.s32 %v4413, %v4417
        %v4419 = vadd.s32 %v4418, 536870912
        %v4420 = vshrl.u32 %v4419, 30
        %v4421 = vshll.u32 %v4420, 30
        %v4422 = vsub.s32 %v4418, %v4421
        %vm4423 = vcmp.lt.s32.totalorder %v4422, 0
        %v4424 = vsub.s32 0, %v4422
        %v4425 = vsel %vm4423, %v4424, %v4422
        %v4426 = vclz %v4425
        %v4427 = vsub.s32 %v4426, 2
        %vm4428 = vcmp.gt.s32.totalorder 0, %v4427
        %v4429 = vsel %vm4428, 0, %v4427
        %v4430 = vsub.s32 32, %v4429
        %v4431 = vshll.u32 %v4422, %v4429
        %v4432 = vshrl.u32 %v4414, %v4430
        %v4433 = vor.u32 %v4431, %v4432
        %v4434 = vsub.s32 4294967266, %v4429
        %v4435 = vadd.s32 %v4434, 127
        %v4436 = vshll.u32 %v4435, 23
        %v4437 = vor.u32 4788187, %v4436
        %v4438 = vand.u32 2147483647, %v4437
        %v4440 = vcvt.s32.f32 %v4433
        %v4441 = vmul.f32 %v4440, %v4438
        %v4442 = vxor.u32 %v4441, 2147483648
        %v4443 = vsel %vm4360, %v4442, %v4441
        %v4444 = vsub.s32 4, %v4420
        %v4445 = vsel %vm4360, %v4444, %v4420
        %v4446 = vsel %vm4359, %v2035, %v4443
        %v4447 = vsel %vm4359, 0, %v4445
        %v4448 = vcosq.f32.pop %v4446
        %v4449 = vsinq.f32.pop %v4446
        %vm4450 = vweird.f32 %v2035
        %v4451 = vand.u32 %v4447, 3
        %vm4452 = vcmp.lt.s32.totalorder %v4451, 2
        %vm4453 = vcmp.eq.s32.totalorder %v4451, 0
        %v4454 = vxor.u32 %v4449, 2147483648
        %v4455 = vsel %vm4453, %v4448, %v4454
        %vm4456 = vcmp.eq.s32.totalorder %v4451, 2
        %v4457 = vxor.u32 %v4448, 2147483648
        %v4458 = vsel %vm4456, %v4457, %v4449
        %v4459 = vsel %vm4452, %v4455, %v4458
        %v4460 = vsel %vm4450, nan, %v4459
        %v4461 = vand.u32 2147483647, %v2041
        %vm4462 = vcmp.le.f32.partialorder %v4461, 0.7853982
        %vm4463 = vcmp.lt.s32.totalorder %v2041, 0
        %v4464 = vand.u32 %v2041, 2139095040
        %v4465 = vshrl.u32 %v4464, 23
        %v4466 = vsub.s32 %v4465, 127
        %v4467 = vand.u32 2147483647, %v2041
        %v4468 = vand.u32 %v4467, 8388607
        %v4469 = vor.u32 %v4468, 8388608
        %v4470 = vsub.s32 0, %v4469
        %v4471 = vadd.s32 %v4466, 1
        %vm4472 = vcmp.gt.s32.totalorder %v4471, 0
        %v4473 = vsel %vm4472, %v4471, 0
        %v4474 = vshrl.u32 %v4473, 5
        %v4475 = vand.u32 %v4473, 31
        %v4476 = vsub.s32 32, %v4475
        %v4477 = vshrl.u32 683565275, %v4476
        %v4478 = vshll.u32 683565275, %v4475
        %v4479 = vshrl.u32 2475754826, %v4476
        %v4480 = vor.u32 %v4478, %v4479
        %v4481 = vshll.u32 2475754826, %v4475
        %v4482 = vshrl.u32 2131351028, %v4476
        %v4483 = vor.u32 %v4481, %v4482
        %v4484 = vshll.u32 2131351028, %v4475
        %v4485 = vshrl.u32 2102212464, %v4476
        %v4486 = vor.u32 %v4484, %v4485
        %v4487 = vshll.u32 2102212464, %v4475
        %v4488 = vshrl.u32 920167782, %v4476
        %v4489 = vor.u32 %v4487, %v4488
        %v4490 = vshll.u32 920167782, %v4475
        %v4491 = vshrl.u32 1326507024, %v4476
        %v4492 = vor.u32 %v4490, %v4491
        %vm4493 = vcmp.lt.s32.totalorder %v4474, 1
        %vm4494 = vcmp.lt.s32.totalorder %v4474, 2
        %vm4495 = vcmp.lt.s32.totalorder %v4474, 3
        %vm4496 = vcmp.lt.s32.totalorder %v4474, 4
        %v4497 = vsel %vm4493, %v4477, %v4480
        %v4498 = vsel %vm4496, %v4486, 2102212464
        %v4499 = vsel %vm4495, %v4483, %v4498
        %v4500 = vsel %vm4494, %v4497, %v4499
        %v4501 = vsel %vm4493, %v4480, %v4483
        %v4502 = vsel %vm4496, %v4489, 920167782
        %v4503 = vsel %vm4495, %v4486, %v4502
        %v4504 = vsel %vm4494, %v4501, %v4503
        %v4505 = vsel %vm4493, %v4483, %v4486
        %v4506 = vsel %vm4496, %v4492, 1326507024
        %v4507 = vsel %vm4495, %v4489, %v4506
        %v4508 = vsel %vm4494, %v4505, %v4507
        %v4509 = vshll.u32 %v4469, 8
        %v4510 = vmul.u32.u64.compose %v4509, %v4508
        %v4511 = vextract.low.u32 %v4510
        %v4512 = vextract.high.u32 %v4510
        %v4513 = vmul.u32.u64.compose %v4509, %v4504
        %v4514 = vextract.low.u32 %v4513
        %v4515 = vextract.high.u32 %v4513
        %v4516 = vmul.u32 %v4509, %v4500
        %v4517 = vadd.s32 %v4512, %v4514
        %vm4518 = vc.u32 %v4512, %v4514
        %v4519 = vadd.s32 %v4515, 1
        %v4520 = vsel %vm4518, %v4519, %v4515
        %v4521 = vadd.s32 %v4516, %v4520
        %v4522 = vadd.s32 %v4521, 536870912
        %v4523 = vshrl.u32 %v4522, 30
        %v4524 = vshll.u32 %v4523, 30
        %v4525 = vsub.s32 %v4521, %v4524
        %vm4526 = vcmp.lt.s32.totalorder %v4525, 0
        %v4527 = vsub.s32 0, %v4525
        %v4528 = vsel %vm4526, %v4527, %v4525
        %v4529 = vclz %v4528
        %v4530 = vsub.s32 %v4529, 2
        %vm4531 = vcmp.gt.s32.totalorder 0, %v4530
        %v4532 = vsel %vm4531, 0, %v4530
        %v4533 = vsub.s32 32, %v4532
        %v4534 = vshll.u32 %v4525, %v4532
        %v4535 = vshrl.u32 %v4517, %v4533
        %v4536 = vor.u32 %v4534, %v4535
        %v4537 = vsub.s32 4294967266, %v4532
        %v4538 = vadd.s32 %v4537, 127
        %v4539 = vshll.u32 %v4538, 23
        %v4540 = vor.u32 4788187, %v4539
        %v4541 = vand.u32 2147483647, %v4540
        %v4543 = vcvt.s32.f32 %v4536
        %v4544 = vmul.f32 %v4543, %v4541
        %v4545 = vxor.u32 %v4544, 2147483648
        %v4546 = vsel %vm4463, %v4545, %v4544
        %v4547 = vsub.s32 4, %v4523
        %v4548 = vsel %vm4463, %v4547, %v4523
        %v4549 = vsel %vm4462, %v2041, %v4546
        %v4550 = vsel %vm4462, 0, %v4548
        %v4551 = vcosq.f32.pop %v4549
        %v4552 = vsinq.f32.pop %v4549
        %vm4553 = vweird.f32 %v2041
        %v4554 = vand.u32 %v4550, 3
        %vm4555 = vcmp.lt.s32.totalorder %v4554, 2
        %vm4556 = vcmp.eq.s32.totalorder %v4554, 0
        %v4557 = vxor.u32 %v4552, 2147483648
        %v4558 = vsel %vm4556, %v4551, %v4557
        %vm4559 = vcmp.eq.s32.totalorder %v4554, 2
        %v4560 = vxor.u32 %v4551, 2147483648
        %v4561 = vsel %vm4559, %v4560, %v4552
        %v4562 = vsel %vm4555, %v4558, %v4561
        %v4563 = vsel %vm4553, nan, %v4562
        %v4564 = vand.u32 2147483647, %v2047
        %vm4565 = vcmp.le.f32.partialorder %v4564, 0.7853982
        %vm4566 = vcmp.lt.s32.totalorder %v2047, 0
        %v4567 = vand.u32 %v2047, 2139095040
        %v4568 = vshrl.u32 %v4567, 23
        %v4569 = vsub.s32 %v4568, 127
        %v4570 = vand.u32 2147483647, %v2047
        %v4571 = vand.u32 %v4570, 8388607
        %v4572 = vor.u32 %v4571, 8388608
        %v4573 = vsub.s32 0, %v4572
        %v4574 = vadd.s32 %v4569, 1
        %vm4575 = vcmp.gt.s32.totalorder %v4574, 0
        %v4576 = vsel %vm4575, %v4574, 0
        %v4577 = vshrl.u32 %v4576, 5
        %v4578 = vand.u32 %v4576, 31
        %v4579 = vsub.s32 32, %v4578
        %v4580 = vshrl.u32 683565275, %v4579
        %v4581 = vshll.u32 683565275, %v4578
        %v4582 = vshrl.u32 2475754826, %v4579
        %v4583 = vor.u32 %v4581, %v4582
        %v4584 = vshll.u32 2475754826, %v4578
        %v4585 = vshrl.u32 2131351028, %v4579
        %v4586 = vor.u32 %v4584, %v4585
        %v4587 = vshll.u32 2131351028, %v4578
        %v4588 = vshrl.u32 2102212464, %v4579
        %v4589 = vor.u32 %v4587, %v4588
        %v4590 = vshll.u32 2102212464, %v4578
        %v4591 = vshrl.u32 920167782, %v4579
        %v4592 = vor.u32 %v4590, %v4591
        %v4593 = vshll.u32 920167782, %v4578
        %v4594 = vshrl.u32 1326507024, %v4579
        %v4595 = vor.u32 %v4593, %v4594
        %vm4596 = vcmp.lt.s32.totalorder %v4577, 1
        %vm4597 = vcmp.lt.s32.totalorder %v4577, 2
        %vm4598 = vcmp.lt.s32.totalorder %v4577, 3
        %vm4599 = vcmp.lt.s32.totalorder %v4577, 4
        %v4600 = vsel %vm4596, %v4580, %v4583
        %v4601 = vsel %vm4599, %v4589, 2102212464
        %v4602 = vsel %vm4598, %v4586, %v4601
        %v4603 = vsel %vm4597, %v4600, %v4602
        %v4604 = vsel %vm4596, %v4583, %v4586
        %v4605 = vsel %vm4599, %v4592, 920167782
        %v4606 = vsel %vm4598, %v4589, %v4605
        %v4607 = vsel %vm4597, %v4604, %v4606
        %v4608 = vsel %vm4596, %v4586, %v4589
        %v4609 = vsel %vm4599, %v4595, 1326507024
        %v4610 = vsel %vm4598, %v4592, %v4609
        %v4611 = vsel %vm4597, %v4608, %v4610
        %v4612 = vshll.u32 %v4572, 8
        %v4613 = vmul.u32.u64.compose %v4612, %v4611
        %v4614 = vextract.low.u32 %v4613
        %v4615 = vextract.high.u32 %v4613
        %v4616 = vmul.u32.u64.compose %v4612, %v4607
        %v4617 = vextract.low.u32 %v4616
        %v4618 = vextract.high.u32 %v4616
        %v4619 = vmul.u32 %v4612, %v4603
        %v4620 = vadd.s32 %v4615, %v4617
        %vm4621 = vc.u32 %v4615, %v4617
        %v4622 = vadd.s32 %v4618, 1
        %v4623 = vsel %vm4621, %v4622, %v4618
        %v4624 = vadd.s32 %v4619, %v4623
        %v4625 = vadd.s32 %v4624, 536870912
        %v4626 = vshrl.u32 %v4625, 30
        %v4627 = vshll.u32 %v4626, 30
        %v4628 = vsub.s32 %v4624, %v4627
        %vm4629 = vcmp.lt.s32.totalorder %v4628, 0
        %v4630 = vsub.s32 0, %v4628
        %v4631 = vsel %vm4629, %v4630, %v4628
        %v4632 = vclz %v4631
        %v4633 = vsub.s32 %v4632, 2
        %vm4634 = vcmp.gt.s32.totalorder 0, %v4633
        %v4635 = vsel %vm4634, 0, %v4633
        %v4636 = vsub.s32 32, %v4635
        %v4637 = vshll.u32 %v4628, %v4635
        %v4638 = vshrl.u32 %v4620, %v4636
        %v4639 = vor.u32 %v4637, %v4638
        %v4640 = vsub.s32 4294967266, %v4635
        %v4641 = vadd.s32 %v4640, 127
        %v4642 = vshll.u32 %v4641, 23
        %v4643 = vor.u32 4788187, %v4642
        %v4644 = vand.u32 2147483647, %v4643
        %v4646 = vcvt.s32.f32 %v4639
        %v4647 = vmul.f32 %v4646, %v4644
        %v4648 = vxor.u32 %v4647, 2147483648
        %v4649 = vsel %vm4566, %v4648, %v4647
        %v4650 = vsub.s32 4, %v4626
        %v4651 = vsel %vm4566, %v4650, %v4626
        %v4652 = vsel %vm4565, %v2047, %v4649
        %v4653 = vsel %vm4565, 0, %v4651
        %v4654 = vcosq.f32.pop %v4652
        %v4655 = vsinq.f32.pop %v4652
        %vm4656 = vweird.f32 %v2047
        %v4657 = vand.u32 %v4653, 3
        %vm4658 = vcmp.lt.s32.totalorder %v4657, 2
        %vm4659 = vcmp.eq.s32.totalorder %v4657, 0
        %v4660 = vxor.u32 %v4655, 2147483648
        %v4661 = vsel %vm4659, %v4654, %v4660
        %vm4662 = vcmp.eq.s32.totalorder %v4657, 2
        %v4663 = vxor.u32 %v4654, 2147483648
        %v4664 = vsel %vm4662, %v4663, %v4655
        %v4665 = vsel %vm4658, %v4661, %v4664
        %v4666 = vsel %vm4656, nan, %v4665
        %v4667 = vand.u32 2147483647, %v2053
        %vm4668 = vcmp.le.f32.partialorder %v4667, 0.7853982
        %vm4669 = vcmp.lt.s32.totalorder %v2053, 0
        %v4670 = vand.u32 %v2053, 2139095040
        %v4671 = vshrl.u32 %v4670, 23
        %v4672 = vsub.s32 %v4671, 127
        %v4673 = vand.u32 2147483647, %v2053
        %v4674 = vand.u32 %v4673, 8388607
        %v4675 = vor.u32 %v4674, 8388608
        %v4676 = vsub.s32 0, %v4675
        %v4677 = vadd.s32 %v4672, 1
        %vm4678 = vcmp.gt.s32.totalorder %v4677, 0
        %v4679 = vsel %vm4678, %v4677, 0
        %v4680 = vshrl.u32 %v4679, 5
        %v4681 = vand.u32 %v4679, 31
        %v4682 = vsub.s32 32, %v4681
        %v4683 = vshrl.u32 683565275, %v4682
        %v4684 = vshll.u32 683565275, %v4681
        %v4685 = vshrl.u32 2475754826, %v4682
        %v4686 = vor.u32 %v4684, %v4685
        %v4687 = vshll.u32 2475754826, %v4681
        %v4688 = vshrl.u32 2131351028, %v4682
        %v4689 = vor.u32 %v4687, %v4688
        %v4690 = vshll.u32 2131351028, %v4681
        %v4691 = vshrl.u32 2102212464, %v4682
        %v4692 = vor.u32 %v4690, %v4691
        %v4693 = vshll.u32 2102212464, %v4681
        %v4694 = vshrl.u32 920167782, %v4682
        %v4695 = vor.u32 %v4693, %v4694
        %v4696 = vshll.u32 920167782, %v4681
        %v4697 = vshrl.u32 1326507024, %v4682
        %v4698 = vor.u32 %v4696, %v4697
        %vm4699 = vcmp.lt.s32.totalorder %v4680, 1
        %vm4700 = vcmp.lt.s32.totalorder %v4680, 2
        %vm4701 = vcmp.lt.s32.totalorder %v4680, 3
        %vm4702 = vcmp.lt.s32.totalorder %v4680, 4
        %v4703 = vsel %vm4699, %v4683, %v4686
        %v4704 = vsel %vm4702, %v4692, 2102212464
        %v4705 = vsel %vm4701, %v4689, %v4704
        %v4706 = vsel %vm4700, %v4703, %v4705
        %v4707 = vsel %vm4699, %v4686, %v4689
        %v4708 = vsel %vm4702, %v4695, 920167782
        %v4709 = vsel %vm4701, %v4692, %v4708
        %v4710 = vsel %vm4700, %v4707, %v4709
        %v4711 = vsel %vm4699, %v4689, %v4692
        %v4712 = vsel %vm4702, %v4698, 1326507024
        %v4713 = vsel %vm4701, %v4695, %v4712
        %v4714 = vsel %vm4700, %v4711, %v4713
        %v4715 = vshll.u32 %v4675, 8
        %v4716 = vmul.u32.u64.compose %v4715, %v4714
        %v4717 = vextract.low.u32 %v4716
        %v4718 = vextract.high.u32 %v4716
        %v4719 = vmul.u32.u64.compose %v4715, %v4710
        %v4720 = vextract.low.u32 %v4719
        %v4721 = vextract.high.u32 %v4719
        %v4722 = vmul.u32 %v4715, %v4706
        %v4723 = vadd.s32 %v4718, %v4720
        %vm4724 = vc.u32 %v4718, %v4720
        %v4725 = vadd.s32 %v4721, 1
        %v4726 = vsel %vm4724, %v4725, %v4721
        %v4727 = vadd.s32 %v4722, %v4726
        %v4728 = vadd.s32 %v4727, 536870912
        %v4729 = vshrl.u32 %v4728, 30
        %v4730 = vshll.u32 %v4729, 30
        %v4731 = vsub.s32 %v4727, %v4730
        %vm4732 = vcmp.lt.s32.totalorder %v4731, 0
        %v4733 = vsub.s32 0, %v4731
        %v4734 = vsel %vm4732, %v4733, %v4731
        %v4735 = vclz %v4734
        %v4736 = vsub.s32 %v4735, 2
        %vm4737 = vcmp.gt.s32.totalorder 0, %v4736
        %v4738 = vsel %vm4737, 0, %v4736
        %v4739 = vsub.s32 32, %v4738
        %v4740 = vshll.u32 %v4731, %v4738
        %v4741 = vshrl.u32 %v4723, %v4739
        %v4742 = vor.u32 %v4740, %v4741
        %v4743 = vsub.s32 4294967266, %v4738
        %v4744 = vadd.s32 %v4743, 127
        %v4745 = vshll.u32 %v4744, 23
        %v4746 = vor.u32 4788187, %v4745
        %v4747 = vand.u32 2147483647, %v4746
        %v4749 = vcvt.s32.f32 %v4742
        %v4750 = vmul.f32 %v4749, %v4747
        %v4751 = vxor.u32 %v4750, 2147483648
        %v4752 = vsel %vm4669, %v4751, %v4750
        %v4753 = vsub.s32 4, %v4729
        %v4754 = vsel %vm4669, %v4753, %v4729
        %v4755 = vsel %vm4668, %v2053, %v4752
        %v4756 = vsel %vm4668, 0, %v4754
        %v4757 = vcosq.f32.pop %v4755
        %v4758 = vsinq.f32.pop %v4755
        %vm4759 = vweird.f32 %v2053
        %v4760 = vand.u32 %v4756, 3
        %vm4761 = vcmp.lt.s32.totalorder %v4760, 2
        %vm4762 = vcmp.eq.s32.totalorder %v4760, 0
        %v4763 = vxor.u32 %v4758, 2147483648
        %v4764 = vsel %vm4762, %v4757, %v4763
        %vm4765 = vcmp.eq.s32.totalorder %v4760, 2
        %v4766 = vxor.u32 %v4757, 2147483648
        %v4767 = vsel %vm4765, %v4766, %v4758
        %v4768 = vsel %vm4761, %v4764, %v4767
        %v4769 = vsel %vm4759, nan, %v4768
        %v4770 = vand.u32 2147483647, %v2059
        %vm4771 = vcmp.le.f32.partialorder %v4770, 0.7853982
        %vm4772 = vcmp.lt.s32.totalorder %v2059, 0
        %v4773 = vand.u32 %v2059, 2139095040
        %v4774 = vshrl.u32 %v4773, 23
        %v4775 = vsub.s32 %v4774, 127
        %v4776 = vand.u32 2147483647, %v2059
        %v4777 = vand.u32 %v4776, 8388607
        %v4778 = vor.u32 %v4777, 8388608
        %v4779 = vsub.s32 0, %v4778
        %v4780 = vadd.s32 %v4775, 1
        %vm4781 = vcmp.gt.s32.totalorder %v4780, 0
        %v4782 = vsel %vm4781, %v4780, 0
        %v4783 = vshrl.u32 %v4782, 5
        %v4784 = vand.u32 %v4782, 31
        %v4785 = vsub.s32 32, %v4784
        %v4786 = vshrl.u32 683565275, %v4785
        %v4787 = vshll.u32 683565275, %v4784
        %v4788 = vshrl.u32 2475754826, %v4785
        %v4789 = vor.u32 %v4787, %v4788
        %v4790 = vshll.u32 2475754826, %v4784
        %v4791 = vshrl.u32 2131351028, %v4785
        %v4792 = vor.u32 %v4790, %v4791
        %v4793 = vshll.u32 2131351028, %v4784
        %v4794 = vshrl.u32 2102212464, %v4785
        %v4795 = vor.u32 %v4793, %v4794
        %v4796 = vshll.u32 2102212464, %v4784
        %v4797 = vshrl.u32 920167782, %v4785
        %v4798 = vor.u32 %v4796, %v4797
        %v4799 = vshll.u32 920167782, %v4784
        %v4800 = vshrl.u32 1326507024, %v4785
        %v4801 = vor.u32 %v4799, %v4800
        %vm4802 = vcmp.lt.s32.totalorder %v4783, 1
        %vm4803 = vcmp.lt.s32.totalorder %v4783, 2
        %vm4804 = vcmp.lt.s32.totalorder %v4783, 3
        %vm4805 = vcmp.lt.s32.totalorder %v4783, 4
        %v4806 = vsel %vm4802, %v4786, %v4789
        %v4807 = vsel %vm4805, %v4795, 2102212464
        %v4808 = vsel %vm4804, %v4792, %v4807
        %v4809 = vsel %vm4803, %v4806, %v4808
        %v4810 = vsel %vm4802, %v4789, %v4792
        %v4811 = vsel %vm4805, %v4798, 920167782
        %v4812 = vsel %vm4804, %v4795, %v4811
        %v4813 = vsel %vm4803, %v4810, %v4812
        %v4814 = vsel %vm4802, %v4792, %v4795
        %v4815 = vsel %vm4805, %v4801, 1326507024
        %v4816 = vsel %vm4804, %v4798, %v4815
        %v4817 = vsel %vm4803, %v4814, %v4816
        %v4818 = vshll.u32 %v4778, 8
        %v4819 = vmul.u32.u64.compose %v4818, %v4817
        %v4820 = vextract.low.u32 %v4819
        %v4821 = vextract.high.u32 %v4819
        %v4822 = vmul.u32.u64.compose %v4818, %v4813
        %v4823 = vextract.low.u32 %v4822
        %v4824 = vextract.high.u32 %v4822
        %v4825 = vmul.u32 %v4818, %v4809
        %v4826 = vadd.s32 %v4821, %v4823
        %vm4827 = vc.u32 %v4821, %v4823
        %v4828 = vadd.s32 %v4824, 1
        %v4829 = vsel %vm4827, %v4828, %v4824
        %v4830 = vadd.s32 %v4825, %v4829
        %v4831 = vadd.s32 %v4830, 536870912
        %v4832 = vshrl.u32 %v4831, 30
        %v4833 = vshll.u32 %v4832, 30
        %v4834 = vsub.s32 %v4830, %v4833
        %vm4835 = vcmp.lt.s32.totalorder %v4834, 0
        %v4836 = vsub.s32 0, %v4834
        %v4837 = vsel %vm4835, %v4836, %v4834
        %v4838 = vclz %v4837
        %v4839 = vsub.s32 %v4838, 2
        %vm4840 = vcmp.gt.s32.totalorder 0, %v4839
        %v4841 = vsel %vm4840, 0, %v4839
        %v4842 = vsub.s32 32, %v4841
        %v4843 = vshll.u32 %v4834, %v4841
        %v4844 = vshrl.u32 %v4826, %v4842
        %v4845 = vor.u32 %v4843, %v4844
        %v4846 = vsub.s32 4294967266, %v4841
        %v4847 = vadd.s32 %v4846, 127
        %v4848 = vshll.u32 %v4847, 23
        %v4849 = vor.u32 4788187, %v4848
        %v4850 = vand.u32 2147483647, %v4849
        %v4852 = vcvt.s32.f32 %v4845
        %v4853 = vmul.f32 %v4852, %v4850
        %v4854 = vxor.u32 %v4853, 2147483648
        %v4855 = vsel %vm4772, %v4854, %v4853
        %v4856 = vsub.s32 4, %v4832
        %v4857 = vsel %vm4772, %v4856, %v4832
        %v4858 = vsel %vm4771, %v2059, %v4855
        %v4859 = vsel %vm4771, 0, %v4857
        %v4860 = vcosq.f32.pop %v4858
        %v4861 = vsinq.f32.pop %v4858
        %vm4862 = vweird.f32 %v2059
        %v4863 = vand.u32 %v4859, 3
        %vm4864 = vcmp.lt.s32.totalorder %v4863, 2
        %vm4865 = vcmp.eq.s32.totalorder %v4863, 0
        %v4866 = vxor.u32 %v4861, 2147483648
        %v4867 = vsel %vm4865, %v4860, %v4866
        %vm4868 = vcmp.eq.s32.totalorder %v4863, 2
        %v4869 = vxor.u32 %v4860, 2147483648
        %v4870 = vsel %vm4868, %v4869, %v4861
        %v4871 = vsel %vm4864, %v4867, %v4870
        %v4872 = vsel %vm4862, nan, %v4871
        %v4873 = vand.u32 2147483647, %v2065
        %vm4874 = vcmp.le.f32.partialorder %v4873, 0.7853982
        %vm4875 = vcmp.lt.s32.totalorder %v2065, 0
        %v4876 = vand.u32 %v2065, 2139095040
        %v4877 = vshrl.u32 %v4876, 23
        %v4878 = vsub.s32 %v4877, 127
        %v4879 = vand.u32 2147483647, %v2065
        %v4880 = vand.u32 %v4879, 8388607
        %v4881 = vor.u32 %v4880, 8388608
        %v4882 = vsub.s32 0, %v4881
        %v4883 = vadd.s32 %v4878, 1
        %vm4884 = vcmp.gt.s32.totalorder %v4883, 0
        %v4885 = vsel %vm4884, %v4883, 0
        %v4886 = vshrl.u32 %v4885, 5
        %v4887 = vand.u32 %v4885, 31
        %v4888 = vsub.s32 32, %v4887
        %v4889 = vshrl.u32 683565275, %v4888
        %v4890 = vshll.u32 683565275, %v4887
        %v4891 = vshrl.u32 2475754826, %v4888
        %v4892 = vor.u32 %v4890, %v4891
        %v4893 = vshll.u32 2475754826, %v4887
        %v4894 = vshrl.u32 2131351028, %v4888
        %v4895 = vor.u32 %v4893, %v4894
        %v4896 = vshll.u32 2131351028, %v4887
        %v4897 = vshrl.u32 2102212464, %v4888
        %v4898 = vor.u32 %v4896, %v4897
        %v4899 = vshll.u32 2102212464, %v4887
        %v4900 = vshrl.u32 920167782, %v4888
        %v4901 = vor.u32 %v4899, %v4900
        %v4902 = vshll.u32 920167782, %v4887
        %v4903 = vshrl.u32 1326507024, %v4888
        %v4904 = vor.u32 %v4902, %v4903
        %vm4905 = vcmp.lt.s32.totalorder %v4886, 1
        %vm4906 = vcmp.lt.s32.totalorder %v4886, 2
        %vm4907 = vcmp.lt.s32.totalorder %v4886, 3
        %vm4908 = vcmp.lt.s32.totalorder %v4886, 4
        %v4909 = vsel %vm4905, %v4889, %v4892
        %v4910 = vsel %vm4908, %v4898, 2102212464
        %v4911 = vsel %vm4907, %v4895, %v4910
        %v4912 = vsel %vm4906, %v4909, %v4911
        %v4913 = vsel %vm4905, %v4892, %v4895
        %v4914 = vsel %vm4908, %v4901, 920167782
        %v4915 = vsel %vm4907, %v4898, %v4914
        %v4916 = vsel %vm4906, %v4913, %v4915
        %v4917 = vsel %vm4905, %v4895, %v4898
        %v4918 = vsel %vm4908, %v4904, 1326507024
        %v4919 = vsel %vm4907, %v4901, %v4918
        %v4920 = vsel %vm4906, %v4917, %v4919
        %v4921 = vshll.u32 %v4881, 8
        %v4922 = vmul.u32.u64.compose %v4921, %v4920
        %v4923 = vextract.low.u32 %v4922
        %v4924 = vextract.high.u32 %v4922
        %v4925 = vmul.u32.u64.compose %v4921, %v4916
        %v4926 = vextract.low.u32 %v4925
        %v4927 = vextract.high.u32 %v4925
        %v4928 = vmul.u32 %v4921, %v4912
        %v4929 = vadd.s32 %v4924, %v4926
        %vm4930 = vc.u32 %v4924, %v4926
        %v4931 = vadd.s32 %v4927, 1
        %v4932 = vsel %vm4930, %v4931, %v4927
        %v4933 = vadd.s32 %v4928, %v4932
        %v4934 = vadd.s32 %v4933, 536870912
        %v4935 = vshrl.u32 %v4934, 30
        %v4936 = vshll.u32 %v4935, 30
        %v4937 = vsub.s32 %v4933, %v4936
        %vm4938 = vcmp.lt.s32.totalorder %v4937, 0
        %v4939 = vsub.s32 0, %v4937
        %v4940 = vsel %vm4938, %v4939, %v4937
        %v4941 = vclz %v4940
        %v4942 = vsub.s32 %v4941, 2
        %vm4943 = vcmp.gt.s32.totalorder 0, %v4942
        %v4944 = vsel %vm4943, 0, %v4942
        %v4945 = vsub.s32 32, %v4944
        %v4946 = vshll.u32 %v4937, %v4944
        %v4947 = vshrl.u32 %v4929, %v4945
        %v4948 = vor.u32 %v4946, %v4947
        %v4949 = vsub.s32 4294967266, %v4944
        %v4950 = vadd.s32 %v4949, 127
        %v4951 = vshll.u32 %v4950, 23
        %v4952 = vor.u32 4788187, %v4951
        %v4953 = vand.u32 2147483647, %v4952
        %v4955 = vcvt.s32.f32 %v4948
        %v4956 = vmul.f32 %v4955, %v4953
        %v4957 = vxor.u32 %v4956, 2147483648
        %v4958 = vsel %vm4875, %v4957, %v4956
        %v4959 = vsub.s32 4, %v4935
        %v4960 = vsel %vm4875, %v4959, %v4935
        %v4961 = vsel %vm4874, %v2065, %v4958
        %v4962 = vsel %vm4874, 0, %v4960
        %v4963 = vcosq.f32.pop %v4961
        %v4964 = vsinq.f32.pop %v4961
        %vm4965 = vweird.f32 %v2065
        %v4966 = vand.u32 %v4962, 3
        %vm4967 = vcmp.lt.s32.totalorder %v4966, 2
        %vm4968 = vcmp.eq.s32.totalorder %v4966, 0
        %v4969 = vxor.u32 %v4964, 2147483648
        %v4970 = vsel %vm4968, %v4963, %v4969
        %vm4971 = vcmp.eq.s32.totalorder %v4966, 2
        %v4972 = vxor.u32 %v4963, 2147483648
        %v4973 = vsel %vm4971, %v4972, %v4964
        %v4974 = vsel %vm4967, %v4970, %v4973
        %v4975 = vsel %vm4965, nan, %v4974
        %v4976 = vand.u32 2147483647, %v2071
        %vm4977 = vcmp.le.f32.partialorder %v4976, 0.7853982
        %vm4978 = vcmp.lt.s32.totalorder %v2071, 0
        %v4979 = vand.u32 %v2071, 2139095040
        %v4980 = vshrl.u32 %v4979, 23
        %v4981 = vsub.s32 %v4980, 127
        %v4982 = vand.u32 2147483647, %v2071
        %v4983 = vand.u32 %v4982, 8388607
        %v4984 = vor.u32 %v4983, 8388608
        %v4985 = vsub.s32 0, %v4984
        %v4986 = vadd.s32 %v4981, 1
        %vm4987 = vcmp.gt.s32.totalorder %v4986, 0
        %v4988 = vsel %vm4987, %v4986, 0
        %v4989 = vshrl.u32 %v4988, 5
        %v4990 = vand.u32 %v4988, 31
        %v4991 = vsub.s32 32, %v4990
        %v4992 = vshrl.u32 683565275, %v4991
        %v4993 = vshll.u32 683565275, %v4990
        %v4994 = vshrl.u32 2475754826, %v4991
        %v4995 = vor.u32 %v4993, %v4994
        %v4996 = vshll.u32 2475754826, %v4990
        %v4997 = vshrl.u32 2131351028, %v4991
        %v4998 = vor.u32 %v4996, %v4997
        %v4999 = vshll.u32 2131351028, %v4990
        %v5000 = vshrl.u32 2102212464, %v4991
        %v5001 = vor.u32 %v4999, %v5000
        %v5002 = vshll.u32 2102212464, %v4990
        %v5003 = vshrl.u32 920167782, %v4991
        %v5004 = vor.u32 %v5002, %v5003
        %v5005 = vshll.u32 920167782, %v4990
        %v5006 = vshrl.u32 1326507024, %v4991
        %v5007 = vor.u32 %v5005, %v5006
        %vm5008 = vcmp.lt.s32.totalorder %v4989, 1
        %vm5009 = vcmp.lt.s32.totalorder %v4989, 2
        %vm5010 = vcmp.lt.s32.totalorder %v4989, 3
        %vm5011 = vcmp.lt.s32.totalorder %v4989, 4
        %v5012 = vsel %vm5008, %v4992, %v4995
        %v5013 = vsel %vm5011, %v5001, 2102212464
        %v5014 = vsel %vm5010, %v4998, %v5013
        %v5015 = vsel %vm5009, %v5012, %v5014
        %v5016 = vsel %vm5008, %v4995, %v4998
        %v5017 = vsel %vm5011, %v5004, 920167782
        %v5018 = vsel %vm5010, %v5001, %v5017
        %v5019 = vsel %vm5009, %v5016, %v5018
        %v5020 = vsel %vm5008, %v4998, %v5001
        %v5021 = vsel %vm5011, %v5007, 1326507024
        %v5022 = vsel %vm5010, %v5004, %v5021
        %v5023 = vsel %vm5009, %v5020, %v5022
        %v5024 = vshll.u32 %v4984, 8
        %v5025 = vmul.u32.u64.compose %v5024, %v5023
        %v5026 = vextract.low.u32 %v5025
        %v5027 = vextract.high.u32 %v5025
        %v5028 = vmul.u32.u64.compose %v5024, %v5019
        %v5029 = vextract.low.u32 %v5028
        %v5030 = vextract.high.u32 %v5028
        %v5031 = vmul.u32 %v5024, %v5015
        %v5032 = vadd.s32 %v5027, %v5029
        %vm5033 = vc.u32 %v5027, %v5029
        %v5034 = vadd.s32 %v5030, 1
        %v5035 = vsel %vm5033, %v5034, %v5030
        %v5036 = vadd.s32 %v5031, %v5035
        %v5037 = vadd.s32 %v5036, 536870912
        %v5038 = vshrl.u32 %v5037, 30
        %v5039 = vshll.u32 %v5038, 30
        %v5040 = vsub.s32 %v5036, %v5039
        %vm5041 = vcmp.lt.s32.totalorder %v5040, 0
        %v5042 = vsub.s32 0, %v5040
        %v5043 = vsel %vm5041, %v5042, %v5040
        %v5044 = vclz %v5043
        %v5045 = vsub.s32 %v5044, 2
        %vm5046 = vcmp.gt.s32.totalorder 0, %v5045
        %v5047 = vsel %vm5046, 0, %v5045
        %v5048 = vsub.s32 32, %v5047
        %v5049 = vshll.u32 %v5040, %v5047
        %v5050 = vshrl.u32 %v5032, %v5048
        %v5051 = vor.u32 %v5049, %v5050
        %v5052 = vsub.s32 4294967266, %v5047
        %v5053 = vadd.s32 %v5052, 127
        %v5054 = vshll.u32 %v5053, 23
        %v5055 = vor.u32 4788187, %v5054
        %v5056 = vand.u32 2147483647, %v5055
        %v5058 = vcvt.s32.f32 %v5051
        %v5059 = vmul.f32 %v5058, %v5056
        %v5060 = vxor.u32 %v5059, 2147483648
        %v5061 = vsel %vm4978, %v5060, %v5059
        %v5062 = vsub.s32 4, %v5038
        %v5063 = vsel %vm4978, %v5062, %v5038
        %v5064 = vsel %vm4977, %v2071, %v5061
        %v5065 = vsel %vm4977, 0, %v5063
        %v5066 = vcosq.f32.pop %v5064
        %v5067 = vsinq.f32.pop %v5064
        %vm5068 = vweird.f32 %v2071
        %v5069 = vand.u32 %v5065, 3
        %vm5070 = vcmp.lt.s32.totalorder %v5069, 2
        %vm5071 = vcmp.eq.s32.totalorder %v5069, 0
        %v5072 = vxor.u32 %v5067, 2147483648
        %v5073 = vsel %vm5071, %v5066, %v5072
        %vm5074 = vcmp.eq.s32.totalorder %v5069, 2
        %v5075 = vxor.u32 %v5066, 2147483648
        %v5076 = vsel %vm5074, %v5075, %v5067
        %v5077 = vsel %vm5070, %v5073, %v5076
        %v5078 = vsel %vm5068, nan, %v5077
        %v5079 = vand.u32 2147483647, %v2077
        %vm5080 = vcmp.le.f32.partialorder %v5079, 0.7853982
        %vm5081 = vcmp.lt.s32.totalorder %v2077, 0
        %v5082 = vand.u32 %v2077, 2139095040
        %v5083 = vshrl.u32 %v5082, 23
        %v5084 = vsub.s32 %v5083, 127
        %v5085 = vand.u32 2147483647, %v2077
        %v5086 = vand.u32 %v5085, 8388607
        %v5087 = vor.u32 %v5086, 8388608
        %v5088 = vsub.s32 0, %v5087
        %v5089 = vadd.s32 %v5084, 1
        %vm5090 = vcmp.gt.s32.totalorder %v5089, 0
        %v5091 = vsel %vm5090, %v5089, 0
        %v5092 = vshrl.u32 %v5091, 5
        %v5093 = vand.u32 %v5091, 31
        %v5094 = vsub.s32 32, %v5093
        %v5095 = vshrl.u32 683565275, %v5094
        %v5096 = vshll.u32 683565275, %v5093
        %v5097 = vshrl.u32 2475754826, %v5094
        %v5098 = vor.u32 %v5096, %v5097
        %v5099 = vshll.u32 2475754826, %v5093
        %v5100 = vshrl.u32 2131351028, %v5094
        %v5101 = vor.u32 %v5099, %v5100
        %v5102 = vshll.u32 2131351028, %v5093
        %v5103 = vshrl.u32 2102212464, %v5094
        %v5104 = vor.u32 %v5102, %v5103
        %v5105 = vshll.u32 2102212464, %v5093
        %v5106 = vshrl.u32 920167782, %v5094
        %v5107 = vor.u32 %v5105, %v5106
        %v5108 = vshll.u32 920167782, %v5093
        %v5109 = vshrl.u32 1326507024, %v5094
        %v5110 = vor.u32 %v5108, %v5109
        %vm5111 = vcmp.lt.s32.totalorder %v5092, 1
        %vm5112 = vcmp.lt.s32.totalorder %v5092, 2
        %vm5113 = vcmp.lt.s32.totalorder %v5092, 3
        %vm5114 = vcmp.lt.s32.totalorder %v5092, 4
        %v5115 = vsel %vm5111, %v5095, %v5098
        %v5116 = vsel %vm5114, %v5104, 2102212464
        %v5117 = vsel %vm5113, %v5101, %v5116
        %v5118 = vsel %vm5112, %v5115, %v5117
        %v5119 = vsel %vm5111, %v5098, %v5101
        %v5120 = vsel %vm5114, %v5107, 920167782
        %v5121 = vsel %vm5113, %v5104, %v5120
        %v5122 = vsel %vm5112, %v5119, %v5121
        %v5123 = vsel %vm5111, %v5101, %v5104
        %v5124 = vsel %vm5114, %v5110, 1326507024
        %v5125 = vsel %vm5113, %v5107, %v5124
        %v5126 = vsel %vm5112, %v5123, %v5125
        %v5127 = vshll.u32 %v5087, 8
        %v5128 = vmul.u32.u64.compose %v5127, %v5126
        %v5129 = vextract.low.u32 %v5128
        %v5130 = vextract.high.u32 %v5128
        %v5131 = vmul.u32.u64.compose %v5127, %v5122
        %v5132 = vextract.low.u32 %v5131
        %v5133 = vextract.high.u32 %v5131
        %v5134 = vmul.u32 %v5127, %v5118
        %v5135 = vadd.s32 %v5130, %v5132
        %vm5136 = vc.u32 %v5130, %v5132
        %v5137 = vadd.s32 %v5133, 1
        %v5138 = vsel %vm5136, %v5137, %v5133
        %v5139 = vadd.s32 %v5134, %v5138
        %v5140 = vadd.s32 %v5139, 536870912
        %v5141 = vshrl.u32 %v5140, 30
        %v5142 = vshll.u32 %v5141, 30
        %v5143 = vsub.s32 %v5139, %v5142
        %vm5144 = vcmp.lt.s32.totalorder %v5143, 0
        %v5145 = vsub.s32 0, %v5143
        %v5146 = vsel %vm5144, %v5145, %v5143
        %v5147 = vclz %v5146
        %v5148 = vsub.s32 %v5147, 2
        %vm5149 = vcmp.gt.s32.totalorder 0, %v5148
        %v5150 = vsel %vm5149, 0, %v5148
        %v5151 = vsub.s32 32, %v5150
        %v5152 = vshll.u32 %v5143, %v5150
        %v5153 = vshrl.u32 %v5135, %v5151
        %v5154 = vor.u32 %v5152, %v5153
        %v5155 = vsub.s32 4294967266, %v5150
        %v5156 = vadd.s32 %v5155, 127
        %v5157 = vshll.u32 %v5156, 23
        %v5158 = vor.u32 4788187, %v5157
        %v5159 = vand.u32 2147483647, %v5158
        %v5161 = vcvt.s32.f32 %v5154
        %v5162 = vmul.f32 %v5161, %v5159
        %v5163 = vxor.u32 %v5162, 2147483648
        %v5164 = vsel %vm5081, %v5163, %v5162
        %v5165 = vsub.s32 4, %v5141
        %v5166 = vsel %vm5081, %v5165, %v5141
        %v5167 = vsel %vm5080, %v2077, %v5164
        %v5168 = vsel %vm5080, 0, %v5166
        %v5169 = vcosq.f32.pop %v5167
        %v5170 = vsinq.f32.pop %v5167
        %vm5171 = vweird.f32 %v2077
        %v5172 = vand.u32 %v5168, 3
        %vm5173 = vcmp.lt.s32.totalorder %v5172, 2
        %vm5174 = vcmp.eq.s32.totalorder %v5172, 0
        %v5175 = vxor.u32 %v5170, 2147483648
        %v5176 = vsel %vm5174, %v5169, %v5175
        %vm5177 = vcmp.eq.s32.totalorder %v5172, 2
        %v5178 = vxor.u32 %v5169, 2147483648
        %v5179 = vsel %vm5177, %v5178, %v5170
        %v5180 = vsel %vm5173, %v5176, %v5179
        %v5181 = vsel %vm5171, nan, %v5180
        %v5182 = vand.u32 2147483647, %v2083
        %vm5183 = vcmp.le.f32.partialorder %v5182, 0.7853982
        %vm5184 = vcmp.lt.s32.totalorder %v2083, 0
        %v5185 = vand.u32 %v2083, 2139095040
        %v5186 = vshrl.u32 %v5185, 23
        %v5187 = vsub.s32 %v5186, 127
        %v5188 = vand.u32 2147483647, %v2083
        %v5189 = vand.u32 %v5188, 8388607
        %v5190 = vor.u32 %v5189, 8388608
        %v5191 = vsub.s32 0, %v5190
        %v5192 = vadd.s32 %v5187, 1
        %vm5193 = vcmp.gt.s32.totalorder %v5192, 0
        %v5194 = vsel %vm5193, %v5192, 0
        %v5195 = vshrl.u32 %v5194, 5
        %v5196 = vand.u32 %v5194, 31
        %v5197 = vsub.s32 32, %v5196
        %v5198 = vshrl.u32 683565275, %v5197
        %v5199 = vshll.u32 683565275, %v5196
        %v5200 = vshrl.u32 2475754826, %v5197
        %v5201 = vor.u32 %v5199, %v5200
        %v5202 = vshll.u32 2475754826, %v5196
        %v5203 = vshrl.u32 2131351028, %v5197
        %v5204 = vor.u32 %v5202, %v5203
        %v5205 = vshll.u32 2131351028, %v5196
        %v5206 = vshrl.u32 2102212464, %v5197
        %v5207 = vor.u32 %v5205, %v5206
        %v5208 = vshll.u32 2102212464, %v5196
        %v5209 = vshrl.u32 920167782, %v5197
        %v5210 = vor.u32 %v5208, %v5209
        %v5211 = vshll.u32 920167782, %v5196
        %v5212 = vshrl.u32 1326507024, %v5197
        %v5213 = vor.u32 %v5211, %v5212
        %vm5214 = vcmp.lt.s32.totalorder %v5195, 1
        %vm5215 = vcmp.lt.s32.totalorder %v5195, 2
        %vm5216 = vcmp.lt.s32.totalorder %v5195, 3
        %vm5217 = vcmp.lt.s32.totalorder %v5195, 4
        %v5218 = vsel %vm5214, %v5198, %v5201
        %v5219 = vsel %vm5217, %v5207, 2102212464
        %v5220 = vsel %vm5216, %v5204, %v5219
        %v5221 = vsel %vm5215, %v5218, %v5220
        %v5222 = vsel %vm5214, %v5201, %v5204
        %v5223 = vsel %vm5217, %v5210, 920167782
        %v5224 = vsel %vm5216, %v5207, %v5223
        %v5225 = vsel %vm5215, %v5222, %v5224
        %v5226 = vsel %vm5214, %v5204, %v5207
        %v5227 = vsel %vm5217, %v5213, 1326507024
        %v5228 = vsel %vm5216, %v5210, %v5227
        %v5229 = vsel %vm5215, %v5226, %v5228
        %v5230 = vshll.u32 %v5190, 8
        %v5231 = vmul.u32.u64.compose %v5230, %v5229
        %v5232 = vextract.low.u32 %v5231
        %v5233 = vextract.high.u32 %v5231
        %v5234 = vmul.u32.u64.compose %v5230, %v5225
        %v5235 = vextract.low.u32 %v5234
        %v5236 = vextract.high.u32 %v5234
        %v5237 = vmul.u32 %v5230, %v5221
        %v5238 = vadd.s32 %v5233, %v5235
        %vm5239 = vc.u32 %v5233, %v5235
        %v5240 = vadd.s32 %v5236, 1
        %v5241 = vsel %vm5239, %v5240, %v5236
        %v5242 = vadd.s32 %v5237, %v5241
        %v5243 = vadd.s32 %v5242, 536870912
        %v5244 = vshrl.u32 %v5243, 30
        %v5245 = vshll.u32 %v5244, 30
        %v5246 = vsub.s32 %v5242, %v5245
        %vm5247 = vcmp.lt.s32.totalorder %v5246, 0
        %v5248 = vsub.s32 0, %v5246
        %v5249 = vsel %vm5247, %v5248, %v5246
        %v5250 = vclz %v5249
        %v5251 = vsub.s32 %v5250, 2
        %vm5252 = vcmp.gt.s32.totalorder 0, %v5251
        %v5253 = vsel %vm5252, 0, %v5251
        %v5254 = vsub.s32 32, %v5253
        %v5255 = vshll.u32 %v5246, %v5253
        %v5256 = vshrl.u32 %v5238, %v5254
        %v5257 = vor.u32 %v5255, %v5256
        %v5258 = vsub.s32 4294967266, %v5253
        %v5259 = vadd.s32 %v5258, 127
        %v5260 = vshll.u32 %v5259, 23
        %v5261 = vor.u32 4788187, %v5260
        %v5262 = vand.u32 2147483647, %v5261
        %v5264 = vcvt.s32.f32 %v5257
        %v5265 = vmul.f32 %v5264, %v5262
        %v5266 = vxor.u32 %v5265, 2147483648
        %v5267 = vsel %vm5184, %v5266, %v5265
        %v5268 = vsub.s32 4, %v5244
        %v5269 = vsel %vm5184, %v5268, %v5244
        %v5270 = vsel %vm5183, %v2083, %v5267
        %v5271 = vsel %vm5183, 0, %v5269
        %v5272 = vcosq.f32.pop %v5270
        %v5273 = vsinq.f32.pop %v5270
        %vm5274 = vweird.f32 %v2083
        %v5275 = vand.u32 %v5271, 3
        %vm5276 = vcmp.lt.s32.totalorder %v5275, 2
        %vm5277 = vcmp.eq.s32.totalorder %v5275, 0
        %v5278 = vxor.u32 %v5273, 2147483648
        %v5279 = vsel %vm5277, %v5272, %v5278
        %vm5280 = vcmp.eq.s32.totalorder %v5275, 2
        %v5281 = vxor.u32 %v5272, 2147483648
        %v5282 = vsel %vm5280, %v5281, %v5273
        %v5283 = vsel %vm5276, %v5279, %v5282
        %v5284 = vsel %vm5274, nan, %v5283
        %v5285 = vand.u32 2147483647, %v2089
        %vm5286 = vcmp.le.f32.partialorder %v5285, 0.7853982
        %vm5287 = vcmp.lt.s32.totalorder %v2089, 0
        %v5288 = vand.u32 %v2089, 2139095040
        %v5289 = vshrl.u32 %v5288, 23
        %v5290 = vsub.s32 %v5289, 127
        %v5291 = vand.u32 2147483647, %v2089
        %v5292 = vand.u32 %v5291, 8388607
        %v5293 = vor.u32 %v5292, 8388608
        %v5294 = vsub.s32 0, %v5293
        %v5295 = vadd.s32 %v5290, 1
        %vm5296 = vcmp.gt.s32.totalorder %v5295, 0
        %v5297 = vsel %vm5296, %v5295, 0
        %v5298 = vshrl.u32 %v5297, 5
        %v5299 = vand.u32 %v5297, 31
        %v5300 = vsub.s32 32, %v5299
        %v5301 = vshrl.u32 683565275, %v5300
        %v5302 = vshll.u32 683565275, %v5299
        %v5303 = vshrl.u32 2475754826, %v5300
        %v5304 = vor.u32 %v5302, %v5303
        %v5305 = vshll.u32 2475754826, %v5299
        %v5306 = vshrl.u32 2131351028, %v5300
        %v5307 = vor.u32 %v5305, %v5306
        %v5308 = vshll.u32 2131351028, %v5299
        %v5309 = vshrl.u32 2102212464, %v5300
        %v5310 = vor.u32 %v5308, %v5309
        %v5311 = vshll.u32 2102212464, %v5299
        %v5312 = vshrl.u32 920167782, %v5300
        %v5313 = vor.u32 %v5311, %v5312
        %v5314 = vshll.u32 920167782, %v5299
        %v5315 = vshrl.u32 1326507024, %v5300
        %v5316 = vor.u32 %v5314, %v5315
        %vm5317 = vcmp.lt.s32.totalorder %v5298, 1
        %vm5318 = vcmp.lt.s32.totalorder %v5298, 2
        %vm5319 = vcmp.lt.s32.totalorder %v5298, 3
        %vm5320 = vcmp.lt.s32.totalorder %v5298, 4
        %v5321 = vsel %vm5317, %v5301, %v5304
        %v5322 = vsel %vm5320, %v5310, 2102212464
        %v5323 = vsel %vm5319, %v5307, %v5322
        %v5324 = vsel %vm5318, %v5321, %v5323
        %v5325 = vsel %vm5317, %v5304, %v5307
        %v5326 = vsel %vm5320, %v5313, 920167782
        %v5327 = vsel %vm5319, %v5310, %v5326
        %v5328 = vsel %vm5318, %v5325, %v5327
        %v5329 = vsel %vm5317, %v5307, %v5310
        %v5330 = vsel %vm5320, %v5316, 1326507024
        %v5331 = vsel %vm5319, %v5313, %v5330
        %v5332 = vsel %vm5318, %v5329, %v5331
        %v5333 = vshll.u32 %v5293, 8
        %v5334 = vmul.u32.u64.compose %v5333, %v5332
        %v5335 = vextract.low.u32 %v5334
        %v5336 = vextract.high.u32 %v5334
        %v5337 = vmul.u32.u64.compose %v5333, %v5328
        %v5338 = vextract.low.u32 %v5337
        %v5339 = vextract.high.u32 %v5337
        %v5340 = vmul.u32 %v5333, %v5324
        %v5341 = vadd.s32 %v5336, %v5338
        %vm5342 = vc.u32 %v5336, %v5338
        %v5343 = vadd.s32 %v5339, 1
        %v5344 = vsel %vm5342, %v5343, %v5339
        %v5345 = vadd.s32 %v5340, %v5344
        %v5346 = vadd.s32 %v5345, 536870912
        %v5347 = vshrl.u32 %v5346, 30
        %v5348 = vshll.u32 %v5347, 30
        %v5349 = vsub.s32 %v5345, %v5348
        %vm5350 = vcmp.lt.s32.totalorder %v5349, 0
        %v5351 = vsub.s32 0, %v5349
        %v5352 = vsel %vm5350, %v5351, %v5349
        %v5353 = vclz %v5352
        %v5354 = vsub.s32 %v5353, 2
        %vm5355 = vcmp.gt.s32.totalorder 0, %v5354
        %v5356 = vsel %vm5355, 0, %v5354
        %v5357 = vsub.s32 32, %v5356
        %v5358 = vshll.u32 %v5349, %v5356
        %v5359 = vshrl.u32 %v5341, %v5357
        %v5360 = vor.u32 %v5358, %v5359
        %v5361 = vsub.s32 4294967266, %v5356
        %v5362 = vadd.s32 %v5361, 127
        %v5363 = vshll.u32 %v5362, 23
        %v5364 = vor.u32 4788187, %v5363
        %v5365 = vand.u32 2147483647, %v5364
        %v5367 = vcvt.s32.f32 %v5360
        %v5368 = vmul.f32 %v5367, %v5365
        %v5369 = vxor.u32 %v5368, 2147483648
        %v5370 = vsel %vm5287, %v5369, %v5368
        %v5371 = vsub.s32 4, %v5347
        %v5372 = vsel %vm5287, %v5371, %v5347
        %v5373 = vsel %vm5286, %v2089, %v5370
        %v5374 = vsel %vm5286, 0, %v5372
        %v5375 = vcosq.f32.pop %v5373
        %v5376 = vsinq.f32.pop %v5373
        %vm5377 = vweird.f32 %v2089
        %v5378 = vand.u32 %v5374, 3
        %vm5379 = vcmp.lt.s32.totalorder %v5378, 2
        %vm5380 = vcmp.eq.s32.totalorder %v5378, 0
        %v5381 = vxor.u32 %v5376, 2147483648
        %v5382 = vsel %vm5380, %v5375, %v5381
        %vm5383 = vcmp.eq.s32.totalorder %v5378, 2
        %v5384 = vxor.u32 %v5375, 2147483648
        %v5385 = vsel %vm5383, %v5384, %v5376
        %v5386 = vsel %vm5379, %v5382, %v5385
        %v5387 = vsel %vm5377, nan, %v5386
        %v5388 = vmul.f32 %v2194, 1.4142135
        %v5389 = vmul.f32 %v2297, 1.4142135
        %v5390 = vmul.f32 %v2400, 1.4142135
        %v5391 = vmul.f32 %v2503, 1.4142135
        %v5392 = vmul.f32 %v2606, 1.4142135
        %v5393 = vmul.f32 %v2709, 1.4142135
        %v5394 = vmul.f32 %v2812, 1.4142135
        %v5395 = vmul.f32 %v2915, 1.4142135
        %v5396 = vmul.f32 %v3018, 1.4142135
        %v5397 = vmul.f32 %v3121, 1.4142135
        %v5398 = vmul.f32 %v3224, 1.4142135
        %v5399 = vmul.f32 %v3327, 1.4142135
        %v5400 = vmul.f32 %v3430, 1.4142135
        %v5401 = vmul.f32 %v3533, 1.4142135
        %v5402 = vmul.f32 %v3636, 1.4142135
        %v5403 = vmul.f32 %v3739, 1.4142135
        %v5404 = vmul.f32 %v3842, 1.4142135
        %v5405 = vmul.f32 %v3945, 1.4142135
        %v5406 = vmul.f32 %v4048, 1.4142135
        %v5407 = vmul.f32 %v4151, 1.4142135
        %v5408 = vmul.f32 %v4254, 1.4142135
        %v5409 = vmul.f32 %v4357, 1.4142135
        %v5410 = vmul.f32 %v4460, 1.4142135
        %v5411 = vmul.f32 %v4563, 1.4142135
        %v5412 = vmul.f32 %v4666, 1.4142135
        %v5413 = vmul.f32 %v4769, 1.4142135
        %v5414 = vmul.f32 %v4872, 1.4142135
        %v5415 = vmul.f32 %v4975, 1.4142135
        %v5416 = vmul.f32 %v5078, 1.4142135
        %v5417 = vmul.f32 %v5181, 1.4142135
        %v5418 = vmul.f32 %v5284, 1.4142135
        %v5419 = vmul.f32 %v5387, 1.4142135
        %5420 = vst [vmem:[%s164] sm:$0xff] %v5388
        %5421 = vst [vmem:[%s164 + $0x8] sm:$0xff] %v5389
        %5422 = vst [vmem:[%s164 + $0x10] sm:$0xff] %v5390
        %5423 = vst [vmem:[%s164 + $0x18] sm:$0xff] %v5391
        %5424 = vst [vmem:[%s164 + $0x20] sm:$0xff] %v5392
        %5425 = vst [vmem:[%s164 + $0x28] sm:$0xff] %v5393
        %5426 = vst [vmem:[%s164 + $0x30] sm:$0xff] %v5394
        %5427 = vst [vmem:[%s164 + $0x38] sm:$0xff] %v5395
        %5428 = vst [vmem:[%s164 + $0x40] sm:$0xff] %v5396
        %5429 = vst [vmem:[%s164 + $0x48] sm:$0xff] %v5397
        %5430 = vst [vmem:[%s164 + $0x50] sm:$0xff] %v5398
        %5431 = vst [vmem:[%s164 + $0x58] sm:$0xff] %v5399
        %5432 = vst [vmem:[%s164 + $0x60] sm:$0xff] %v5400
        %5433 = vst [vmem:[%s164 + $0x68] sm:$0xff] %v5401
        %5434 = vst [vmem:[%s164 + $0x70] sm:$0xff] %v5402
        %5435 = vst [vmem:[%s164 + $0x78] sm:$0xff] %v5403
        %5436 = vst [vmem:[%s164 + $0x80] sm:$0xff] %v5404
        %5437 = vst [vmem:[%s164 + $0x88] sm:$0xff] %v5405
        %5438 = vst [vmem:[%s164 + $0x90] sm:$0xff] %v5406
        %5439 = vst [vmem:[%s164 + $0x98] sm:$0xff] %v5407
        %5440 = vst [vmem:[%s164 + $0xa0] sm:$0xff] %v5408
        %5441 = vst [vmem:[%s164 + $0xa8] sm:$0xff] %v5409
        %5442 = vst [vmem:[%s164 + $0xb0] sm:$0xff] %v5410
        %5443 = vst [vmem:[%s164 + $0xb8] sm:$0xff] %v5411
        %5444 = vst [vmem:[%s164 + $0xc0] sm:$0xff] %v5412
        %5445 = vst [vmem:[%s164 + $0xc8] sm:$0xff] %v5413
        %5446 = vst [vmem:[%s164 + $0xd0] sm:$0xff] %v5414
        %5447 = vst [vmem:[%s164 + $0xd8] sm:$0xff] %v5415
        %5448 = vst [vmem:[%s164 + $0xe0] sm:$0xff] %v5416
        %5449 = vst [vmem:[%s164 + $0xe8] sm:$0xff] %v5417
        %5450 = vst [vmem:[%s164 + $0xf0] sm:$0xff] %v5418
        %5451 = vst [vmem:[%s164 + $0xf8] sm:$0xff] %v5419
        %s5452 = sand.u32 %s93, 1
        %s5453 = scalar_lea.sflag [#allocation3], %s5452
        %s5454 = sand.u32 %s93, 1
        %s5455 = smul.addr %s5454, 256
        %s5456 = scalar_lea.vmem [#allocation2], %s5455
        // Predicated region
        $region33: #{tpu_custom_call.1} parent=31 // pred_check
          %p5457 = pneg %p103
        $region34: #{tpu_custom_call.1} parent=31 // pred_check_branch
          %5459 = sbr.rel (%p5457) target = $region36
        $region35: #{tpu_custom_call.1} parent=31 // pred_region
          %s5460 = smul.u32 32, %s17
          %s5462 = ssub.s32 4096, 4096
          %5463 = vsyncadd %s5453, %s5462
          %s5464 = smul.addr %s5460, 128
          %s5465 = scalar_lea.hbm %s3, %s5464
          %s5466 = sshll.u32 %s5456, 4
          %s5467 = int_to_ptr.vmem [resolvable:$true] %s5466
          %5472 = dma.vmem_to_hbm [thread:$0]  %s5467, 4096, %s5465, %s5453, 128, 128, 8
        $region36: #{tpu_custom_call.1} parent=31 // pred_fallthru
          _
      $region32: #{tpu_custom_call.1} parent=5 // pred_fallthru
        _
      %p5473 = scmp.le.s32.totalorder 2, %s12
      // Predicated region
      $region37: #{tpu_custom_call.1} parent=5 // pred_check
        %p5474 = pneg %p5473
      $region38: #{tpu_custom_call.1} parent=5 // pred_check_branch
        %5476 = sbr.rel (%p5474) target = $region40
      $region39: #{tpu_custom_call.1} parent=5 // pred_region
        %s5477 = ssub.s32 %s12, 2
        // Predicated region
        $region41: #{tpu_custom_call.1} parent=39 // pred_check
          %p5478 = pneg %p109
        $region42: #{tpu_custom_call.1} parent=39 // pred_check_branch
          %5480 = sbr.rel (%p5478) target = $region44
        $region43: #{tpu_custom_call.1} parent=39 // pred_region
          %s5481 = sand.u32 %s94, 1
          %s5482 = scalar_lea.sflag [#allocation3], %s5481
          %s5483 = sand.u32 %s94, 1
          %s5484 = smul.addr %s5483, 256
          %s5485 = scalar_lea.vmem [#allocation2], %s5484
          %5486 = dma.done %s5482, 4096
        $region44: #{tpu_custom_call.1} parent=39 // pred_fallthru
          _
      $region40: #{tpu_custom_call.1} parent=5 // pred_fallthru
        _
    $region6: #{tpu_custom_call.1} parent=1 // loop_footer
      %s16 = sadd.s32 1, %s12
    $region7: #{tpu_custom_call.1} parent=1 // loop_footer_branch
      %11 = sbr.rel target = $region3
    $region8: #{tpu_custom_call.1} parent=1 // loop_exit
      _
    %5487 = vsyncpa [#allocation3], 1
    %s5488 = scalar_lea.sflag [#allocation3], 1
    %5489 = vsyncpa %s5488, 1

</llo_original>
